<compile_context>
chip_gen: v7x
topology: tpu7x:2x2x1
jax: 0.10.0
libtpu: 0.0.40
codegen_flags: <defaults>
</compile_context>

<pallas_src>
import functools
import math

import jax
import jax.numpy as jnp
from jax.experimental import pallas as pl
from jax.experimental.pallas import tpu as pltpu


# --------------------------------------------------------------------------------------
# helpers
# --------------------------------------------------------------------------------------
def _layer_norm_f32(v, gamma, beta, eps=1e-5):
    mu = jnp.mean(v, axis=-1, keepdims=True)
    var = jnp.mean(jnp.square(v - mu), axis=-1, keepdims=True)
    return (v - mu) * jax.lax.rsqrt(var + eps) * gamma + beta


def _device_kind():
    try:
        return jax.devices()[0].device_kind.lower()
    except Exception:
        return ""


def _default_act_dtype():
    """bf16 EUP (exp / sigmoid gate) only on v6e / v7x; f32 elsewhere."""
    kind = _device_kind()
    return jnp.bfloat16 if ("v6" in kind or "v7" in kind) else jnp.float32


def _default_q_tile(L):
    """256 fills the 256-wide MXU on v6e/v7x; prefer 128 on v5e/v4."""
    kind = _device_kind()
    pref = 128 if ("v5" in kind or "v4" in kind) else 256
    for cand in (pref, 256, 128, 64, 32, 16, 8):
        if cand <= L and L % cand == 0:
            return cand
    return L


def _nbytes(*arrs):
    return int(sum(a.size * a.dtype.itemsize for a in arrs))


def _vmem_limit_bytes(resident_bytes):
    """Resident set + headroom, clamped; keep inside v7x's 64 MiB per-TC VMEM."""
    cap = (52 << 20) if "v7" in _device_kind() else (100 << 20)
    want = int(resident_bytes * 1.5) + (4 << 20)
    return int(min(max(want, 32 << 20), cap))


def _single_buffered_spec(shape, index_map):
    """Grid-invariant weight: single-buffer it (default double-buffering is pure waste)."""
    if hasattr(pl, "Buffered"):
        try:
            return pl.BlockSpec(shape, index_map, pipeline_mode=pl.Buffered(1))
        except TypeError:
            pass
    return pl.BlockSpec(shape, index_map)


# --------------------------------------------------------------------------------------
# kernel A: LN1 + K/V projection, head-split, per batch element
# --------------------------------------------------------------------------------------
def _kv_proj_kernel(x_ref, ln1_g_ref, ln1_b_ref, wk_ref, bk_ref, wv_ref, bv_ref,
                    k_ref, v_ref, *, n_head):
    L, D = x_ref.shape[1], x_ref.shape[2]
    Dh = D // n_head

    xn = _layer_norm_f32(x_ref[0].astype(jnp.float32), ln1_g_ref[...], ln1_b_ref[...])
    xn16 = xn.astype(jnp.bfloat16)

    # Two separate dots written straight into head-split layout (bounds live ranges,
    # no (L, 3D) f32 intermediate).
    k = jnp.dot(xn16, wk_ref[...], preferred_element_type=jnp.float32) + bk_ref[...]
    k_ref[0] = jnp.transpose(k.reshape(L, n_head, Dh), (1, 0, 2)).astype(jnp.bfloat16)
    v = jnp.dot(xn16, wv_ref[...], preferred_element_type=jnp.float32) + bv_ref[...]
    v_ref[0] = jnp.transpose(v.reshape(L, n_head, Dh), (1, 0, 2)).astype(jnp.bfloat16)


def _kv_projection(x_nld, p, n_head, vmem_limit):
    N, L, D = x_nld.shape
    Dh = D // n_head
    weight_args = (p["ln1_g"], p["ln1_b"], p["wk"], p["bk"], p["wv"], p["bv"])

    def wspec(a):
        nd = a.ndim
        return _single_buffered_spec(a.shape, lambda b, _nd=nd: (0,) * _nd)

    kv_shape = jax.ShapeDtypeStruct((N, n_head, L, Dh), jnp.bfloat16)
    kernel = functools.partial(_kv_proj_kernel, n_head=n_head)
    return pl.pallas_call(
        kernel,
        out_shape=(kv_shape, kv_shape),
        grid=(N,),
        in_specs=([pl.BlockSpec((1, L, D), lambda b: (b, 0, 0))]
                  + [wspec(w) for w in weight_args]),
        out_specs=(pl.BlockSpec((1, n_head, L, Dh), lambda b: (b, 0, 0, 0)),
                   pl.BlockSpec((1, n_head, L, Dh), lambda b: (b, 0, 0, 0))),
        compiler_params=pltpu.CompilerParams(
            dimension_semantics=("parallel",),
            vmem_limit_bytes=vmem_limit),
    )(x_nld, *weight_args)


# --------------------------------------------------------------------------------------
# kernel B: per q-tile attention (Q projected in-tile) + out-proj + MLP, residual adds
# --------------------------------------------------------------------------------------
def _attn_mlp_kernel(x_ref, k_ref, v_ref,
                     ln1_g_ref, ln1_b_ref, wq_ref, bq_ref, wo_ref, bo_ref,
                     ln2_g_ref, ln2_b_ref, wfc_ref, bfc_ref, wproj_ref, bproj_ref,
                     o_ref, *, n_head, act_dtype):
    TQ, D = x_ref.shape[1], x_ref.shape[2]
    Dh = D // n_head

    x_tile = x_ref[0].astype(jnp.float32)                              # (TQ, D) residual input

    # ---- attention: Q projection per tile (1/sqrt(Dh) pre-folded into wq/bq) ----
    xn = _layer_norm_f32(x_tile, ln1_g_ref[...], ln1_b_ref[...])
    q = jnp.dot(xn.astype(jnp.bfloat16), wq_ref[...],
                preferred_element_type=jnp.float32) + bq_ref[...]      # (TQ, D), pre-scaled
    qh = jnp.transpose(q.reshape(TQ, n_head, Dh), (1, 0, 2)).astype(jnp.bfloat16)

    kh = k_ref[0]                                                      # (H, L, Dh) bf16
    vh = v_ref[0]
    s = jnp.einsum("hqd,hkd->hqk", qh, kh,
                   preferred_element_type=jnp.float32)                 # (H, TQ, L) f32

    # hand-rolled softmax; exp optionally in bf16 (v6e/v7x EUP), divide via EUP reciprocal
    m = jnp.max(s, axis=-1, keepdims=True)
    e = jnp.exp((s - m).astype(act_dtype))
    denom = jnp.sum(e, axis=-1, keepdims=True, dtype=jnp.float32)
    p = (e * pl.reciprocal(denom, approx=True)).astype(jnp.bfloat16)

    oh = jnp.einsum("hqk,hkd->hqd", p, vh,
                    preferred_element_type=jnp.float32)                # (H, TQ, Dh) f32
    attn = jnp.transpose(oh, (1, 0, 2)).reshape(TQ, D)                 # head merge
    attn_out = jnp.dot(attn.astype(jnp.bfloat16), wo_ref[...],
                       preferred_element_type=jnp.float32) + bo_ref[...]
    x1 = x_tile + attn_out                                             # (TQ, D) f32

    # ---- MLP: x + c_proj(QuickGELU(c_fc(LN2(x)))) ----
    xn2 = _layer_norm_f32(x1, ln2_g_ref[...], ln2_b_ref[...])
    h1 = jnp.dot(xn2.astype(jnp.bfloat16), wfc_ref[...],
                 preferred_element_type=jnp.float32) + bfc_ref[...]    # (TQ, 4D) f32
    # QuickGELU: h1 * sigmoid(1.702*h1); sigmoid via EUP exp (+ optional bf16) + reciprocal
    z = 1.702 * h1
    sig = pl.reciprocal(1.0 + jnp.exp((-z).astype(act_dtype)).astype(jnp.float32),
                        approx=True)
    h1 = h1 * sig
    mlp_out = jnp.dot(h1.astype(jnp.bfloat16), wproj_ref[...],
                      preferred_element_type=jnp.float32) + bproj_ref[...]

    o_ref[0] = (x1 + mlp_out).astype(o_ref.dtype)                      # one contiguous store


def _attn_mlp(x_nld, k, v, p, n_head, q_tile, act_dtype, vmem_limit):
    N, L, D = x_nld.shape
    Dh = D // n_head
    n_q = L // q_tile
    weight_args = (p["ln1_g"], p["ln1_b"], p["wq"], p["bq"], p["wo"], p["bo"],
                   p["ln2_g"], p["ln2_b"], p["wfc"], p["bfc"], p["wproj"], p["bproj"])

    def wspec(a):
        nd = a.ndim
        return _single_buffered_spec(a.shape, lambda b, qi, _nd=nd: (0,) * _nd)

    in_specs = ([pl.BlockSpec((1, q_tile, D), lambda b, qi: (b, qi, 0)),
                 pl.BlockSpec((1, n_head, L, Dh), lambda b, qi: (b, 0, 0, 0)),
                 pl.BlockSpec((1, n_head, L, Dh), lambda b, qi: (b, 0, 0, 0))]
                + [wspec(w) for w in weight_args])
    out_spec = pl.BlockSpec((1, q_tile, D), lambda b, qi: (b, qi, 0))

    kernel = functools.partial(_attn_mlp_kernel, n_head=n_head, act_dtype=act_dtype)
    return pl.pallas_call(
        kernel,
        out_shape=jax.ShapeDtypeStruct((N, L, D), x_nld.dtype),
        grid=(N, n_q),
        in_specs=in_specs,
        out_specs=out_spec,
        input_output_aliases={0: 0},                    # residual stream updated in place
        compiler_params=pltpu.CompilerParams(
            dimension_semantics=("parallel", "parallel"),
            vmem_limit_bytes=vmem_limit),
    )(x_nld, k, v, *weight_args)


# --------------------------------------------------------------------------------------
# layer / model wrappers
# --------------------------------------------------------------------------------------
def residual_attention_block(x_nld, p, n_head, q_tile=None, act_dtype=jnp.float32):
    """x_nld: (N, L, D) float32. p: one layer's prepared weights (bf16, q-scale folded)."""
    N, L, D = x_nld.shape
    assert D % n_head == 0
    Dh = D // n_head
    if q_tile is None:
        q_tile = _default_q_tile(L)
    assert L % q_tile == 0, "sequence length must be a multiple of the q tile"

    kv_blk = n_head * L * Dh * 2                                      # one (H, L, Dh) bf16 slab
    res_a = (_nbytes(p["ln1_g"], p["ln1_b"], p["wk"], p["bk"], p["wv"], p["bv"])
             + 2 * (L * D * 4 + 2 * kv_blk) + 3 * L * D * 4)
    res_b = (_nbytes(p["ln1_g"], p["ln1_b"], p["wq"], p["bq"], p["wo"], p["bo"],
                     p["ln2_g"], p["ln2_b"], p["wfc"], p["bfc"], p["wproj"], p["bproj"])
             + 2 * (2 * q_tile * D * 4 + 2 * kv_blk)
             + 2 * n_head * q_tile * L * 4 + 2 * q_tile * 4 * D * 4 + 4 * q_tile * D * 4)

    k, v = _kv_projection(x_nld, p, n_head, _vmem_limit_bytes(res_a))
    return _attn_mlp(x_nld, k, v, p, n_head, q_tile, act_dtype, _vmem_limit_bytes(res_b))


def transformer_forward(x_lnd, params, n_head, q_tile=None, act_dtype=None):
    """x_lnd: (L, N, D) — same layout as the PyTorch module (seq, batch, width)."""
    if act_dtype is None:
        act_dtype = _default_act_dtype()
    x = jnp.transpose(x_lnd, (1, 0, 2))                  # -> (N, L, D)
    for p in params:
        x = residual_attention_block(x, p, n_head, q_tile=q_tile, act_dtype=act_dtype)
    return jnp.transpose(x, (1, 0, 2))                   # -> (L, N, D)


# --------------------------------------------------------------------------------------
# parameters
# --------------------------------------------------------------------------------------
def init_transformer_params(key, width, layers):
    """Deterministic synthetic parameters in 'PyTorch-like' f32 form.  Linear weights are
    stored pre-transposed as (in_features, out_features); 1-D params as (1, dim)."""
    D = width
    params = []
    for _ in range(layers):
        key, *ks = jax.random.split(key, 7)
        params.append({
            "ln1_g": jnp.ones((1, D), jnp.float32),
            "ln1_b": jnp.zeros((1, D), jnp.float32),
            "wqkv": jax.random.normal(ks[0], (D, 3 * D), jnp.float32) * 0.02,
            "bqkv": jax.random.normal(ks[1], (1, 3 * D), jnp.float32) * 0.02,
            "wo": jax.random.normal(ks[2], (D, D), jnp.float32) * 0.02,
            "bo": jnp.zeros((1, D), jnp.float32),
            "ln2_g": jnp.ones((1, D), jnp.float32),
            "ln2_b": jnp.zeros((1, D), jnp.float32),
            "wfc": jax.random.normal(ks[3], (D, 4 * D), jnp.float32) * 0.02,
            "bfc": jax.random.normal(ks[4], (1, 4 * D), jnp.float32) * 0.02,
            "wproj": jax.random.normal(ks[5], (4 * D, D), jnp.float32) * 0.02,
            "bproj": jnp.zeros((1, D), jnp.float32),
        })
    return params


def prepare_params_for_kernel(params, n_head):
    """Split the fused qkv projection into q/k/v, fold 1/sqrt(Dh) into q, and cast matmul
    weights to bf16 (f32 accumulation in-kernel).  LayerNorm params and biases stay f32."""
    out = []
    for p in params:
        D = p["wo"].shape[0]
        Dh = D // n_head
        scale = 1.0 / math.sqrt(Dh)
        out.append({
            "ln1_g": p["ln1_g"], "ln1_b": p["ln1_b"],
            "wq": (p["wqkv"][:, :D] * scale).astype(jnp.bfloat16),
            "bq": p["bqkv"][:, :D] * scale,
            "wk": p["wqkv"][:, D:2 * D].astype(jnp.bfloat16),
            "bk": p["bqkv"][:, D:2 * D],
            "wv": p["wqkv"][:, 2 * D:].astype(jnp.bfloat16),
            "bv": p["bqkv"][:, 2 * D:],
            "wo": p["wo"].astype(jnp.bfloat16), "bo": p["bo"],
            "ln2_g": p["ln2_g"], "ln2_b": p["ln2_b"],
            "wfc": p["wfc"].astype(jnp.bfloat16), "bfc": p["bfc"],
            "wproj": p["wproj"].astype(jnp.bfloat16), "bproj": p["bproj"],
        })
    return out


# --------------------------------------------------------------------------------------
# pure-JAX reference (raw f32 params, explicit q scaling, bf16 matmul emulation)
# --------------------------------------------------------------------------------------
def _reference_forward(x_lnd, raw_params, n_head):
    x = jnp.transpose(x_lnd, (1, 0, 2)).astype(jnp.float32)
    N, L, D = x.shape
    Dh = D // n_head

    def bf16_dot(a, w):
        return jnp.dot(a.astype(jnp.bfloat16), w.astype(jnp.bfloat16),
                       preferred_element_type=jnp.float32)

    for p in raw_params:
        xn = _layer_norm_f32(x, p["ln1_g"], p["ln1_b"])
        qkv = bf16_dot(xn, p["wqkv"]) + p["bqkv"]
        q, k, v = qkv[..., :D], qkv[..., D:2 * D], qkv[..., 2 * D:]
        q = q.reshape(N, L, n_head, Dh) / math.sqrt(Dh)
        k = k.reshape(N, L, n_head, Dh)
        v = v.reshape(N, L, n_head, Dh)
        s = jnp.einsum("nqhd,nkhd->nhqk", q.astype(jnp.bfloat16), k.astype(jnp.bfloat16),
                       preferred_element_type=jnp.float32)
        pm = jax.nn.softmax(s, axis=-1)
        o = jnp.einsum("nhqk,nkhd->nqhd", pm.astype(jnp.bfloat16), v.astype(jnp.bfloat16),
                       preferred_element_type=jnp.float32).reshape(N, L, D)
        x = x + bf16_dot(o, p["wo"]) + p["bo"]
        xn2 = _layer_norm_f32(x, p["ln2_g"], p["ln2_b"])
        h1 = bf16_dot(xn2, p["wfc"]) + p["bfc"]
        h1 = h1 * jax.nn.sigmoid(1.702 * h1)
        x = x + bf16_dot(h1, p["wproj"]) + p["bproj"]
    return jnp.transpose(x, (1, 0, 2))


if __name__ == "__main__":
    # Small shapes consistent with the module: width=32, layers=2, heads=4,
    # input x of shape (seq=16, batch=2, width=32) in (L, N, D) layout.
    # q_tile=8 gives two q-tiles per sequence, exercising the tiled (parallel, parallel) grid.
    width, layers, heads = 32, 2, 4
    L, N = 16, 2
    q_tile = 8

    key = jax.random.PRNGKey(0)
    kx, kp = jax.random.split(key)
    x = jax.random.normal(kx, (L, N, width), jnp.float32)
    raw_params = init_transformer_params(kp, width, layers)
    kparams = prepare_params_for_kernel(raw_params, heads)

    fwd = jax.jit(functools.partial(transformer_forward, n_head=heads, q_tile=q_tile))
    out = jax.block_until_ready(fwd(x, kparams))

    ref = _reference_forward(x, raw_params, heads)
    assert out.shape == (L, N, width)
    max_err = float(jnp.max(jnp.abs(out - ref)))
    assert jnp.allclose(out, ref, atol=2e-2, rtol=2e-2), f"Pallas mismatch, max_err={max_err}"

    print("KERNEL_OK")
</pallas_src>

<mosaic_0001>
module attributes {stable_mosaic.version = 11 : i64} {
  func.func @_attn_mlp_kernel(%arg0: i32, %arg1: i32, %arg2: memref<1x8x32xf32, #tpu.memory_space<vmem>>, %arg3: memref<1x4x16x8xbf16, #tpu.memory_space<vmem>>, %arg4: memref<1x4x16x8xbf16, #tpu.memory_space<vmem>>, %arg5: memref<1x32xf32, #tpu.memory_space<vmem>>, %arg6: memref<1x32xf32, #tpu.memory_space<vmem>>, %arg7: memref<32x32xbf16, #tpu.memory_space<vmem>>, %arg8: memref<1x32xf32, #tpu.memory_space<vmem>>, %arg9: memref<32x32xbf16, #tpu.memory_space<vmem>>, %arg10: memref<1x32xf32, #tpu.memory_space<vmem>>, %arg11: memref<1x32xf32, #tpu.memory_space<vmem>>, %arg12: memref<1x32xf32, #tpu.memory_space<vmem>>, %arg13: memref<32x128xbf16, #tpu.memory_space<vmem>>, %arg14: memref<1x128xf32, #tpu.memory_space<vmem>>, %arg15: memref<128x32xbf16, #tpu.memory_space<vmem>>, %arg16: memref<1x32xf32, #tpu.memory_space<vmem>>, %arg17: memref<1x8x32xf32, #tpu.memory_space<vmem>>) attributes {dimension_semantics = [#tpu.dimension_semantics<parallel>, #tpu.dimension_semantics<parallel>], iteration_bounds = array<i64: 2, 2>, scalar_prefetch = 0 : i64, scratch_operands = 0 : i64, tpu.core_type = #tpu.core_type<tc>, window_params = [{transform_indices = @transform_0, window_bounds = array<i64: 1, 8, 32>}, {transform_indices = @transform_1, window_bounds = array<i64: 1, 4, 16, 8>}, {transform_indices = @transform_2, window_bounds = array<i64: 1, 4, 16, 8>}, {pipeline_mode = #tpu.pipeline_mode<synchronous>, transform_indices = @transform_3, window_bounds = array<i64: 1, 32>}, {pipeline_mode = #tpu.pipeline_mode<synchronous>, transform_indices = @transform_4, window_bounds = array<i64: 1, 32>}, {pipeline_mode = #tpu.pipeline_mode<synchronous>, transform_indices = @transform_5, window_bounds = array<i64: 32, 32>}, {pipeline_mode = #tpu.pipeline_mode<synchronous>, transform_indices = @transform_6, window_bounds = array<i64: 1, 32>}, {pipeline_mode = #tpu.pipeline_mode<synchronous>, transform_indices = @transform_7, window_bounds = array<i64: 32, 32>}, {pipeline_mode = #tpu.pipeline_mode<synchronous>, transform_indices = @transform_8, window_bounds = array<i64: 1, 32>}, {pipeline_mode = #tpu.pipeline_mode<synchronous>, transform_indices = @transform_9, window_bounds = array<i64: 1, 32>}, {pipeline_mode = #tpu.pipeline_mode<synchronous>, transform_indices = @transform_10, window_bounds = array<i64: 1, 32>}, {pipeline_mode = #tpu.pipeline_mode<synchronous>, transform_indices = @transform_11, window_bounds = array<i64: 32, 128>}, {pipeline_mode = #tpu.pipeline_mode<synchronous>, transform_indices = @transform_12, window_bounds = array<i64: 1, 128>}, {pipeline_mode = #tpu.pipeline_mode<synchronous>, transform_indices = @transform_13, window_bounds = array<i64: 128, 32>}, {pipeline_mode = #tpu.pipeline_mode<synchronous>, transform_indices = @transform_14, window_bounds = array<i64: 1, 32>}, {transform_indices = @transform_15, window_bounds = array<i64: 1, 8, 32>}]} {
    %c0 = arith.constant 0 : index
    %c0_0 = arith.constant 0 : index
    %c0_1 = arith.constant 0 : index
    %0 = vector.load %arg2[%c0, %c0_0, %c0_1] : memref<1x8x32xf32, #tpu.memory_space<vmem>>, vector<1x8x32xf32>
    %1 = vector.shape_cast %0 : vector<1x8x32xf32> to vector<8x32xf32>
    %c0_2 = arith.constant 0 : index
    %c0_3 = arith.constant 0 : index
    %2 = vector.load %arg5[%c0_2, %c0_3] : memref<1x32xf32, #tpu.memory_space<vmem>>, vector<1x32xf32>
    %c0_4 = arith.constant 0 : index
    %c0_5 = arith.constant 0 : index
    %3 = vector.load %arg6[%c0_4, %c0_5] : memref<1x32xf32, #tpu.memory_space<vmem>>, vector<1x32xf32>
    %cst = arith.constant dense<0.000000e+00> : vector<8xf32>
    %4 = vector.multi_reduction <add>, %1, %cst [1] : vector<8x32xf32> to vector<8xf32>
    %5 = vector.shape_cast %4 : vector<8xf32> to vector<8x1xf32>
    %cst_6 = arith.constant 3.200000e+01 : f32
    %6 = vector.broadcast %cst_6 : f32 to vector<8x1xf32>
    %7 = arith.divf %5, %6 : vector<8x1xf32>
    %8 = vector.broadcast %7 : vector<8x1xf32> to vector<8x32xf32>
    %9 = arith.subf %1, %8 : vector<8x32xf32>
    %10 = arith.mulf %9, %9 : vector<8x32xf32>
    %cst_7 = arith.constant dense<0.000000e+00> : vector<8xf32>
    %11 = vector.multi_reduction <add>, %10, %cst_7 [1] : vector<8x32xf32> to vector<8xf32>
    %12 = vector.shape_cast %11 : vector<8xf32> to vector<8x1xf32>
    %cst_8 = arith.constant 3.200000e+01 : f32
    %13 = vector.broadcast %cst_8 : f32 to vector<8x1xf32>
    %14 = arith.divf %12, %13 : vector<8x1xf32>
    %15 = vector.broadcast %7 : vector<8x1xf32> to vector<8x32xf32>
    %16 = arith.subf %1, %15 : vector<8x32xf32>
    %cst_9 = arith.constant 9.99999974E-6 : f32
    %17 = vector.broadcast %cst_9 : f32 to vector<8x1xf32>
    %18 = arith.addf %14, %17 : vector<8x1xf32>
    %19 = math.rsqrt %18 : vector<8x1xf32>
    %20 = vector.broadcast %19 : vector<8x1xf32> to vector<8x32xf32>
    %21 = arith.mulf %16, %20 : vector<8x32xf32>
    %22 = vector.broadcast %2 : vector<1x32xf32> to vector<8x32xf32>
    %23 = arith.mulf %21, %22 : vector<8x32xf32>
    %24 = vector.broadcast %3 : vector<1x32xf32> to vector<8x32xf32>
    %25 = arith.addf %23, %24 : vector<8x32xf32>
    %26 = arith.truncf %25 : vector<8x32xf32> to vector<8x32xbf16>
    %c0_10 = arith.constant 0 : index
    %c0_11 = arith.constant 0 : index
    %27 = vector.load %arg7[%c0_10, %c0_11] : memref<32x32xbf16, #tpu.memory_space<vmem>>, vector<32x32xbf16>
    %cst_12 = arith.constant dense<0.000000e+00> : vector<8x32xf32>
    %28 = tpu.matmul %26, %27, %cst_12 {dimension_numbers = #tpu.dot_dimension_numbers<[1], [0], [0], [1], [0, 0, 1, 1], [], []>} : vector<8x32xbf16>, vector<32x32xbf16>, vector<8x32xf32> -> vector<8x32xf32>
    %c0_13 = arith.constant 0 : index
    %c0_14 = arith.constant 0 : index
    %29 = vector.load %arg8[%c0_13, %c0_14] : memref<1x32xf32, #tpu.memory_space<vmem>>, vector<1x32xf32>
    %30 = vector.broadcast %29 : vector<1x32xf32> to vector<8x32xf32>
    %31 = arith.addf %28, %30 : vector<8x32xf32>
    %32 = vector.shape_cast %31 : vector<8x32xf32> to vector<8x4x8xf32>
    %33 = tpu.transpose %32, [1, 0, 2] : vector<8x4x8xf32> -> vector<4x8x8xf32>
    %34 = arith.truncf %33 : vector<4x8x8xf32> to vector<4x8x8xbf16>
    %c0_15 = arith.constant 0 : index
    %c0_16 = arith.constant 0 : index
    %c0_17 = arith.constant 0 : index
    %c0_18 = arith.constant 0 : index
    %35 = vector.load %arg3[%c0_15, %c0_16, %c0_17, %c0_18] : memref<1x4x16x8xbf16, #tpu.memory_space<vmem>>, vector<1x4x16x8xbf16>
    %36 = vector.shape_cast %35 : vector<1x4x16x8xbf16> to vector<4x16x8xbf16>
    %c0_19 = arith.constant 0 : index
    %c0_20 = arith.constant 0 : index
    %c0_21 = arith.constant 0 : index
    %c0_22 = arith.constant 0 : index
    %37 = vector.load %arg4[%c0_19, %c0_20, %c0_21, %c0_22] : memref<1x4x16x8xbf16, #tpu.memory_space<vmem>>, vector<1x4x16x8xbf16>
    %38 = vector.shape_cast %37 : vector<1x4x16x8xbf16> to vector<4x16x8xbf16>
    "tpu.trace_start"() <{level = 10 : i32, message = "hqd,hkd->hqk"}> : () -> ()
    %cst_23 = arith.constant dense<0.000000e+00> : vector<4x8x16xf32>
    %39 = tpu.matmul %34, %36, %cst_23 {dimension_numbers = #tpu.dot_dimension_numbers<[2], [2], [1], [1], [0, 0, 0, 1, 1, 1], [0], [0]>} : vector<4x8x8xbf16>, vector<4x16x8xbf16>, vector<4x8x16xf32> -> vector<4x8x16xf32>
    "tpu.trace_stop"() : () -> ()
    %cst_24 = arith.constant dense<0xFF800000> : vector<4x8xf32>
    %40 = vector.multi_reduction <maximumf>, %39, %cst_24 [2] : vector<4x8x16xf32> to vector<4x8xf32>
    %41 = vector.shape_cast %40 : vector<4x8xf32> to vector<4x8x1xf32>
    %42 = vector.broadcast %41 : vector<4x8x1xf32> to vector<4x8x16xf32>
    %43 = arith.subf %39, %42 : vector<4x8x16xf32>
    %44 = math.exp %43 : vector<4x8x16xf32>
    %cst_25 = arith.constant dense<0.000000e+00> : vector<4x8xf32>
    %45 = vector.multi_reduction <add>, %44, %cst_25 [2] : vector<4x8x16xf32> to vector<4x8xf32>
    %46 = vector.shape_cast %45 : vector<4x8xf32> to vector<4x8x1xf32>
    %47 = tpu.reciprocal %46 {approx = true} : vector<4x8x1xf32> -> vector<4x8x1xf32>
    %48 = vector.broadcast %47 : vector<4x8x1xf32> to vector<4x8x16xf32>
    %49 = arith.mulf %44, %48 : vector<4x8x16xf32>
    %50 = arith.truncf %49 : vector<4x8x16xf32> to vector<4x8x16xbf16>
    "tpu.trace_start"() <{level = 10 : i32, message = "hqk,hkd->hqd"}> : () -> ()
    %cst_26 = arith.constant dense<0.000000e+00> : vector<4x8x8xf32>
    %51 = tpu.matmul %50, %38, %cst_26 {dimension_numbers = #tpu.dot_dimension_numbers<[2], [1], [1], [2], [0, 0, 0, 1, 1, 2], [0], [0]>} : vector<4x8x16xbf16>, vector<4x16x8xbf16>, vector<4x8x8xf32> -> vector<4x8x8xf32>
    "tpu.trace_stop"() : () -> ()
    %52 = tpu.transpose %51, [1, 0, 2] : vector<4x8x8xf32> -> vector<8x4x8xf32>
    %53 = vector.shape_cast %52 : vector<8x4x8xf32> to vector<8x32xf32>
    %54 = arith.truncf %53 : vector<8x32xf32> to vector<8x32xbf16>
    %c0_27 = arith.constant 0 : index
    %c0_28 = arith.constant 0 : index
    %55 = vector.load %arg9[%c0_27, %c0_28] : memref<32x32xbf16, #tpu.memory_space<vmem>>, vector<32x32xbf16>
    %cst_29 = arith.constant dense<0.000000e+00> : vector<8x32xf32>
    %56 = tpu.matmul %54, %55, %cst_29 {dimension_numbers = #tpu.dot_dimension_numbers<[1], [0], [0], [1], [0, 0, 1, 1], [], []>} : vector<8x32xbf16>, vector<32x32xbf16>, vector<8x32xf32> -> vector<8x32xf32>
    %c0_30 = arith.constant 0 : index
    %c0_31 = arith.constant 0 : index
    %57 = vector.load %arg10[%c0_30, %c0_31] : memref<1x32xf32, #tpu.memory_space<vmem>>, vector<1x32xf32>
    %58 = vector.broadcast %57 : vector<1x32xf32> to vector<8x32xf32>
    %59 = arith.addf %56, %58 : vector<8x32xf32>
    %60 = arith.addf %1, %59 : vector<8x32xf32>
    %c0_32 = arith.constant 0 : index
    %c0_33 = arith.constant 0 : index
    %61 = vector.load %arg11[%c0_32, %c0_33] : memref<1x32xf32, #tpu.memory_space<vmem>>, vector<1x32xf32>
    %c0_34 = arith.constant 0 : index
    %c0_35 = arith.constant 0 : index
    %62 = vector.load %arg12[%c0_34, %c0_35] : memref<1x32xf32, #tpu.memory_space<vmem>>, vector<1x32xf32>
    %cst_36 = arith.constant dense<0.000000e+00> : vector<8xf32>
    %63 = vector.multi_reduction <add>, %60, %cst_36 [1] : vector<8x32xf32> to vector<8xf32>
    %64 = vector.shape_cast %63 : vector<8xf32> to vector<8x1xf32>
    %cst_37 = arith.constant 3.200000e+01 : f32
    %65 = vector.broadcast %cst_37 : f32 to vector<8x1xf32>
    %66 = arith.divf %64, %65 : vector<8x1xf32>
    %67 = vector.broadcast %66 : vector<8x1xf32> to vector<8x32xf32>
    %68 = arith.subf %60, %67 : vector<8x32xf32>
    %69 = arith.mulf %68, %68 : vector<8x32xf32>
    %cst_38 = arith.constant dense<0.000000e+00> : vector<8xf32>
    %70 = vector.multi_reduction <add>, %69, %cst_38 [1] : vector<8x32xf32> to vector<8xf32>
    %71 = vector.shape_cast %70 : vector<8xf32> to vector<8x1xf32>
    %cst_39 = arith.constant 3.200000e+01 : f32
    %72 = vector.broadcast %cst_39 : f32 to vector<8x1xf32>
    %73 = arith.divf %71, %72 : vector<8x1xf32>
    %74 = vector.broadcast %66 : vector<8x1xf32> to vector<8x32xf32>
    %75 = arith.subf %60, %74 : vector<8x32xf32>
    %cst_40 = arith.constant 9.99999974E-6 : f32
    %76 = vector.broadcast %cst_40 : f32 to vector<8x1xf32>
    %77 = arith.addf %73, %76 : vector<8x1xf32>
    %78 = math.rsqrt %77 : vector<8x1xf32>
    %79 = vector.broadcast %78 : vector<8x1xf32> to vector<8x32xf32>
    %80 = arith.mulf %75, %79 : vector<8x32xf32>
    %81 = vector.broadcast %61 : vector<1x32xf32> to vector<8x32xf32>
    %82 = arith.mulf %80, %81 : vector<8x32xf32>
    %83 = vector.broadcast %62 : vector<1x32xf32> to vector<8x32xf32>
    %84 = arith.addf %82, %83 : vector<8x32xf32>
    %85 = arith.truncf %84 : vector<8x32xf32> to vector<8x32xbf16>
    %c0_41 = arith.constant 0 : index
    %c0_42 = arith.constant 0 : index
    %86 = vector.load %arg13[%c0_41, %c0_42] : memref<32x128xbf16, #tpu.memory_space<vmem>>, vector<32x128xbf16>
    %cst_43 = arith.constant dense<0.000000e+00> : vector<8x128xf32>
    %87 = tpu.matmul %85, %86, %cst_43 {dimension_numbers = #tpu.dot_dimension_numbers<[1], [0], [0], [1], [0, 0, 1, 1], [], []>} : vector<8x32xbf16>, vector<32x128xbf16>, vector<8x128xf32> -> vector<8x128xf32>
    %c0_44 = arith.constant 0 : index
    %c0_45 = arith.constant 0 : index
    %88 = vector.load %arg14[%c0_44, %c0_45] : memref<1x128xf32, #tpu.memory_space<vmem>>, vector<1x128xf32>
    %89 = vector.broadcast %88 : vector<1x128xf32> to vector<8x128xf32>
    %90 = arith.addf %87, %89 : vector<8x128xf32>
    %cst_46 = arith.constant 1.702000e+00 : f32
    %91 = vector.broadcast %cst_46 : f32 to vector<8x128xf32>
    %92 = arith.mulf %91, %90 : vector<8x128xf32>
    %cst_47 = arith.constant 0.000000e+00 : f32
    %93 = vector.broadcast %cst_47 : f32 to vector<8x128xf32>
    %94 = arith.subf %93, %92 : vector<8x128xf32>
    %95 = math.exp %94 : vector<8x128xf32>
    %cst_48 = arith.constant 1.000000e+00 : f32
    %96 = vector.broadcast %cst_48 : f32 to vector<8x128xf32>
    %97 = arith.addf %96, %95 : vector<8x128xf32>
    %98 = tpu.reciprocal %97 {approx = true} : vector<8x128xf32> -> vector<8x128xf32>
    %99 = arith.mulf %90, %98 : vector<8x128xf32>
    %100 = arith.truncf %99 : vector<8x128xf32> to vector<8x128xbf16>
    %c0_49 = arith.constant 0 : index
    %c0_50 = arith.constant 0 : index
    %101 = vector.load %arg15[%c0_49, %c0_50] : memref<128x32xbf16, #tpu.memory_space<vmem>>, vector<128x32xbf16>
    %cst_51 = arith.constant dense<0.000000e+00> : vector<8x32xf32>
    %102 = tpu.matmul %100, %101, %cst_51 {dimension_numbers = #tpu.dot_dimension_numbers<[1], [0], [0], [1], [0, 0, 1, 1], [], []>} : vector<8x128xbf16>, vector<128x32xbf16>, vector<8x32xf32> -> vector<8x32xf32>
    %c0_52 = arith.constant 0 : index
    %c0_53 = arith.constant 0 : index
    %103 = vector.load %arg16[%c0_52, %c0_53] : memref<1x32xf32, #tpu.memory_space<vmem>>, vector<1x32xf32>
    %104 = vector.broadcast %103 : vector<1x32xf32> to vector<8x32xf32>
    %105 = arith.addf %102, %104 : vector<8x32xf32>
    %106 = arith.addf %60, %105 : vector<8x32xf32>
    %c0_54 = arith.constant 0 : index
    %c0_55 = arith.constant 0 : index
    %c0_56 = arith.constant 0 : index
    %107 = vector.load %arg17[%c0_54, %c0_55, %c0_56] : memref<1x8x32xf32, #tpu.memory_space<vmem>>, vector<1x8x32xf32>
    %108 = vector.shape_cast %107 : vector<1x8x32xf32> to vector<8x32xf32>
    %109 = vector.shape_cast %106 : vector<8x32xf32> to vector<1x8x32xf32>
    tpu.vector_store %arg17[%c0_54, %c0_55, %c0_56], %109 {strides = array<i32>} : memref<1x8x32xf32, #tpu.memory_space<vmem>>, vector<1x8x32xf32>,
    return
  }
  func.func @transform_0(%arg0: i32, %arg1: i32) -> (i32, i32, i32) {
    %c0_i32 = arith.constant 0 : i32
    %c0_i32_0 = arith.constant 0 : i32
    return %arg0, %arg1, %c0_i32 : i32, i32, i32
  }
  func.func @transform_1(%arg0: i32, %arg1: i32) -> (i32, i32, i32, i32) {
    %c0_i32 = arith.constant 0 : i32
    %c0_i32_0 = arith.constant 0 : i32
    %c0_i32_1 = arith.constant 0 : i32
    %c0_i32_2 = arith.constant 0 : i32
    return %arg0, %c0_i32, %c0_i32_0, %c0_i32_1 : i32, i32, i32, i32
  }
  func.func @transform_2(%arg0: i32, %arg1: i32) -> (i32, i32, i32, i32) {
    %c0_i32 = arith.constant 0 : i32
    %c0_i32_0 = arith.constant 0 : i32
    %c0_i32_1 = arith.constant 0 : i32
    %c0_i32_2 = arith.constant 0 : i32
    return %arg0, %c0_i32, %c0_i32_0, %c0_i32_1 : i32, i32, i32, i32
  }
  func.func @transform_3(%arg0: i32, %arg1: i32) -> (i32, i32) {
    %c0_i32 = arith.constant 0 : i32
    %c0_i32_0 = arith.constant 0 : i32
    %c0_i32_1 = arith.constant 0 : i32
    return %c0_i32, %c0_i32_0 : i32, i32
  }
  func.func @transform_4(%arg0: i32, %arg1: i32) -> (i32, i32) {
    %c0_i32 = arith.constant 0 : i32
    %c0_i32_0 = arith.constant 0 : i32
    %c0_i32_1 = arith.constant 0 : i32
    return %c0_i32, %c0_i32_0 : i32, i32
  }
  func.func @transform_5(%arg0: i32, %arg1: i32) -> (i32, i32) {
    %c0_i32 = arith.constant 0 : i32
    %c0_i32_0 = arith.constant 0 : i32
    %c0_i32_1 = arith.constant 0 : i32
    return %c0_i32, %c0_i32_0 : i32, i32
  }
  func.func @transform_6(%arg0: i32, %arg1: i32) -> (i32, i32) {
    %c0_i32 = arith.constant 0 : i32
    %c0_i32_0 = arith.constant 0 : i32
    %c0_i32_1 = arith.constant 0 : i32
    return %c0_i32, %c0_i32_0 : i32, i32
  }
  func.func @transform_7(%arg0: i32, %arg1: i32) -> (i32, i32) {
    %c0_i32 = arith.constant 0 : i32
    %c0_i32_0 = arith.constant 0 : i32
    %c0_i32_1 = arith.constant 0 : i32
    return %c0_i32, %c0_i32_0 : i32, i32
  }
  func.func @transform_8(%arg0: i32, %arg1: i32) -> (i32, i32) {
    %c0_i32 = arith.constant 0 : i32
    %c0_i32_0 = arith.constant 0 : i32
    %c0_i32_1 = arith.constant 0 : i32
    return %c0_i32, %c0_i32_0 : i32, i32
  }
  func.func @transform_9(%arg0: i32, %arg1: i32) -> (i32, i32) {
    %c0_i32 = arith.constant 0 : i32
    %c0_i32_0 = arith.constant 0 : i32
    %c0_i32_1 = arith.constant 0 : i32
    return %c0_i32, %c0_i32_0 : i32, i32
  }
  func.func @transform_10(%arg0: i32, %arg1: i32) -> (i32, i32) {
    %c0_i32 = arith.constant 0 : i32
    %c0_i32_0 = arith.constant 0 : i32
    %c0_i32_1 = arith.constant 0 : i32
    return %c0_i32, %c0_i32_0 : i32, i32
  }
  func.func @transform_11(%arg0: i32, %arg1: i32) -> (i32, i32) {
    %c0_i32 = arith.constant 0 : i32
    %c0_i32_0 = arith.constant 0 : i32
    %c0_i32_1 = arith.constant 0 : i32
    return %c0_i32, %c0_i32_0 : i32, i32
  }
  func.func @transform_12(%arg0: i32, %arg1: i32) -> (i32, i32) {
    %c0_i32 = arith.constant 0 : i32
    %c0_i32_0 = arith.constant 0 : i32
    %c0_i32_1 = arith.constant 0 : i32
    return %c0_i32, %c0_i32_0 : i32, i32
  }
  func.func @transform_13(%arg0: i32, %arg1: i32) -> (i32, i32) {
    %c0_i32 = arith.constant 0 : i32
    %c0_i32_0 = arith.constant 0 : i32
    %c0_i32_1 = arith.constant 0 : i32
    return %c0_i32, %c0_i32_0 : i32, i32
  }
  func.func @transform_14(%arg0: i32, %arg1: i32) -> (i32, i32) {
    %c0_i32 = arith.constant 0 : i32
    %c0_i32_0 = arith.constant 0 : i32
    %c0_i32_1 = arith.constant 0 : i32
    return %c0_i32, %c0_i32_0 : i32, i32
  }
  func.func @transform_15(%arg0: i32, %arg1: i32) -> (i32, i32, i32) {
    %c0_i32 = arith.constant 0 : i32
    %c0_i32_0 = arith.constant 0 : i32
    return %arg0, %arg1, %c0_i32 : i32, i32, i32
  }
}

module attributes {stable_mosaic.version = 11 : i64} {
  func.func @_kv_proj_kernel(%arg0: i32, %arg1: memref<1x16x32xf32, #tpu.memory_space<vmem>>, %arg2: memref<1x32xf32, #tpu.memory_space<vmem>>, %arg3: memref<1x32xf32, #tpu.memory_space<vmem>>, %arg4: memref<32x32xbf16, #tpu.memory_space<vmem>>, %arg5: memref<1x32xf32, #tpu.memory_space<vmem>>, %arg6: memref<32x32xbf16, #tpu.memory_space<vmem>>, %arg7: memref<1x32xf32, #tpu.memory_space<vmem>>, %arg8: memref<1x4x16x8xbf16, #tpu.memory_space<vmem>>, %arg9: memref<1x4x16x8xbf16, #tpu.memory_space<vmem>>) attributes {dimension_semantics = [#tpu.dimension_semantics<parallel>], iteration_bounds = array<i64: 2>, scalar_prefetch = 0 : i64, scratch_operands = 0 : i64, tpu.core_type = #tpu.core_type<tc>, window_params = [{transform_indices = @transform_0, window_bounds = array<i64: 1, 16, 32>}, {pipeline_mode = #tpu.pipeline_mode<synchronous>, transform_indices = @transform_1, window_bounds = array<i64: 1, 32>}, {pipeline_mode = #tpu.pipeline_mode<synchronous>, transform_indices = @transform_2, window_bounds = array<i64: 1, 32>}, {pipeline_mode = #tpu.pipeline_mode<synchronous>, transform_indices = @transform_3, window_bounds = array<i64: 32, 32>}, {pipeline_mode = #tpu.pipeline_mode<synchronous>, transform_indices = @transform_4, window_bounds = array<i64: 1, 32>}, {pipeline_mode = #tpu.pipeline_mode<synchronous>, transform_indices = @transform_5, window_bounds = array<i64: 32, 32>}, {pipeline_mode = #tpu.pipeline_mode<synchronous>, transform_indices = @transform_6, window_bounds = array<i64: 1, 32>}, {transform_indices = @transform_7, window_bounds = array<i64: 1, 4, 16, 8>}, {transform_indices = @transform_8, window_bounds = array<i64: 1, 4, 16, 8>}]} {
    %c0 = arith.constant 0 : index
    %c0_0 = arith.constant 0 : index
    %c0_1 = arith.constant 0 : index
    %0 = vector.load %arg1[%c0, %c0_0, %c0_1] : memref<1x16x32xf32, #tpu.memory_space<vmem>>, vector<1x16x32xf32>
    %1 = vector.shape_cast %0 : vector<1x16x32xf32> to vector<16x32xf32>
    %c0_2 = arith.constant 0 : index
    %c0_3 = arith.constant 0 : index
    %2 = vector.load %arg2[%c0_2, %c0_3] : memref<1x32xf32, #tpu.memory_space<vmem>>, vector<1x32xf32>
    %c0_4 = arith.constant 0 : index
    %c0_5 = arith.constant 0 : index
    %3 = vector.load %arg3[%c0_4, %c0_5] : memref<1x32xf32, #tpu.memory_space<vmem>>, vector<1x32xf32>
    %cst = arith.constant dense<0.000000e+00> : vector<16xf32>
    %4 = vector.multi_reduction <add>, %1, %cst [1] : vector<16x32xf32> to vector<16xf32>
    %5 = vector.shape_cast %4 : vector<16xf32> to vector<16x1xf32>
    %cst_6 = arith.constant 3.200000e+01 : f32
    %6 = vector.broadcast %cst_6 : f32 to vector<16x1xf32>
    %7 = arith.divf %5, %6 : vector<16x1xf32>
    %8 = vector.broadcast %7 : vector<16x1xf32> to vector<16x32xf32>
    %9 = arith.subf %1, %8 : vector<16x32xf32>
    %10 = arith.mulf %9, %9 : vector<16x32xf32>
    %cst_7 = arith.constant dense<0.000000e+00> : vector<16xf32>
    %11 = vector.multi_reduction <add>, %10, %cst_7 [1] : vector<16x32xf32> to vector<16xf32>
    %12 = vector.shape_cast %11 : vector<16xf32> to vector<16x1xf32>
    %cst_8 = arith.constant 3.200000e+01 : f32
    %13 = vector.broadcast %cst_8 : f32 to vector<16x1xf32>
    %14 = arith.divf %12, %13 : vector<16x1xf32>
    %15 = vector.broadcast %7 : vector<16x1xf32> to vector<16x32xf32>
    %16 = arith.subf %1, %15 : vector<16x32xf32>
    %cst_9 = arith.constant 9.99999974E-6 : f32
    %17 = vector.broadcast %cst_9 : f32 to vector<16x1xf32>
    %18 = arith.addf %14, %17 : vector<16x1xf32>
    %19 = math.rsqrt %18 : vector<16x1xf32>
    %20 = vector.broadcast %19 : vector<16x1xf32> to vector<16x32xf32>
    %21 = arith.mulf %16, %20 : vector<16x32xf32>
    %22 = vector.broadcast %2 : vector<1x32xf32> to vector<16x32xf32>
    %23 = arith.mulf %21, %22 : vector<16x32xf32>
    %24 = vector.broadcast %3 : vector<1x32xf32> to vector<16x32xf32>
    %25 = arith.addf %23, %24 : vector<16x32xf32>
    %26 = arith.truncf %25 : vector<16x32xf32> to vector<16x32xbf16>
    %c0_10 = arith.constant 0 : index
    %c0_11 = arith.constant 0 : index
    %27 = vector.load %arg4[%c0_10, %c0_11] : memref<32x32xbf16, #tpu.memory_space<vmem>>, vector<32x32xbf16>
    %cst_12 = arith.constant dense<0.000000e+00> : vector<16x32xf32>
    %28 = tpu.matmul %26, %27, %cst_12 {dimension_numbers = #tpu.dot_dimension_numbers<[1], [0], [0], [1], [0, 0, 1, 1], [], []>} : vector<16x32xbf16>, vector<32x32xbf16>, vector<16x32xf32> -> vector<16x32xf32>
    %c0_13 = arith.constant 0 : index
    %c0_14 = arith.constant 0 : index
    %29 = vector.load %arg5[%c0_13, %c0_14] : memref<1x32xf32, #tpu.memory_space<vmem>>, vector<1x32xf32>
    %30 = vector.broadcast %29 : vector<1x32xf32> to vector<16x32xf32>
    %31 = arith.addf %28, %30 : vector<16x32xf32>
    %32 = vector.shape_cast %31 : vector<16x32xf32> to vector<16x4x8xf32>
    %33 = tpu.transpose %32, [1, 0, 2] : vector<16x4x8xf32> -> vector<4x16x8xf32>
    %34 = arith.truncf %33 : vector<4x16x8xf32> to vector<4x16x8xbf16>
    %c0_15 = arith.constant 0 : index
    %c0_16 = arith.constant 0 : index
    %c0_17 = arith.constant 0 : index
    %c0_18 = arith.constant 0 : index
    %35 = vector.load %arg8[%c0_15, %c0_16, %c0_17, %c0_18] : memref<1x4x16x8xbf16, #tpu.memory_space<vmem>>, vector<1x4x16x8xbf16>
    %36 = vector.shape_cast %35 : vector<1x4x16x8xbf16> to vector<4x16x8xbf16>
    %37 = vector.shape_cast %34 : vector<4x16x8xbf16> to vector<1x4x16x8xbf16>
    tpu.vector_store %arg8[%c0_15, %c0_16, %c0_17, %c0_18], %37 {strides = array<i32>} : memref<1x4x16x8xbf16, #tpu.memory_space<vmem>>, vector<1x4x16x8xbf16>,
    %c0_19 = arith.constant 0 : index
    %c0_20 = arith.constant 0 : index
    %38 = vector.load %arg6[%c0_19, %c0_20] : memref<32x32xbf16, #tpu.memory_space<vmem>>, vector<32x32xbf16>
    %cst_21 = arith.constant dense<0.000000e+00> : vector<16x32xf32>
    %39 = tpu.matmul %26, %38, %cst_21 {dimension_numbers = #tpu.dot_dimension_numbers<[1], [0], [0], [1], [0, 0, 1, 1], [], []>} : vector<16x32xbf16>, vector<32x32xbf16>, vector<16x32xf32> -> vector<16x32xf32>
    %c0_22 = arith.constant 0 : index
    %c0_23 = arith.constant 0 : index
    %40 = vector.load %arg7[%c0_22, %c0_23] : memref<1x32xf32, #tpu.memory_space<vmem>>, vector<1x32xf32>
    %41 = vector.broadcast %40 : vector<1x32xf32> to vector<16x32xf32>
    %42 = arith.addf %39, %41 : vector<16x32xf32>
    %43 = vector.shape_cast %42 : vector<16x32xf32> to vector<16x4x8xf32>
    %44 = tpu.transpose %43, [1, 0, 2] : vector<16x4x8xf32> -> vector<4x16x8xf32>
    %45 = arith.truncf %44 : vector<4x16x8xf32> to vector<4x16x8xbf16>
    %c0_24 = arith.constant 0 : index
    %c0_25 = arith.constant 0 : index
    %c0_26 = arith.constant 0 : index
    %c0_27 = arith.constant 0 : index
    %46 = vector.load %arg9[%c0_24, %c0_25, %c0_26, %c0_27] : memref<1x4x16x8xbf16, #tpu.memory_space<vmem>>, vector<1x4x16x8xbf16>
    %47 = vector.shape_cast %46 : vector<1x4x16x8xbf16> to vector<4x16x8xbf16>
    %48 = vector.shape_cast %45 : vector<4x16x8xbf16> to vector<1x4x16x8xbf16>
    tpu.vector_store %arg9[%c0_24, %c0_25, %c0_26, %c0_27], %48 {strides = array<i32>} : memref<1x4x16x8xbf16, #tpu.memory_space<vmem>>, vector<1x4x16x8xbf16>,
    return
  }
  func.func @transform_0(%arg0: i32) -> (i32, i32, i32) {
    %c0_i32 = arith.constant 0 : i32
    %c0_i32_0 = arith.constant 0 : i32
    %c0_i32_1 = arith.constant 0 : i32
    return %arg0, %c0_i32, %c0_i32_0 : i32, i32, i32
  }
  func.func @transform_1(%arg0: i32) -> (i32, i32) {
    %c0_i32 = arith.constant 0 : i32
    %c0_i32_0 = arith.constant 0 : i32
    %c0_i32_1 = arith.constant 0 : i32
    return %c0_i32, %c0_i32_0 : i32, i32
  }
  func.func @transform_2(%arg0: i32) -> (i32, i32) {
    %c0_i32 = arith.constant 0 : i32
    %c0_i32_0 = arith.constant 0 : i32
    %c0_i32_1 = arith.constant 0 : i32
    return %c0_i32, %c0_i32_0 : i32, i32
  }
  func.func @transform_3(%arg0: i32) -> (i32, i32) {
    %c0_i32 = arith.constant 0 : i32
    %c0_i32_0 = arith.constant 0 : i32
    %c0_i32_1 = arith.constant 0 : i32
    return %c0_i32, %c0_i32_0 : i32, i32
  }
  func.func @transform_4(%arg0: i32) -> (i32, i32) {
    %c0_i32 = arith.constant 0 : i32
    %c0_i32_0 = arith.constant 0 : i32
    %c0_i32_1 = arith.constant 0 : i32
    return %c0_i32, %c0_i32_0 : i32, i32
  }
  func.func @transform_5(%arg0: i32) -> (i32, i32) {
    %c0_i32 = arith.constant 0 : i32
    %c0_i32_0 = arith.constant 0 : i32
    %c0_i32_1 = arith.constant 0 : i32
    return %c0_i32, %c0_i32_0 : i32, i32
  }
  func.func @transform_6(%arg0: i32) -> (i32, i32) {
    %c0_i32 = arith.constant 0 : i32
    %c0_i32_0 = arith.constant 0 : i32
    %c0_i32_1 = arith.constant 0 : i32
    return %c0_i32, %c0_i32_0 : i32, i32
  }
  func.func @transform_7(%arg0: i32) -> (i32, i32, i32, i32) {
    %c0_i32 = arith.constant 0 : i32
    %c0_i32_0 = arith.constant 0 : i32
    %c0_i32_1 = arith.constant 0 : i32
    %c0_i32_2 = arith.constant 0 : i32
    return %arg0, %c0_i32, %c0_i32_0, %c0_i32_1 : i32, i32, i32, i32
  }
  func.func @transform_8(%arg0: i32) -> (i32, i32, i32, i32) {
    %c0_i32 = arith.constant 0 : i32
    %c0_i32_0 = arith.constant 0 : i32
    %c0_i32_1 = arith.constant 0 : i32
    %c0_i32_2 = arith.constant 0 : i32
    return %arg0, %c0_i32, %c0_i32_0, %c0_i32_1 : i32, i32, i32, i32
  }
}

</mosaic_0001>

<llo_original>
// kernel: transformer_forward.4
$region0: #{transformer_forward.4}
  #allocation0 [shape = 'u32[]', space=smem, size = 0x4, offset = 0x4, fixed_abs, tag = 'smem constant byte address 0x4 - core index']
  #allocation1 [shape = 'u32[144,128]{1,0:T(1,128)}', space=vmem, size = 0x12000, scoped, tag = 'internal scratch']
  %s0 = inlined_call_operand.vmem [shape: f32[2,16,32], index: 0, kind: input, shape index: {}]
  %s1 = inlined_call_operand.vmem [shape: f32[1,32], index: 1, kind: input, shape index: {}]
  %s2 = inlined_call_operand.vmem [shape: f32[1,32], index: 2, kind: input, shape index: {}]
  %s3 = inlined_call_operand.vmem [shape: bf16[32,32], index: 3, kind: input, shape index: {}]
  %s4 = inlined_call_operand.vmem [shape: f32[1,32], index: 4, kind: input, shape index: {}]
  %s5 = inlined_call_operand.vmem [shape: bf16[32,32], index: 5, kind: input, shape index: {}]
  %s6 = inlined_call_operand.vmem [shape: f32[1,32], index: 6, kind: input, shape index: {}]
  %s7 = inlined_call_operand.vmem [shape: bf16[2,4,16,8], index: 7, kind: output, shape index: {0}]
  %s8 = inlined_call_operand.vmem [shape: bf16[2,4,16,8], index: 8, kind: output, shape index: {1}]
  %9 = xla_tuple %s7, %s8
  %s10 = sld [smem:[#allocation0]]
  $region69: #{transformer_forward.4} parent=0
    _
  %s12 = ssub.s32 1, %s10
  %s13 = scalar_select 0, %s12, %s10
  loop: start=0, step=1, limit=4
  $region2: #{transformer_forward.4} parent=0 // loop_pre_header
    _
  $region3: #{transformer_forward.4} parent=0 // loop_header
    %s15 = sphi 0, %s19
    %p16 = scmp.ge.s32.totalorder %s15, 4
    %s25 = sphi 0, %s27
    %s28 = sphi 0, %s25
    %s29 = sphi 0, %s28
    %s45 = sphi 0, %s29
    %s49 = sphi 0, %s49
    %s51 = sphi 0, %s49
    %s52 = sphi 0, %s51
    %s66 = sphi 0, %s52
    %s70 = sphi 0, %s70
    %s72 = sphi 0, %s70
    %s73 = sphi 0, %s72
    %s87 = sphi 0, %s73
    %s91 = sphi 0, %s91
    %s93 = sphi 0, %s91
    %s94 = sphi 0, %s93
    %s108 = sphi 0, %s94
    %s112 = sphi 0, %s112
    %s114 = sphi 0, %s112
    %s115 = sphi 0, %s114
    %s129 = sphi 0, %s115
    %s133 = sphi 0, %s133
    %s135 = sphi 0, %s133
    %s136 = sphi 0, %s135
    %s150 = sphi 0, %s136
    %s154 = sphi 0, %s154
    %s156 = sphi 0, %s154
    %s157 = sphi 0, %s156
    %s171 = sphi 0, %s157
    %s177 = sphi 0, %s179
    %s180 = sphi 0, %s177
    %s181 = sphi 0, %s180
    %s197 = sphi 0, %s181
    %s203 = sphi 0, %s205
    %s206 = sphi 0, %s203
    %s207 = sphi 0, %s206
    %s223 = sphi 0, %s207
  $region4: #{transformer_forward.4} parent=0 // loop_header_branch
    %18 = sbr.rel (%p16) target = $region8
  $region5: #{transformer_forward.4} parent=0 // loop_body
    %s20 = ssub.s32 %s15, 1
    %s21 = ssub.s32 %s15, 2
    %s22 = sadd.s32 %s15, 1
    %s23 = ssub.s32 %s15, %s22
    %p24 = scmp.eq.s32.totalorder %s23, 0
    %s26 = sadd.s32 %s25, 1
    %s27 = scalar_select %p24, %s25, %s26
    %p30 = pneg %p24
    %p31 = scmp.eq.s32.totalorder %s15, 1
    %p32 = por %p30, %p31
    %p33 = scmp.ne.s32.totalorder %s25, %s28
    %p34 = scmp.eq.s32.totalorder %s15, 0
    %p35 = por %p33, %p34
    %p36 = scmp.ne.s32.totalorder %s25, %s28
    %p37 = scmp.eq.s32.totalorder %s20, 1
    %p38 = por %p36, %p37
    %p39 = scmp.ne.s32.totalorder %s28, %s29
    %p40 = scmp.eq.s32.totalorder %s20, 0
    %p41 = por %p39, %p40
    %p42 = scmp.ne.s32.totalorder %s28, %s29
    %p43 = scmp.eq.s32.totalorder %s21, 1
    %p44 = por %p42, %p43
    %p46 = scmp.ne.s32.totalorder %s29, %s45
    %p47 = scmp.eq.s32.totalorder %s21, 0
    %p48 = por %p46, %p47
    %s50 = sadd.s32 %s49, 1
    %p53 = scmp.eq.s32.totalorder %s15, 1
    %p54 = scmp.ne.s32.totalorder %s49, %s51
    %p55 = scmp.eq.s32.totalorder %s15, 0
    %p56 = por %p54, %p55
    %p57 = scmp.ne.s32.totalorder %s49, %s51
    %p58 = scmp.eq.s32.totalorder %s20, 1
    %p59 = por %p57, %p58
    %p60 = scmp.ne.s32.totalorder %s51, %s52
    %p61 = scmp.eq.s32.totalorder %s20, 0
    %p62 = por %p60, %p61
    %p63 = scmp.ne.s32.totalorder %s51, %s52
    %p64 = scmp.eq.s32.totalorder %s21, 1
    %p65 = por %p63, %p64
    %p67 = scmp.ne.s32.totalorder %s52, %s66
    %p68 = scmp.eq.s32.totalorder %s21, 0
    %p69 = por %p67, %p68
    %s71 = sadd.s32 %s70, 1
    %p74 = scmp.eq.s32.totalorder %s15, 1
    %p75 = scmp.ne.s32.totalorder %s70, %s72
    %p76 = scmp.eq.s32.totalorder %s15, 0
    %p77 = por %p75, %p76
    %p78 = scmp.ne.s32.totalorder %s70, %s72
    %p79 = scmp.eq.s32.totalorder %s20, 1
    %p80 = por %p78, %p79
    %p81 = scmp.ne.s32.totalorder %s72, %s73
    %p82 = scmp.eq.s32.totalorder %s20, 0
    %p83 = por %p81, %p82
    %p84 = scmp.ne.s32.totalorder %s72, %s73
    %p85 = scmp.eq.s32.totalorder %s21, 1
    %p86 = por %p84, %p85
    %p88 = scmp.ne.s32.totalorder %s73, %s87
    %p89 = scmp.eq.s32.totalorder %s21, 0
    %p90 = por %p88, %p89
    %s92 = sadd.s32 %s91, 1
    %p95 = scmp.eq.s32.totalorder %s15, 1
    %p96 = scmp.ne.s32.totalorder %s91, %s93
    %p97 = scmp.eq.s32.totalorder %s15, 0
    %p98 = por %p96, %p97
    %p99 = scmp.ne.s32.totalorder %s91, %s93
    %p100 = scmp.eq.s32.totalorder %s20, 1
    %p101 = por %p99, %p100
    %p102 = scmp.ne.s32.totalorder %s93, %s94
    %p103 = scmp.eq.s32.totalorder %s20, 0
    %p104 = por %p102, %p103
    %p105 = scmp.ne.s32.totalorder %s93, %s94
    %p106 = scmp.eq.s32.totalorder %s21, 1
    %p107 = por %p105, %p106
    %p109 = scmp.ne.s32.totalorder %s94, %s108
    %p110 = scmp.eq.s32.totalorder %s21, 0
    %p111 = por %p109, %p110
    %s113 = sadd.s32 %s112, 1
    %p116 = scmp.eq.s32.totalorder %s15, 1
    %p117 = scmp.ne.s32.totalorder %s112, %s114
    %p118 = scmp.eq.s32.totalorder %s15, 0
    %p119 = por %p117, %p118
    %p120 = scmp.ne.s32.totalorder %s112, %s114
    %p121 = scmp.eq.s32.totalorder %s20, 1
    %p122 = por %p120, %p121
    %p123 = scmp.ne.s32.totalorder %s114, %s115
    %p124 = scmp.eq.s32.totalorder %s20, 0
    %p125 = por %p123, %p124
    %p126 = scmp.ne.s32.totalorder %s114, %s115
    %p127 = scmp.eq.s32.totalorder %s21, 1
    %p128 = por %p126, %p127
    %p130 = scmp.ne.s32.totalorder %s115, %s129
    %p131 = scmp.eq.s32.totalorder %s21, 0
    %p132 = por %p130, %p131
    %s134 = sadd.s32 %s133, 1
    %p137 = scmp.eq.s32.totalorder %s15, 1
    %p138 = scmp.ne.s32.totalorder %s133, %s135
    %p139 = scmp.eq.s32.totalorder %s15, 0
    %p140 = por %p138, %p139
    %p141 = scmp.ne.s32.totalorder %s133, %s135
    %p142 = scmp.eq.s32.totalorder %s20, 1
    %p143 = por %p141, %p142
    %p144 = scmp.ne.s32.totalorder %s135, %s136
    %p145 = scmp.eq.s32.totalorder %s20, 0
    %p146 = por %p144, %p145
    %p147 = scmp.ne.s32.totalorder %s135, %s136
    %p148 = scmp.eq.s32.totalorder %s21, 1
    %p149 = por %p147, %p148
    %p151 = scmp.ne.s32.totalorder %s136, %s150
    %p152 = scmp.eq.s32.totalorder %s21, 0
    %p153 = por %p151, %p152
    %s155 = sadd.s32 %s154, 1
    %p158 = scmp.eq.s32.totalorder %s15, 1
    %p159 = scmp.ne.s32.totalorder %s154, %s156
    %p160 = scmp.eq.s32.totalorder %s15, 0
    %p161 = por %p159, %p160
    %p162 = scmp.ne.s32.totalorder %s154, %s156
    %p163 = scmp.eq.s32.totalorder %s20, 1
    %p164 = por %p162, %p163
    %p165 = scmp.ne.s32.totalorder %s156, %s157
    %p166 = scmp.eq.s32.totalorder %s20, 0
    %p167 = por %p165, %p166
    %p168 = scmp.ne.s32.totalorder %s156, %s157
    %p169 = scmp.eq.s32.totalorder %s21, 1
    %p170 = por %p168, %p169
    %p172 = scmp.ne.s32.totalorder %s157, %s171
    %p173 = scmp.eq.s32.totalorder %s21, 0
    %p174 = por %p172, %p173
    %s175 = ssub.s32 %s15, %s22
    %p176 = scmp.eq.s32.totalorder %s175, 0
    %s178 = sadd.s32 %s177, 1
    %s179 = scalar_select %p176, %s177, %s178
    %p182 = pneg %p176
    %p183 = scmp.eq.s32.totalorder %s15, 1
    %p184 = por %p182, %p183
    %p185 = scmp.ne.s32.totalorder %s177, %s180
    %p186 = scmp.eq.s32.totalorder %s15, 0
    %p187 = por %p185, %p186
    %p188 = scmp.ne.s32.totalorder %s177, %s180
    %p189 = scmp.eq.s32.totalorder %s20, 1
    %p190 = por %p188, %p189
    %p191 = scmp.ne.s32.totalorder %s180, %s181
    %p192 = scmp.eq.s32.totalorder %s20, 0
    %p193 = por %p191, %p192
    %p194 = scmp.ne.s32.totalorder %s180, %s181
    %p195 = scmp.eq.s32.totalorder %s21, 1
    %p196 = por %p194, %p195
    %p198 = scmp.ne.s32.totalorder %s181, %s197
    %p199 = scmp.eq.s32.totalorder %s21, 0
    %p200 = por %p198, %p199
    %s201 = ssub.s32 %s15, %s22
    %p202 = scmp.eq.s32.totalorder %s201, 0
    %s204 = sadd.s32 %s203, 1
    %s205 = scalar_select %p202, %s203, %s204
    %p208 = pneg %p202
    %p209 = scmp.eq.s32.totalorder %s15, 1
    %p210 = por %p208, %p209
    %p211 = scmp.ne.s32.totalorder %s203, %s206
    %p212 = scmp.eq.s32.totalorder %s15, 0
    %p213 = por %p211, %p212
    %p214 = scmp.ne.s32.totalorder %s203, %s206
    %p215 = scmp.eq.s32.totalorder %s20, 1
    %p216 = por %p214, %p215
    %p217 = scmp.ne.s32.totalorder %s206, %s207
    %p218 = scmp.eq.s32.totalorder %s20, 0
    %p219 = por %p217, %p218
    %p220 = scmp.ne.s32.totalorder %s206, %s207
    %p221 = scmp.eq.s32.totalorder %s21, 1
    %p222 = por %p220, %p221
    %p224 = scmp.ne.s32.totalorder %s207, %s223
    %p225 = scmp.eq.s32.totalorder %s21, 0
    %p226 = por %p224, %p225
    %p227 = scmp.le.s32.totalorder 1, %s15
    %p228 = scmp.lt.s32.totalorder %s15, 3
    %p229 = pnand %p227, %p228
    %p230 = pneg %p229
    // Predicated region
    $region9: #{transformer_forward.4} parent=5 // pred_check
      _
    $region10: #{transformer_forward.4} parent=5 // pred_check_branch
      %232 = sbr.rel (%p229) target = $region12
    $region11: #{transformer_forward.4} parent=5 // pred_region
      %s233 = ssub.s32 %s15, 1
      // Predicated region
      $region13: #{transformer_forward.4} parent=11 // pred_check
        %p234 = pneg %p62
      $region14: #{transformer_forward.4} parent=11 // pred_check_branch
        %236 = sbr.rel (%p234) target = $region16
      $region15: #{transformer_forward.4} parent=11 // pred_region
        _
      $region16: #{transformer_forward.4} parent=11 // pred_fallthru
        _
      // Predicated region
      $region17: #{transformer_forward.4} parent=11 // pred_check
        %p237 = pneg %p83
      $region18: #{transformer_forward.4} parent=11 // pred_check_branch
        %239 = sbr.rel (%p237) target = $region20
      $region19: #{transformer_forward.4} parent=11 // pred_region
        _
      $region20: #{transformer_forward.4} parent=11 // pred_fallthru
        _
      // Predicated region
      $region21: #{transformer_forward.4} parent=11 // pred_check
        %p240 = pneg %p104
      $region22: #{transformer_forward.4} parent=11 // pred_check_branch
        %242 = sbr.rel (%p240) target = $region24
      $region23: #{transformer_forward.4} parent=11 // pred_region
        _
      $region24: #{transformer_forward.4} parent=11 // pred_fallthru
        _
      // Predicated region
      $region25: #{transformer_forward.4} parent=11 // pred_check
        %p243 = pneg %p125
      $region26: #{transformer_forward.4} parent=11 // pred_check_branch
        %245 = sbr.rel (%p243) target = $region28
      $region27: #{transformer_forward.4} parent=11 // pred_region
        _
      $region28: #{transformer_forward.4} parent=11 // pred_fallthru
        _
      // Predicated region
      $region29: #{transformer_forward.4} parent=11 // pred_check
        %p246 = pneg %p146
      $region30: #{transformer_forward.4} parent=11 // pred_check_branch
        %248 = sbr.rel (%p246) target = $region32
      $region31: #{transformer_forward.4} parent=11 // pred_region
        _
      $region32: #{transformer_forward.4} parent=11 // pred_fallthru
        _
      // Predicated region
      $region33: #{transformer_forward.4} parent=11 // pred_check
        %p249 = pneg %p167
      $region34: #{transformer_forward.4} parent=11 // pred_check_branch
        %251 = sbr.rel (%p249) target = $region36
      $region35: #{transformer_forward.4} parent=11 // pred_region
        _
      $region36: #{transformer_forward.4} parent=11 // pred_fallthru
        _
    $region12: #{transformer_forward.4} parent=5 // pred_fallthru
      _
    %p252 = scmp.lt.s32.totalorder %s15, 2
    // Predicated region
    $region37: #{transformer_forward.4} parent=5 // pred_check
      %p253 = pneg %p252
    $region38: #{transformer_forward.4} parent=5 // pred_check_branch
      %255 = sbr.rel (%p253) target = $region40
    $region39: #{transformer_forward.4} parent=5 // pred_region
      // Predicated region
      $region41: #{transformer_forward.4} parent=39 // pred_check
        %p256 = pneg %p35
      $region42: #{transformer_forward.4} parent=39 // pred_check_branch
        %258 = sbr.rel (%p256) target = $region44
      $region43: #{transformer_forward.4} parent=39 // pred_region
        %p259 = scmp.lt.s32.totalorder %s15, 1
        %s260 = scalar_select %p259, %s15, 1
        %s261 = smul.addr %s260, 2
        %s262 = smul.addr %s261, 8
        %s263 = scalar_lea.vmem %s0, %s262
      $region44: #{transformer_forward.4} parent=39 // pred_fallthru
        _
    $region40: #{transformer_forward.4} parent=5 // pred_fallthru
      _
    %p264 = scmp.le.s32.totalorder 1, %s15
    %p265 = scmp.lt.s32.totalorder %s15, 3
    %p266 = pnand %p264, %p265
    %p267 = pneg %p266
    // Predicated region
    $region45: #{transformer_forward.4} parent=5 // pred_check
      _
    $region46: #{transformer_forward.4} parent=5 // pred_check_branch
      %269 = sbr.rel (%p266) target = $region48
    $region47: #{transformer_forward.4} parent=5 // pred_region
      %s270 = ssub.s32 %s15, 1
      %p271 = scmp.lt.s32.totalorder %s20, 1
      %s272 = scalar_select %p271, %s20, 1
      %s273 = smul.addr %s272, 2
      %s274 = smul.addr %s273, 8
      %s275 = scalar_lea.vmem %s0, %s274
      %p276 = pneg %p41
      %p277 = pneg %p38
      %p278 = pneg %p62
      %p279 = pneg %p59
      %p280 = pneg %p83
      %p281 = pneg %p80
      %p282 = pneg %p104
      %p283 = pneg %p101
      %p284 = pneg %p125
      %p285 = pneg %p122
      %p286 = pneg %p146
      %p287 = pneg %p143
      %p288 = pneg %p167
      %p289 = pneg %p164
      %p290 = pneg %p193
      %p291 = pneg %p190
      %p292 = scmp.lt.s32.totalorder %s20, 1
      %s293 = scalar_select %p292, %s20, 1
      %s294 = smul.addr %s293, 8
      %s295 = smul.addr %s294, 4
      %s296 = scalar_lea.vmem %s7, %s295
      %p297 = pneg %p219
      %p298 = pneg %p216
      %p299 = scmp.lt.s32.totalorder %s20, 1
      %s300 = scalar_select %p299, %s20, 1
      %s301 = smul.addr %s300, 8
      %s302 = smul.addr %s301, 4
      %s303 = scalar_lea.vmem %s8, %s302
      %p304 = scmp.lt.s32.totalorder %s20, 1
      %s305 = scalar_select %p304, %s20, 1
      %s306 = smul.addr %s305, 2
      %s307 = smul.addr %s306, 8
      %s308 = scalar_lea.vmem %s0, %s307
      %p309 = scmp.lt.s32.totalorder %s20, 1
      %s310 = scalar_select %p309, %s20, 1
      %s311 = smul.addr %s310, 8
      %s312 = smul.addr %s311, 4
      %s313 = scalar_lea.vmem %s7, %s312
      %p314 = scmp.lt.s32.totalorder %s20, 1
      %s315 = scalar_select %p314, %s20, 1
      %s316 = smul.addr %s315, 8
      %s317 = smul.addr %s316, 4
      %s318 = scalar_lea.vmem %s8, %s317
      %v320 = vld [vmem:[%s308] sm:$0xff]
      %v321 = vld [vmem:[%s308 + $0x8] sm:$0xff]
      %v322 = vld [vmem:[%s1] sm:$0x1]
      %v323 = vld [vmem:[%s2] sm:$0x1]
      %vm324 = vcmask 261120
      %v325 = vsel %vm324, %v320, 0.0
      %326 = vadd.xlane.f32.xlu0 %v325
      %v327 = vpop.xlane.xlu0 %326
      %v328 = vsel %vm324, %v321, 0.0
      %329 = vadd.xlane.f32.xlu0 %v328
      %v330 = vpop.xlane.xlu0 %329
      %v331 = vrcp.pop 32.0
      %v332 = vmul.f32 %v327, %v331
      %v333 = vmul.f32 %v330, %v331
      %v334 = vsub.f32 %v320, %v332
      %v335 = vsub.f32 %v321, %v333
      %v336 = vmul.f32 %v334, %v334
      %v337 = vmul.f32 %v335, %v335
      %v338 = vsel %vm324, %v336, 0.0
      %339 = vadd.xlane.f32.xlu0 %v338
      %v340 = vpop.xlane.xlu0 %339
      %v341 = vsel %vm324, %v337, 0.0
      %342 = vadd.xlane.f32.xlu0 %v341
      %v343 = vpop.xlane.xlu0 %342
      %v344 = vmul.f32 %v340, %v331
      %v345 = vmul.f32 %v343, %v331
      %v346 = vadd.f32 %v344, 1e-05
      %v347 = vadd.f32 %v345, 1e-05
      %v348 = vrsqrt.pop %v346
      %v349 = vrsqrt.pop %v347
      %v350 = vmul.f32 %v334, %v348
      %v351 = vmul.f32 %v335, %v349
      %v353 = vlaneseq
      %v354 = vshrl.u32 %v353, 7
      %v355 = vsub.s32 0, %v354
      %v356 = vrot.slane %v322, %v355
      %v358 = vmul.f32 %v350, %v356
      %v359 = vmul.f32 %v351, %v356
      %v361 = vlaneseq
      %v362 = vshrl.u32 %v361, 7
      %v363 = vsub.s32 0, %v362
      %v364 = vrot.slane %v323, %v363
      %v366 = vadd.f32 %v358, %v364
      %v367 = vadd.f32 %v359, %v364
      %v368 = vpack.c.bf16 %v367, %v366
      %v369 = vld [vmem:[%s3] sm:$0xf]
      %v370 = vld [vmem:[%s3 + $0x4] sm:$0xf]
      %v371 = vld [vmem:[%s3 + $0x8] sm:$0xf]
      %v372 = vld [vmem:[%s3 + $0xc] sm:$0xf]
      %v373 = vld [vmem:[%s4] sm:$0x1]
      %v375 = vlaneseq
      %v376 = vshrl.u32 %v375, 7
      %v377 = vsub.s32 0, %v376
      %v378 = vrot.slane %v373, %v377
      %v384 = vunpack.c.l.b16 %v369
      %v385 = vunpack.c.l.b16 %v370
      %v386 = vunpack.c.l.b16 %v371
      %v387 = vunpack.c.l.b16 %v372
      %v388 = vpack.c.b16 %v385, %v384
      %v389 = vpack.c.b16 %v387, %v386
      %v393 = vsel %vm324, %v368, 0
      %395 = vmatprep.subr.bf16.mxu0 0
      %396 = vmatpush1.bf16.msra.mxu0 %v388
      %397 = vmatprep.subr.bf16.mxu0 0
      %398 = vmatpush1.bf16.msra.mxu0 %v389
      %399 = vmatprep.subr.bf16.mxu0 0
      %400 = vmatpush1.bf16.msra.mxu0 0
      %401 = vmatprep.subr.bf16.mxu0 0
      %402 = vmatpush1.bf16.msra.mxu0 0
      %403 = vmatprep.subr.bf16.mxu0 0
      %404 = vmatpush1.bf16.msra.mxu0 0
      %405 = vmatprep.subr.bf16.mxu0 0
      %406 = vmatpush1.bf16.msra.mxu0 0
      %407 = vmatprep.subr.bf16.mxu0 0
      %408 = vmatpush1.bf16.msra.mxu0 0
      %409 = vmatprep.subr.bf16.mxu0 0
      %410 = vmatpush1.bf16.msra.mxu0 0
      %411 = vmatprep.subr.bf16.mxu0 0
      %412 = vmatpush1.bf16.msra.mxu0 0
      %413 = vmatprep.subr.bf16.mxu0 0
      %414 = vmatpush1.bf16.msra.mxu0 0
      %415 = vmatprep.subr.bf16.mxu0 0
      %416 = vmatpush1.bf16.msra.mxu0 0
      %417 = vmatprep.subr.bf16.mxu0 0
      %418 = vmatpush1.bf16.msra.mxu0 0
      %419 = vmatprep.subr.bf16.mxu0 0
      %420 = vmatpush1.bf16.msra.mxu0 0
      %421 = vmatprep.subr.bf16.mxu0 0
      %422 = vmatpush1.bf16.msra.mxu0 0
      %423 = vmatprep.subr.bf16.mxu0 0
      %424 = vmatpush1.bf16.msra.mxu0 0
      %425 = vmatprep.subr.bf16.mxu0 0
      %426 = vmatpush1.bf16.msra.mxu0 0
      %427 = vmatprep.mubr.bf16.mxu0 0
      %428 = vmatmul.mubr.bf16.gmra.mrb[0].mxu0 %v393
      %v429 = vpop.f32.mrb[0].mxu0
      %v430 = vadd.f32 %v378, %v429
      %v431 = vpop.f32.mrb[0].mxu0
      %v432 = vpop.f32.mrb[0].mxu0
      %v433 = vadd.f32 %v378, %v432
      %v434 = vpop.f32.mrb[0].mxu0
      %435 = vdwg.mxu0
      %438 = vrot.lane.b32.xlu0 %v430, 120
      %v439 = vpop.permute.xlu0 %438
      %440 = vrot.lane.b32.xlu0 %v433, 120
      %v441 = vpop.permute.xlu0 %440
      %444 = vrot.lane.b32.xlu0 %v430, 112
      %v445 = vpop.permute.xlu0 %444
      %446 = vrot.lane.b32.xlu0 %v433, 112
      %v447 = vpop.permute.xlu0 %446
      %450 = vrot.lane.b32.xlu0 %v430, 104
      %v451 = vpop.permute.xlu0 %450
      %452 = vrot.lane.b32.xlu0 %v433, 104
      %v453 = vpop.permute.xlu0 %452
      %v456 = vcombine.low %v430, %v445
      %v457 = vcombine.high %v430, %v445
      %v459 = vunpack.c.l.s4 1983009808
      %v460 = vunpack.c.0.s8 %v459
      %v461 = vlaneseq
      %v462 = vshrl.u32 %v461, 7
      %v463 = vsub.s32 %v460, %v462
      %v464 = vrot.slane %v456, %v463
      %v466 = vunpack.c.l.s4 1983009808
      %v467 = vunpack.c.0.s8 %v466
      %v468 = vlaneseq
      %v469 = vshrl.u32 %v468, 7
      %v470 = vsub.s32 %v467, %v469
      %v471 = vrot.slane %v457, %v470
      %v472 = vcombine.low %v439, %v451
      %v473 = vcombine.high %v439, %v451
      %v475 = vunpack.c.l.s4 1983009808
      %v476 = vunpack.c.0.s8 %v475
      %v477 = vlaneseq
      %v478 = vshrl.u32 %v477, 7
      %v479 = vsub.s32 %v476, %v478
      %v480 = vrot.slane %v472, %v479
      %v482 = vunpack.c.l.s4 1983009808
      %v483 = vunpack.c.0.s8 %v482
      %v484 = vlaneseq
      %v485 = vshrl.u32 %v484, 7
      %v486 = vsub.s32 %v483, %v485
      %v487 = vrot.slane %v473, %v486
      %v488 = vcombine.low %v464, %v480
      %v489 = vcombine.high %v464, %v480
      %v491 = vunpack.c.l.s4 1934713408
      %v492 = vunpack.c.0.s8 %v491
      %v493 = vlaneseq
      %v494 = vshrl.u32 %v493, 7
      %v495 = vsub.s32 %v492, %v494
      %v496 = vrot.slane %v488, %v495
      %v498 = vunpack.c.l.s4 1934713408
      %v499 = vunpack.c.0.s8 %v498
      %v500 = vlaneseq
      %v501 = vshrl.u32 %v500, 7
      %v502 = vsub.s32 %v499, %v501
      %v503 = vrot.slane %v489, %v502
      %v504 = vcombine.low %v471, %v487
      %v505 = vcombine.high %v471, %v487
      %v507 = vunpack.c.l.s4 1934713408
      %v508 = vunpack.c.0.s8 %v507
      %v509 = vlaneseq
      %v510 = vshrl.u32 %v509, 7
      %v511 = vsub.s32 %v508, %v510
      %v512 = vrot.slane %v504, %v511
      %v514 = vunpack.c.l.s4 1934713408
      %v515 = vunpack.c.0.s8 %v514
      %v516 = vlaneseq
      %v517 = vshrl.u32 %v516, 7
      %v518 = vsub.s32 %v515, %v517
      %v519 = vrot.slane %v505, %v518
      %v520 = vcombine.high %v496, 0.0
      %v521 = vcombine.high %v503, 0.0
      %v522 = vcombine.high %v512, 0.0
      %v523 = vcombine.high %v519, 0.0
      %v524 = vcombine.low %v433, %v447
      %v525 = vcombine.high %v433, %v447
      %v527 = vunpack.c.l.s4 1983009808
      %v528 = vunpack.c.0.s8 %v527
      %v529 = vlaneseq
      %v530 = vshrl.u32 %v529, 7
      %v531 = vsub.s32 %v528, %v530
      %v532 = vrot.slane %v524, %v531
      %v534 = vunpack.c.l.s4 1983009808
      %v535 = vunpack.c.0.s8 %v534
      %v536 = vlaneseq
      %v537 = vshrl.u32 %v536, 7
      %v538 = vsub.s32 %v535, %v537
      %v539 = vrot.slane %v525, %v538
      %v540 = vcombine.low %v441, %v453
      %v541 = vcombine.high %v441, %v453
      %v543 = vunpack.c.l.s4 1983009808
      %v544 = vunpack.c.0.s8 %v543
      %v545 = vlaneseq
      %v546 = vshrl.u32 %v545, 7
      %v547 = vsub.s32 %v544, %v546
      %v548 = vrot.slane %v540, %v547
      %v550 = vunpack.c.l.s4 1983009808
      %v551 = vunpack.c.0.s8 %v550
      %v552 = vlaneseq
      %v553 = vshrl.u32 %v552, 7
      %v554 = vsub.s32 %v551, %v553
      %v555 = vrot.slane %v541, %v554
      %v556 = vcombine.low %v532, %v548
      %v557 = vcombine.high %v532, %v548
      %v559 = vunpack.c.l.s4 1934713408
      %v560 = vunpack.c.0.s8 %v559
      %v561 = vlaneseq
      %v562 = vshrl.u32 %v561, 7
      %v563 = vsub.s32 %v560, %v562
      %v564 = vrot.slane %v556, %v563
      %v566 = vunpack.c.l.s4 1934713408
      %v567 = vunpack.c.0.s8 %v566
      %v568 = vlaneseq
      %v569 = vshrl.u32 %v568, 7
      %v570 = vsub.s32 %v567, %v569
      %v571 = vrot.slane %v557, %v570
      %v572 = vcombine.low %v539, %v555
      %v573 = vcombine.high %v539, %v555
      %v575 = vunpack.c.l.s4 1934713408
      %v576 = vunpack.c.0.s8 %v575
      %v577 = vlaneseq
      %v578 = vshrl.u32 %v577, 7
      %v579 = vsub.s32 %v576, %v578
      %v580 = vrot.slane %v572, %v579
      %v582 = vunpack.c.l.s4 1934713408
      %v583 = vunpack.c.0.s8 %v582
      %v584 = vlaneseq
      %v585 = vshrl.u32 %v584, 7
      %v586 = vsub.s32 %v583, %v585
      %v587 = vrot.slane %v573, %v586
      %v588 = vcombine.high %v564, 0.0
      %v589 = vcombine.high %v571, 0.0
      %v590 = vcombine.high %v580, 0.0
      %v591 = vcombine.high %v587, 0.0
      %v592 = vcombine.low %v496, %v503
      %v594 = vunpack.c.l.s4 1983009808
      %v595 = vunpack.c.0.s8 %v594
      %v596 = vlaneseq
      %v597 = vshrl.u32 %v596, 7
      %v598 = vsub.s32 %v595, %v597
      %v599 = vrot.slane %v592, %v598
      %v600 = vcombine.low %v520, %v521
      %v602 = vunpack.c.l.s4 1983009808
      %v603 = vunpack.c.0.s8 %v602
      %v604 = vlaneseq
      %v605 = vshrl.u32 %v604, 7
      %v606 = vsub.s32 %v603, %v605
      %v607 = vrot.slane %v600, %v606
      %v608 = vcombine.low %v512, %v519
      %v610 = vunpack.c.l.s4 1983009808
      %v611 = vunpack.c.0.s8 %v610
      %v612 = vlaneseq
      %v613 = vshrl.u32 %v612, 7
      %v614 = vsub.s32 %v611, %v613
      %v615 = vrot.slane %v608, %v614
      %v616 = vcombine.low %v522, %v523
      %v618 = vunpack.c.l.s4 1983009808
      %v619 = vunpack.c.0.s8 %v618
      %v620 = vlaneseq
      %v621 = vshrl.u32 %v620, 7
      %v622 = vsub.s32 %v619, %v621
      %v623 = vrot.slane %v616, %v622
      %v624 = vcombine.low %v599, %v607
      %v625 = vcombine.high %v599, %v607
      %v627 = vunpack.c.l.s4 1934713408
      %v628 = vunpack.c.0.s8 %v627
      %v629 = vlaneseq
      %v630 = vshrl.u32 %v629, 7
      %v631 = vsub.s32 %v628, %v630
      %v632 = vrot.slane %v624, %v631
      %v634 = vunpack.c.l.s4 1934713408
      %v635 = vunpack.c.0.s8 %v634
      %v636 = vlaneseq
      %v637 = vshrl.u32 %v636, 7
      %v638 = vsub.s32 %v635, %v637
      %v639 = vrot.slane %v625, %v638
      %v640 = vcombine.low %v615, %v623
      %v641 = vcombine.high %v615, %v623
      %v643 = vunpack.c.l.s4 1934713408
      %v644 = vunpack.c.0.s8 %v643
      %v645 = vlaneseq
      %v646 = vshrl.u32 %v645, 7
      %v647 = vsub.s32 %v644, %v646
      %v648 = vrot.slane %v640, %v647
      %v650 = vunpack.c.l.s4 1934713408
      %v651 = vunpack.c.0.s8 %v650
      %v652 = vlaneseq
      %v653 = vshrl.u32 %v652, 7
      %v654 = vsub.s32 %v651, %v653
      %v655 = vrot.slane %v641, %v654
      %v656 = vcombine.low %v632, %v648
      %v657 = vcombine.high %v632, %v648
      %v658 = vcombine.low %v639, %v655
      %v659 = vcombine.high %v639, %v655
      %v660 = vcombine.low %v564, %v571
      %v662 = vunpack.c.l.s4 1983009808
      %v663 = vunpack.c.0.s8 %v662
      %v664 = vlaneseq
      %v665 = vshrl.u32 %v664, 7
      %v666 = vsub.s32 %v663, %v665
      %v667 = vrot.slane %v660, %v666
      %v668 = vcombine.low %v588, %v589
      %v670 = vunpack.c.l.s4 1983009808
      %v671 = vunpack.c.0.s8 %v670
      %v672 = vlaneseq
      %v673 = vshrl.u32 %v672, 7
      %v674 = vsub.s32 %v671, %v673
      %v675 = vrot.slane %v668, %v674
      %v676 = vcombine.low %v580, %v587
      %v678 = vunpack.c.l.s4 1983009808
      %v679 = vunpack.c.0.s8 %v678
      %v680 = vlaneseq
      %v681 = vshrl.u32 %v680, 7
      %v682 = vsub.s32 %v679, %v681
      %v683 = vrot.slane %v676, %v682
      %v684 = vcombine.low %v590, %v591
      %v686 = vunpack.c.l.s4 1983009808
      %v687 = vunpack.c.0.s8 %v686
      %v688 = vlaneseq
      %v689 = vshrl.u32 %v688, 7
      %v690 = vsub.s32 %v687, %v689
      %v691 = vrot.slane %v684, %v690
      %v692 = vcombine.low %v667, %v675
      %v693 = vcombine.high %v667, %v675
      %v695 = vunpack.c.l.s4 1934713408
      %v696 = vunpack.c.0.s8 %v695
      %v697 = vlaneseq
      %v698 = vshrl.u32 %v697, 7
      %v699 = vsub.s32 %v696, %v698
      %v700 = vrot.slane %v692, %v699
      %v702 = vunpack.c.l.s4 1934713408
      %v703 = vunpack.c.0.s8 %v702
      %v704 = vlaneseq
      %v705 = vshrl.u32 %v704, 7
      %v706 = vsub.s32 %v703, %v705
      %v707 = vrot.slane %v693, %v706
      %v708 = vcombine.low %v683, %v691
      %v709 = vcombine.high %v683, %v691
      %v711 = vunpack.c.l.s4 1934713408
      %v712 = vunpack.c.0.s8 %v711
      %v713 = vlaneseq
      %v714 = vshrl.u32 %v713, 7
      %v715 = vsub.s32 %v712, %v714
      %v716 = vrot.slane %v708, %v715
      %v718 = vunpack.c.l.s4 1934713408
      %v719 = vunpack.c.0.s8 %v718
      %v720 = vlaneseq
      %v721 = vshrl.u32 %v720, 7
      %v722 = vsub.s32 %v719, %v721
      %v723 = vrot.slane %v709, %v722
      %v724 = vcombine.low %v700, %v716
      %v725 = vcombine.high %v700, %v716
      %v726 = vcombine.low %v707, %v723
      %v727 = vcombine.high %v707, %v723
      %v728 = vpack.c.bf16 %v724, %v656
      %v729 = vpack.c.bf16 %v725, %v657
      %v730 = vpack.c.bf16 %v726, %v658
      %v731 = vpack.c.bf16 %v727, %v659
      %v736 = vunpack.c.l.b16 %v728
      %v737 = vunpack.c.h.b16 %v728
      %v738 = vunpack.c.l.b16 %v729
      %v739 = vunpack.c.h.b16 %v729
      %v740 = vunpack.c.l.b16 %v730
      %v741 = vunpack.c.h.b16 %v730
      %v742 = vunpack.c.l.b16 %v731
      %v743 = vunpack.c.h.b16 %v731
      %v744 = vpack.c.b16 %v736, %v736
      %v745 = vpack.c.b16 %v737, %v737
      %v746 = vpack.c.b16 %v738, %v738
      %v747 = vpack.c.b16 %v739, %v739
      %v748 = vpack.c.b16 %v740, %v740
      %v749 = vpack.c.b16 %v741, %v741
      %v750 = vpack.c.b16 %v742, %v742
      %v751 = vpack.c.b16 %v743, %v743
      %vm760 = vcmask 60416
      %761 = vst.msk [vmem:[%s313] sm:$0xf] %vm760, %v744
      %762 = vst.msk [vmem:[%s313 + $0x4] sm:$0xf] %vm760, %v745
      %763 = vst.msk [vmem:[%s313 + $0x8] sm:$0xf] %vm760, %v746
      %764 = vst.msk [vmem:[%s313 + $0xc] sm:$0xf] %vm760, %v747
      %765 = vst.msk [vmem:[%s313 + $0x10] sm:$0xf] %vm760, %v748
      %766 = vst.msk [vmem:[%s313 + $0x14] sm:$0xf] %vm760, %v749
      %767 = vst.msk [vmem:[%s313 + $0x18] sm:$0xf] %vm760, %v750
      %768 = vst.msk [vmem:[%s313 + $0x1c] sm:$0xf] %vm760, %v751
      %v769 = vld [vmem:[%s5] sm:$0xf]
      %v770 = vld [vmem:[%s5 + $0x4] sm:$0xf]
      %v771 = vld [vmem:[%s5 + $0x8] sm:$0xf]
      %v772 = vld [vmem:[%s5 + $0xc] sm:$0xf]
      %v773 = vld [vmem:[%s6] sm:$0x1]
      %v775 = vlaneseq
      %v776 = vshrl.u32 %v775, 7
      %v777 = vsub.s32 0, %v776
      %v778 = vrot.slane %v773, %v777
      %v784 = vunpack.c.l.b16 %v769
      %v785 = vunpack.c.l.b16 %v770
      %v786 = vunpack.c.l.b16 %v771
      %v787 = vunpack.c.l.b16 %v772
      %v788 = vpack.c.b16 %v785, %v784
      %v789 = vpack.c.b16 %v787, %v786
      %792 = vmatprep.subr.bf16.mxu0 0
      %793 = vmatpush1.bf16.msra.mxu0 %v788
      %794 = vmatprep.subr.bf16.mxu0 0
      %795 = vmatpush1.bf16.msra.mxu0 %v789
      %796 = vmatprep.subr.bf16.mxu0 0
      %797 = vmatpush1.bf16.msra.mxu0 0
      %798 = vmatprep.subr.bf16.mxu0 0
      %799 = vmatpush1.bf16.msra.mxu0 0
      %800 = vmatprep.subr.bf16.mxu0 0
      %801 = vmatpush1.bf16.msra.mxu0 0
      %802 = vmatprep.subr.bf16.mxu0 0
      %803 = vmatpush1.bf16.msra.mxu0 0
      %804 = vmatprep.subr.bf16.mxu0 0
      %805 = vmatpush1.bf16.msra.mxu0 0
      %806 = vmatprep.subr.bf16.mxu0 0
      %807 = vmatpush1.bf16.msra.mxu0 0
      %808 = vmatprep.subr.bf16.mxu0 0
      %809 = vmatpush1.bf16.msra.mxu0 0
      %810 = vmatprep.subr.bf16.mxu0 0
      %811 = vmatpush1.bf16.msra.mxu0 0
      %812 = vmatprep.subr.bf16.mxu0 0
      %813 = vmatpush1.bf16.msra.mxu0 0
      %814 = vmatprep.subr.bf16.mxu0 0
      %815 = vmatpush1.bf16.msra.mxu0 0
      %816 = vmatprep.subr.bf16.mxu0 0
      %817 = vmatpush1.bf16.msra.mxu0 0
      %818 = vmatprep.subr.bf16.mxu0 0
      %819 = vmatpush1.bf16.msra.mxu0 0
      %820 = vmatprep.subr.bf16.mxu0 0
      %821 = vmatpush1.bf16.msra.mxu0 0
      %822 = vmatprep.subr.bf16.mxu0 0
      %823 = vmatpush1.bf16.msra.mxu0 0
      %824 = vmatprep.mubr.bf16.mxu0 0
      %825 = vmatmul.mubr.bf16.gmra.mrb[0].mxu0 %v393
      %v826 = vpop.f32.mrb[0].mxu0
      %v827 = vadd.f32 %v778, %v826
      %v828 = vpop.f32.mrb[0].mxu0
      %v829 = vpop.f32.mrb[0].mxu0
      %v830 = vadd.f32 %v778, %v829
      %v831 = vpop.f32.mrb[0].mxu0
      %832 = vdwg.mxu0
      %835 = vrot.lane.b32.xlu0 %v827, 120
      %v836 = vpop.permute.xlu0 %835
      %837 = vrot.lane.b32.xlu0 %v830, 120
      %v838 = vpop.permute.xlu0 %837
      %841 = vrot.lane.b32.xlu0 %v827, 112
      %v842 = vpop.permute.xlu0 %841
      %843 = vrot.lane.b32.xlu0 %v830, 112
      %v844 = vpop.permute.xlu0 %843
      %847 = vrot.lane.b32.xlu0 %v827, 104
      %v848 = vpop.permute.xlu0 %847
      %849 = vrot.lane.b32.xlu0 %v830, 104
      %v850 = vpop.permute.xlu0 %849
      %v853 = vcombine.low %v827, %v842
      %v854 = vcombine.high %v827, %v842
      %v856 = vunpack.c.l.s4 1983009808
      %v857 = vunpack.c.0.s8 %v856
      %v858 = vlaneseq
      %v859 = vshrl.u32 %v858, 7
      %v860 = vsub.s32 %v857, %v859
      %v861 = vrot.slane %v853, %v860
      %v863 = vunpack.c.l.s4 1983009808
      %v864 = vunpack.c.0.s8 %v863
      %v865 = vlaneseq
      %v866 = vshrl.u32 %v865, 7
      %v867 = vsub.s32 %v864, %v866
      %v868 = vrot.slane %v854, %v867
      %v869 = vcombine.low %v836, %v848
      %v870 = vcombine.high %v836, %v848
      %v872 = vunpack.c.l.s4 1983009808
      %v873 = vunpack.c.0.s8 %v872
      %v874 = vlaneseq
      %v875 = vshrl.u32 %v874, 7
      %v876 = vsub.s32 %v873, %v875
      %v877 = vrot.slane %v869, %v876
      %v879 = vunpack.c.l.s4 1983009808
      %v880 = vunpack.c.0.s8 %v879
      %v881 = vlaneseq
      %v882 = vshrl.u32 %v881, 7
      %v883 = vsub.s32 %v880, %v882
      %v884 = vrot.slane %v870, %v883
      %v885 = vcombine.low %v861, %v877
      %v886 = vcombine.high %v861, %v877
      %v888 = vunpack.c.l.s4 1934713408
      %v889 = vunpack.c.0.s8 %v888
      %v890 = vlaneseq
      %v891 = vshrl.u32 %v890, 7
      %v892 = vsub.s32 %v889, %v891
      %v893 = vrot.slane %v885, %v892
      %v895 = vunpack.c.l.s4 1934713408
      %v896 = vunpack.c.0.s8 %v895
      %v897 = vlaneseq
      %v898 = vshrl.u32 %v897, 7
      %v899 = vsub.s32 %v896, %v898
      %v900 = vrot.slane %v886, %v899
      %v901 = vcombine.low %v868, %v884
      %v902 = vcombine.high %v868, %v884
      %v904 = vunpack.c.l.s4 1934713408
      %v905 = vunpack.c.0.s8 %v904
      %v906 = vlaneseq
      %v907 = vshrl.u32 %v906, 7
      %v908 = vsub.s32 %v905, %v907
      %v909 = vrot.slane %v901, %v908
      %v911 = vunpack.c.l.s4 1934713408
      %v912 = vunpack.c.0.s8 %v911
      %v913 = vlaneseq
      %v914 = vshrl.u32 %v913, 7
      %v915 = vsub.s32 %v912, %v914
      %v916 = vrot.slane %v902, %v915
      %v917 = vcombine.high %v893, 0.0
      %v918 = vcombine.high %v900, 0.0
      %v919 = vcombine.high %v909, 0.0
      %v920 = vcombine.high %v916, 0.0
      %v921 = vcombine.low %v830, %v844
      %v922 = vcombine.high %v830, %v844
      %v924 = vunpack.c.l.s4 1983009808
      %v925 = vunpack.c.0.s8 %v924
      %v926 = vlaneseq
      %v927 = vshrl.u32 %v926, 7
      %v928 = vsub.s32 %v925, %v927
      %v929 = vrot.slane %v921, %v928
      %v931 = vunpack.c.l.s4 1983009808
      %v932 = vunpack.c.0.s8 %v931
      %v933 = vlaneseq
      %v934 = vshrl.u32 %v933, 7
      %v935 = vsub.s32 %v932, %v934
      %v936 = vrot.slane %v922, %v935
      %v937 = vcombine.low %v838, %v850
      %v938 = vcombine.high %v838, %v850
      %v940 = vunpack.c.l.s4 1983009808
      %v941 = vunpack.c.0.s8 %v940
      %v942 = vlaneseq
      %v943 = vshrl.u32 %v942, 7
      %v944 = vsub.s32 %v941, %v943
      %v945 = vrot.slane %v937, %v944
      %v947 = vunpack.c.l.s4 1983009808
      %v948 = vunpack.c.0.s8 %v947
      %v949 = vlaneseq
      %v950 = vshrl.u32 %v949, 7
      %v951 = vsub.s32 %v948, %v950
      %v952 = vrot.slane %v938, %v951
      %v953 = vcombine.low %v929, %v945
      %v954 = vcombine.high %v929, %v945
      %v956 = vunpack.c.l.s4 1934713408
      %v957 = vunpack.c.0.s8 %v956
      %v958 = vlaneseq
      %v959 = vshrl.u32 %v958, 7
      %v960 = vsub.s32 %v957, %v959
      %v961 = vrot.slane %v953, %v960
      %v963 = vunpack.c.l.s4 1934713408
      %v964 = vunpack.c.0.s8 %v963
      %v965 = vlaneseq
      %v966 = vshrl.u32 %v965, 7
      %v967 = vsub.s32 %v964, %v966
      %v968 = vrot.slane %v954, %v967
      %v969 = vcombine.low %v936, %v952
      %v970 = vcombine.high %v936, %v952
      %v972 = vunpack.c.l.s4 1934713408
      %v973 = vunpack.c.0.s8 %v972
      %v974 = vlaneseq
      %v975 = vshrl.u32 %v974, 7
      %v976 = vsub.s32 %v973, %v975
      %v977 = vrot.slane %v969, %v976
      %v979 = vunpack.c.l.s4 1934713408
      %v980 = vunpack.c.0.s8 %v979
      %v981 = vlaneseq
      %v982 = vshrl.u32 %v981, 7
      %v983 = vsub.s32 %v980, %v982
      %v984 = vrot.slane %v970, %v983
      %v985 = vcombine.high %v961, 0.0
      %v986 = vcombine.high %v968, 0.0
      %v987 = vcombine.high %v977, 0.0
      %v988 = vcombine.high %v984, 0.0
      %v989 = vcombine.low %v893, %v900
      %v991 = vunpack.c.l.s4 1983009808
      %v992 = vunpack.c.0.s8 %v991
      %v993 = vlaneseq
      %v994 = vshrl.u32 %v993, 7
      %v995 = vsub.s32 %v992, %v994
      %v996 = vrot.slane %v989, %v995
      %v997 = vcombine.low %v917, %v918
      %v999 = vunpack.c.l.s4 1983009808
      %v1000 = vunpack.c.0.s8 %v999
      %v1001 = vlaneseq
      %v1002 = vshrl.u32 %v1001, 7
      %v1003 = vsub.s32 %v1000, %v1002
      %v1004 = vrot.slane %v997, %v1003
      %v1005 = vcombine.low %v909, %v916
      %v1007 = vunpack.c.l.s4 1983009808
      %v1008 = vunpack.c.0.s8 %v1007
      %v1009 = vlaneseq
      %v1010 = vshrl.u32 %v1009, 7
      %v1011 = vsub.s32 %v1008, %v1010
      %v1012 = vrot.slane %v1005, %v1011
      %v1013 = vcombine.low %v919, %v920
      %v1015 = vunpack.c.l.s4 1983009808
      %v1016 = vunpack.c.0.s8 %v1015
      %v1017 = vlaneseq
      %v1018 = vshrl.u32 %v1017, 7
      %v1019 = vsub.s32 %v1016, %v1018
      %v1020 = vrot.slane %v1013, %v1019
      %v1021 = vcombine.low %v996, %v1004
      %v1022 = vcombine.high %v996, %v1004
      %v1024 = vunpack.c.l.s4 1934713408
      %v1025 = vunpack.c.0.s8 %v1024
      %v1026 = vlaneseq
      %v1027 = vshrl.u32 %v1026, 7
      %v1028 = vsub.s32 %v1025, %v1027
      %v1029 = vrot.slane %v1021, %v1028
      %v1031 = vunpack.c.l.s4 1934713408
      %v1032 = vunpack.c.0.s8 %v1031
      %v1033 = vlaneseq
      %v1034 = vshrl.u32 %v1033, 7
      %v1035 = vsub.s32 %v1032, %v1034
      %v1036 = vrot.slane %v1022, %v1035
      %v1037 = vcombine.low %v1012, %v1020
      %v1038 = vcombine.high %v1012, %v1020
      %v1040 = vunpack.c.l.s4 1934713408
      %v1041 = vunpack.c.0.s8 %v1040
      %v1042 = vlaneseq
      %v1043 = vshrl.u32 %v1042, 7
      %v1044 = vsub.s32 %v1041, %v1043
      %v1045 = vrot.slane %v1037, %v1044
      %v1047 = vunpack.c.l.s4 1934713408
      %v1048 = vunpack.c.0.s8 %v1047
      %v1049 = vlaneseq
      %v1050 = vshrl.u32 %v1049, 7
      %v1051 = vsub.s32 %v1048, %v1050
      %v1052 = vrot.slane %v1038, %v1051
      %v1053 = vcombine.low %v1029, %v1045
      %v1054 = vcombine.high %v1029, %v1045
      %v1055 = vcombine.low %v1036, %v1052
      %v1056 = vcombine.high %v1036, %v1052
      %v1057 = vcombine.low %v961, %v968
      %v1059 = vunpack.c.l.s4 1983009808
      %v1060 = vunpack.c.0.s8 %v1059
      %v1061 = vlaneseq
      %v1062 = vshrl.u32 %v1061, 7
      %v1063 = vsub.s32 %v1060, %v1062
      %v1064 = vrot.slane %v1057, %v1063
      %v1065 = vcombine.low %v985, %v986
      %v1067 = vunpack.c.l.s4 1983009808
      %v1068 = vunpack.c.0.s8 %v1067
      %v1069 = vlaneseq
      %v1070 = vshrl.u32 %v1069, 7
      %v1071 = vsub.s32 %v1068, %v1070
      %v1072 = vrot.slane %v1065, %v1071
      %v1073 = vcombine.low %v977, %v984
      %v1075 = vunpack.c.l.s4 1983009808
      %v1076 = vunpack.c.0.s8 %v1075
      %v1077 = vlaneseq
      %v1078 = vshrl.u32 %v1077, 7
      %v1079 = vsub.s32 %v1076, %v1078
      %v1080 = vrot.slane %v1073, %v1079
      %v1081 = vcombine.low %v987, %v988
      %v1083 = vunpack.c.l.s4 1983009808
      %v1084 = vunpack.c.0.s8 %v1083
      %v1085 = vlaneseq
      %v1086 = vshrl.u32 %v1085, 7
      %v1087 = vsub.s32 %v1084, %v1086
      %v1088 = vrot.slane %v1081, %v1087
      %v1089 = vcombine.low %v1064, %v1072
      %v1090 = vcombine.high %v1064, %v1072
      %v1092 = vunpack.c.l.s4 1934713408
      %v1093 = vunpack.c.0.s8 %v1092
      %v1094 = vlaneseq
      %v1095 = vshrl.u32 %v1094, 7
      %v1096 = vsub.s32 %v1093, %v1095
      %v1097 = vrot.slane %v1089, %v1096
      %v1099 = vunpack.c.l.s4 1934713408
      %v1100 = vunpack.c.0.s8 %v1099
      %v1101 = vlaneseq
      %v1102 = vshrl.u32 %v1101, 7
      %v1103 = vsub.s32 %v1100, %v1102
      %v1104 = vrot.slane %v1090, %v1103
      %v1105 = vcombine.low %v1080, %v1088
      %v1106 = vcombine.high %v1080, %v1088
      %v1108 = vunpack.c.l.s4 1934713408
      %v1109 = vunpack.c.0.s8 %v1108
      %v1110 = vlaneseq
      %v1111 = vshrl.u32 %v1110, 7
      %v1112 = vsub.s32 %v1109, %v1111
      %v1113 = vrot.slane %v1105, %v1112
      %v1115 = vunpack.c.l.s4 1934713408
      %v1116 = vunpack.c.0.s8 %v1115
      %v1117 = vlaneseq
      %v1118 = vshrl.u32 %v1117, 7
      %v1119 = vsub.s32 %v1116, %v1118
      %v1120 = vrot.slane %v1106, %v1119
      %v1121 = vcombine.low %v1097, %v1113
      %v1122 = vcombine.high %v1097, %v1113
      %v1123 = vcombine.low %v1104, %v1120
      %v1124 = vcombine.high %v1104, %v1120
      %v1125 = vpack.c.bf16 %v1121, %v1053
      %v1126 = vpack.c.bf16 %v1122, %v1054
      %v1127 = vpack.c.bf16 %v1123, %v1055
      %v1128 = vpack.c.bf16 %v1124, %v1056
      %v1133 = vunpack.c.l.b16 %v1125
      %v1134 = vunpack.c.h.b16 %v1125
      %v1135 = vunpack.c.l.b16 %v1126
      %v1136 = vunpack.c.h.b16 %v1126
      %v1137 = vunpack.c.l.b16 %v1127
      %v1138 = vunpack.c.h.b16 %v1127
      %v1139 = vunpack.c.l.b16 %v1128
      %v1140 = vunpack.c.h.b16 %v1128
      %v1141 = vpack.c.b16 %v1133, %v1133
      %v1142 = vpack.c.b16 %v1134, %v1134
      %v1143 = vpack.c.b16 %v1135, %v1135
      %v1144 = vpack.c.b16 %v1136, %v1136
      %v1145 = vpack.c.b16 %v1137, %v1137
      %v1146 = vpack.c.b16 %v1138, %v1138
      %v1147 = vpack.c.b16 %v1139, %v1139
      %v1148 = vpack.c.b16 %v1140, %v1140
      %1157 = vst.msk [vmem:[%s318] sm:$0xf] %vm760, %v1141
      %1158 = vst.msk [vmem:[%s318 + $0x4] sm:$0xf] %vm760, %v1142
      %1159 = vst.msk [vmem:[%s318 + $0x8] sm:$0xf] %vm760, %v1143
      %1160 = vst.msk [vmem:[%s318 + $0xc] sm:$0xf] %vm760, %v1144
      %1161 = vst.msk [vmem:[%s318 + $0x10] sm:$0xf] %vm760, %v1145
      %1162 = vst.msk [vmem:[%s318 + $0x14] sm:$0xf] %vm760, %v1146
      %1163 = vst.msk [vmem:[%s318 + $0x18] sm:$0xf] %vm760, %v1147
      %1164 = vst.msk [vmem:[%s318 + $0x1c] sm:$0xf] %vm760, %v1148
      %p1165 = scmp.lt.s32.totalorder %s20, 1
      %s1166 = scalar_select %p1165, %s20, 1
      %s1167 = smul.addr %s1166, 8
      %s1168 = smul.addr %s1167, 4
      %s1169 = scalar_lea.vmem %s7, %s1168
      %p1170 = scmp.lt.s32.totalorder %s20, 1
      %s1171 = scalar_select %p1170, %s20, 1
      %s1172 = smul.addr %s1171, 8
      %s1173 = smul.addr %s1172, 4
      %s1174 = scalar_lea.vmem %s8, %s1173
      // Predicated region
      $region49: #{transformer_forward.4} parent=47 // pred_check
        %p1175 = pneg %p190
      $region50: #{transformer_forward.4} parent=47 // pred_check_branch
        %1177 = sbr.rel (%p1175) target = $region52
      $region51: #{transformer_forward.4} parent=47 // pred_region
        _
      $region52: #{transformer_forward.4} parent=47 // pred_fallthru
        _
      // Predicated region
      $region53: #{transformer_forward.4} parent=47 // pred_check
        %p1178 = pneg %p216
      $region54: #{transformer_forward.4} parent=47 // pred_check_branch
        %1180 = sbr.rel (%p1178) target = $region56
      $region55: #{transformer_forward.4} parent=47 // pred_region
        _
      $region56: #{transformer_forward.4} parent=47 // pred_fallthru
        _
    $region48: #{transformer_forward.4} parent=5 // pred_fallthru
      _
    %p1181 = scmp.le.s32.totalorder 2, %s15
    // Predicated region
    $region57: #{transformer_forward.4} parent=5 // pred_check
      %p1182 = pneg %p1181
    $region58: #{transformer_forward.4} parent=5 // pred_check_branch
      %1184 = sbr.rel (%p1182) target = $region60
    $region59: #{transformer_forward.4} parent=5 // pred_region
      %s1185 = ssub.s32 %s15, 2
      // Predicated region
      $region61: #{transformer_forward.4} parent=59 // pred_check
        %p1186 = pneg %p196
      $region62: #{transformer_forward.4} parent=59 // pred_check_branch
        %1188 = sbr.rel (%p1186) target = $region64
      $region63: #{transformer_forward.4} parent=59 // pred_region
        %p1189 = scmp.lt.s32.totalorder %s21, 1
        %s1190 = scalar_select %p1189, %s21, 1
        %s1191 = smul.addr %s1190, 8
        %s1192 = smul.addr %s1191, 4
        %s1193 = scalar_lea.vmem %s7, %s1192
      $region64: #{transformer_forward.4} parent=59 // pred_fallthru
        _
      // Predicated region
      $region65: #{transformer_forward.4} parent=59 // pred_check
        %p1194 = pneg %p222
      $region66: #{transformer_forward.4} parent=59 // pred_check_branch
        %1196 = sbr.rel (%p1194) target = $region68
      $region67: #{transformer_forward.4} parent=59 // pred_region
        %p1197 = scmp.lt.s32.totalorder %s21, 1
        %s1198 = scalar_select %p1197, %s21, 1
        %s1199 = smul.addr %s1198, 8
        %s1200 = smul.addr %s1199, 4
        %s1201 = scalar_lea.vmem %s8, %s1200
      $region68: #{transformer_forward.4} parent=59 // pred_fallthru
        _
    $region60: #{transformer_forward.4} parent=5 // pred_fallthru
      _
  $region6: #{transformer_forward.4} parent=0 // loop_footer
    %s19 = sadd.s32 1, %s15
  $region7: #{transformer_forward.4} parent=0 // loop_footer_branch
    %14 = sbr.rel target = $region3
  $region8: #{transformer_forward.4} parent=0 // loop_exit
    _

// kernel: transformer_forward.5
$region0: #{transformer_forward.5}
  #allocation0 [shape = 'u32[]', space=smem, size = 0x4, offset = 0x4, fixed_abs, tag = 'smem constant byte address 0x4 - core index']
  #allocation1 [shape = 'u32[144,128]{1,0:T(1,128)}', space=vmem, size = 0x12000, scoped, tag = 'internal scratch']
  %s0 = inlined_call_operand.vmem [shape: f32[2,16,32], index: 0, kind: input, shape index: {}, may-alias: {0,15}]
  %s1 = inlined_call_operand.vmem [shape: bf16[2,4,16,8], index: 1, kind: input, shape index: {}]
  %s2 = inlined_call_operand.vmem [shape: bf16[2,4,16,8], index: 2, kind: input, shape index: {}]
  %s3 = inlined_call_operand.vmem [shape: f32[1,32], index: 3, kind: input, shape index: {}]
  %s4 = inlined_call_operand.vmem [shape: f32[1,32], index: 4, kind: input, shape index: {}]
  %s5 = inlined_call_operand.vmem [shape: bf16[32,32], index: 5, kind: input, shape index: {}]
  %s6 = inlined_call_operand.vmem [shape: f32[1,32], index: 6, kind: input, shape index: {}]
  %s7 = inlined_call_operand.vmem [shape: bf16[32,32], index: 7, kind: input, shape index: {}]
  %s8 = inlined_call_operand.vmem [shape: f32[1,32], index: 8, kind: input, shape index: {}]
  %s9 = inlined_call_operand.vmem [shape: f32[1,32], index: 9, kind: input, shape index: {}]
  %s10 = inlined_call_operand.vmem [shape: f32[1,32], index: 10, kind: input, shape index: {}]
  %s11 = inlined_call_operand.vmem [shape: bf16[32,128], index: 11, kind: input, shape index: {}]
  %s12 = inlined_call_operand.vmem [shape: f32[1,128], index: 12, kind: input, shape index: {}]
  %s13 = inlined_call_operand.vmem [shape: bf16[128,32], index: 13, kind: input, shape index: {}]
  %s14 = inlined_call_operand.vmem [shape: f32[1,32], index: 14, kind: input, shape index: {}]
  %s15 = inlined_call_operand.vmem [shape: f32[2,16,32], index: 15, kind: output, shape index: {}, may-alias: {0,15}]
  %s16 = sld [smem:[#allocation0]]
  $region93: #{transformer_forward.5} parent=0
    _
  %s18 = ssub.s32 1, %s16
  %s19 = scalar_select 0, %s18, %s16
  loop: start=0, step=1, limit=6
  $region2: #{transformer_forward.5} parent=0 // loop_pre_header
    _
  $region3: #{transformer_forward.5} parent=0 // loop_header
    %s21 = sphi 0, %s25
    %p22 = scmp.ge.s32.totalorder %s21, 6
    %s28 = sphi 0, %s40
    %s29 = sphi 0, %s36
    %s30 = sphi 0, %s28
    %s31 = sphi 0, %s29
    %s32 = sphi 0, %s30
    %s33 = sphi 0, %s31
    %s45 = sphi 0, %s47
    %s48 = sphi 0, %s45
    %s49 = sphi 0, %s48
    %s65 = sphi 0, %s49
    %s71 = sphi 0, %s73
    %s74 = sphi 0, %s71
    %s75 = sphi 0, %s74
    %s91 = sphi 0, %s75
    %s97 = sphi 0, %s99
    %s100 = sphi 0, %s97
    %s101 = sphi 0, %s100
    %s117 = sphi 0, %s101
    %s121 = sphi 0, %s121
    %s123 = sphi 0, %s121
    %s124 = sphi 0, %s123
    %s138 = sphi 0, %s124
    %s142 = sphi 0, %s142
    %s144 = sphi 0, %s142
    %s145 = sphi 0, %s144
    %s159 = sphi 0, %s145
    %s163 = sphi 0, %s163
    %s165 = sphi 0, %s163
    %s166 = sphi 0, %s165
    %s180 = sphi 0, %s166
    %s184 = sphi 0, %s184
    %s186 = sphi 0, %s184
    %s187 = sphi 0, %s186
    %s201 = sphi 0, %s187
    %s205 = sphi 0, %s205
    %s207 = sphi 0, %s205
    %s208 = sphi 0, %s207
    %s222 = sphi 0, %s208
    %s226 = sphi 0, %s226
    %s228 = sphi 0, %s226
    %s229 = sphi 0, %s228
    %s243 = sphi 0, %s229
    %s247 = sphi 0, %s247
    %s249 = sphi 0, %s247
    %s250 = sphi 0, %s249
    %s264 = sphi 0, %s250
    %s268 = sphi 0, %s268
    %s270 = sphi 0, %s268
    %s271 = sphi 0, %s270
    %s285 = sphi 0, %s271
    %s289 = sphi 0, %s289
    %s291 = sphi 0, %s289
    %s292 = sphi 0, %s291
    %s306 = sphi 0, %s292
    %s310 = sphi 0, %s310
    %s312 = sphi 0, %s310
    %s313 = sphi 0, %s312
    %s327 = sphi 0, %s313
    %s331 = sphi 0, %s331
    %s333 = sphi 0, %s331
    %s334 = sphi 0, %s333
    %s348 = sphi 0, %s334
    %s352 = sphi 0, %s352
    %s354 = sphi 0, %s352
    %s355 = sphi 0, %s354
    %s369 = sphi 0, %s355
    %s377 = sphi 0, %s379
    %s380 = sphi 0, %s377
    %s381 = sphi 0, %s380
    %s397 = sphi 0, %s381
  $region4: #{transformer_forward.5} parent=0 // loop_header_branch
    %24 = sbr.rel (%p22) target = $region8
  $region5: #{transformer_forward.5} parent=0 // loop_body
    %s26 = ssub.s32 %s21, 1
    %s27 = ssub.s32 %s21, 2
    %s34 = sadd.s32 1, %s29
    %p35 = scmp.ge.s32.totalorder %s34, 2
    %s36 = scalar_select %p35, 0, %s34
    %s37 = sadd.s32 1, %s28
    %s38 = scalar_select %p35, %s37, %s28
    %p39 = scmp.ge.s32.totalorder %s38, 2
    %s40 = scalar_select %p39, 0, %s38
    %s41 = ssub.s32 %s28, %s40
    %s42 = ssub.s32 %s29, %s36
    %s43 = sor.u32 %s41, %s42
    %p44 = scmp.eq.s32.totalorder %s43, 0
    %s46 = sadd.s32 %s45, 1
    %s47 = scalar_select %p44, %s45, %s46
    %p50 = pneg %p44
    %p51 = scmp.eq.s32.totalorder %s21, 3
    %p52 = por %p50, %p51
    %p53 = scmp.ne.s32.totalorder %s45, %s48
    %p54 = scmp.eq.s32.totalorder %s21, 0
    %p55 = por %p53, %p54
    %p56 = scmp.ne.s32.totalorder %s45, %s48
    %p57 = scmp.eq.s32.totalorder %s26, 3
    %p58 = por %p56, %p57
    %p59 = scmp.ne.s32.totalorder %s48, %s49
    %p60 = scmp.eq.s32.totalorder %s26, 0
    %p61 = por %p59, %p60
    %p62 = scmp.ne.s32.totalorder %s48, %s49
    %p63 = scmp.eq.s32.totalorder %s27, 3
    %p64 = por %p62, %p63
    %p66 = scmp.ne.s32.totalorder %s49, %s65
    %p67 = scmp.eq.s32.totalorder %s27, 0
    %p68 = por %p66, %p67
    %s69 = ssub.s32 %s28, %s40
    %p70 = scmp.eq.s32.totalorder %s69, 0
    %s72 = sadd.s32 %s71, 1
    %s73 = scalar_select %p70, %s71, %s72
    %p76 = pneg %p70
    %p77 = scmp.eq.s32.totalorder %s21, 3
    %p78 = por %p76, %p77
    %p79 = scmp.ne.s32.totalorder %s71, %s74
    %p80 = scmp.eq.s32.totalorder %s21, 0
    %p81 = por %p79, %p80
    %p82 = scmp.ne.s32.totalorder %s71, %s74
    %p83 = scmp.eq.s32.totalorder %s26, 3
    %p84 = por %p82, %p83
    %p85 = scmp.ne.s32.totalorder %s74, %s75
    %p86 = scmp.eq.s32.totalorder %s26, 0
    %p87 = por %p85, %p86
    %p88 = scmp.ne.s32.totalorder %s74, %s75
    %p89 = scmp.eq.s32.totalorder %s27, 3
    %p90 = por %p88, %p89
    %p92 = scmp.ne.s32.totalorder %s75, %s91
    %p93 = scmp.eq.s32.totalorder %s27, 0
    %p94 = por %p92, %p93
    %s95 = ssub.s32 %s28, %s40
    %p96 = scmp.eq.s32.totalorder %s95, 0
    %s98 = sadd.s32 %s97, 1
    %s99 = scalar_select %p96, %s97, %s98
    %p102 = pneg %p96
    %p103 = scmp.eq.s32.totalorder %s21, 3
    %p104 = por %p102, %p103
    %p105 = scmp.ne.s32.totalorder %s97, %s100
    %p106 = scmp.eq.s32.totalorder %s21, 0
    %p107 = por %p105, %p106
    %p108 = scmp.ne.s32.totalorder %s97, %s100
    %p109 = scmp.eq.s32.totalorder %s26, 3
    %p110 = por %p108, %p109
    %p111 = scmp.ne.s32.totalorder %s100, %s101
    %p112 = scmp.eq.s32.totalorder %s26, 0
    %p113 = por %p111, %p112
    %p114 = scmp.ne.s32.totalorder %s100, %s101
    %p115 = scmp.eq.s32.totalorder %s27, 3
    %p116 = por %p114, %p115
    %p118 = scmp.ne.s32.totalorder %s101, %s117
    %p119 = scmp.eq.s32.totalorder %s27, 0
    %p120 = por %p118, %p119
    %s122 = sadd.s32 %s121, 1
    %p125 = scmp.eq.s32.totalorder %s21, 3
    %p126 = scmp.ne.s32.totalorder %s121, %s123
    %p127 = scmp.eq.s32.totalorder %s21, 0
    %p128 = por %p126, %p127
    %p129 = scmp.ne.s32.totalorder %s121, %s123
    %p130 = scmp.eq.s32.totalorder %s26, 3
    %p131 = por %p129, %p130
    %p132 = scmp.ne.s32.totalorder %s123, %s124
    %p133 = scmp.eq.s32.totalorder %s26, 0
    %p134 = por %p132, %p133
    %p135 = scmp.ne.s32.totalorder %s123, %s124
    %p136 = scmp.eq.s32.totalorder %s27, 3
    %p137 = por %p135, %p136
    %p139 = scmp.ne.s32.totalorder %s124, %s138
    %p140 = scmp.eq.s32.totalorder %s27, 0
    %p141 = por %p139, %p140
    %s143 = sadd.s32 %s142, 1
    %p146 = scmp.eq.s32.totalorder %s21, 3
    %p147 = scmp.ne.s32.totalorder %s142, %s144
    %p148 = scmp.eq.s32.totalorder %s21, 0
    %p149 = por %p147, %p148
    %p150 = scmp.ne.s32.totalorder %s142, %s144
    %p151 = scmp.eq.s32.totalorder %s26, 3
    %p152 = por %p150, %p151
    %p153 = scmp.ne.s32.totalorder %s144, %s145
    %p154 = scmp.eq.s32.totalorder %s26, 0
    %p155 = por %p153, %p154
    %p156 = scmp.ne.s32.totalorder %s144, %s145
    %p157 = scmp.eq.s32.totalorder %s27, 3
    %p158 = por %p156, %p157
    %p160 = scmp.ne.s32.totalorder %s145, %s159
    %p161 = scmp.eq.s32.totalorder %s27, 0
    %p162 = por %p160, %p161
    %s164 = sadd.s32 %s163, 1
    %p167 = scmp.eq.s32.totalorder %s21, 3
    %p168 = scmp.ne.s32.totalorder %s163, %s165
    %p169 = scmp.eq.s32.totalorder %s21, 0
    %p170 = por %p168, %p169
    %p171 = scmp.ne.s32.totalorder %s163, %s165
    %p172 = scmp.eq.s32.totalorder %s26, 3
    %p173 = por %p171, %p172
    %p174 = scmp.ne.s32.totalorder %s165, %s166
    %p175 = scmp.eq.s32.totalorder %s26, 0
    %p176 = por %p174, %p175
    %p177 = scmp.ne.s32.totalorder %s165, %s166
    %p178 = scmp.eq.s32.totalorder %s27, 3
    %p179 = por %p177, %p178
    %p181 = scmp.ne.s32.totalorder %s166, %s180
    %p182 = scmp.eq.s32.totalorder %s27, 0
    %p183 = por %p181, %p182
    %s185 = sadd.s32 %s184, 1
    %p188 = scmp.eq.s32.totalorder %s21, 3
    %p189 = scmp.ne.s32.totalorder %s184, %s186
    %p190 = scmp.eq.s32.totalorder %s21, 0
    %p191 = por %p189, %p190
    %p192 = scmp.ne.s32.totalorder %s184, %s186
    %p193 = scmp.eq.s32.totalorder %s26, 3
    %p194 = por %p192, %p193
    %p195 = scmp.ne.s32.totalorder %s186, %s187
    %p196 = scmp.eq.s32.totalorder %s26, 0
    %p197 = por %p195, %p196
    %p198 = scmp.ne.s32.totalorder %s186, %s187
    %p199 = scmp.eq.s32.totalorder %s27, 3
    %p200 = por %p198, %p199
    %p202 = scmp.ne.s32.totalorder %s187, %s201
    %p203 = scmp.eq.s32.totalorder %s27, 0
    %p204 = por %p202, %p203
    %s206 = sadd.s32 %s205, 1
    %p209 = scmp.eq.s32.totalorder %s21, 3
    %p210 = scmp.ne.s32.totalorder %s205, %s207
    %p211 = scmp.eq.s32.totalorder %s21, 0
    %p212 = por %p210, %p211
    %p213 = scmp.ne.s32.totalorder %s205, %s207
    %p214 = scmp.eq.s32.totalorder %s26, 3
    %p215 = por %p213, %p214
    %p216 = scmp.ne.s32.totalorder %s207, %s208
    %p217 = scmp.eq.s32.totalorder %s26, 0
    %p218 = por %p216, %p217
    %p219 = scmp.ne.s32.totalorder %s207, %s208
    %p220 = scmp.eq.s32.totalorder %s27, 3
    %p221 = por %p219, %p220
    %p223 = scmp.ne.s32.totalorder %s208, %s222
    %p224 = scmp.eq.s32.totalorder %s27, 0
    %p225 = por %p223, %p224
    %s227 = sadd.s32 %s226, 1
    %p230 = scmp.eq.s32.totalorder %s21, 3
    %p231 = scmp.ne.s32.totalorder %s226, %s228
    %p232 = scmp.eq.s32.totalorder %s21, 0
    %p233 = por %p231, %p232
    %p234 = scmp.ne.s32.totalorder %s226, %s228
    %p235 = scmp.eq.s32.totalorder %s26, 3
    %p236 = por %p234, %p235
    %p237 = scmp.ne.s32.totalorder %s228, %s229
    %p238 = scmp.eq.s32.totalorder %s26, 0
    %p239 = por %p237, %p238
    %p240 = scmp.ne.s32.totalorder %s228, %s229
    %p241 = scmp.eq.s32.totalorder %s27, 3
    %p242 = por %p240, %p241
    %p244 = scmp.ne.s32.totalorder %s229, %s243
    %p245 = scmp.eq.s32.totalorder %s27, 0
    %p246 = por %p244, %p245
    %s248 = sadd.s32 %s247, 1
    %p251 = scmp.eq.s32.totalorder %s21, 3
    %p252 = scmp.ne.s32.totalorder %s247, %s249
    %p253 = scmp.eq.s32.totalorder %s21, 0
    %p254 = por %p252, %p253
    %p255 = scmp.ne.s32.totalorder %s247, %s249
    %p256 = scmp.eq.s32.totalorder %s26, 3
    %p257 = por %p255, %p256
    %p258 = scmp.ne.s32.totalorder %s249, %s250
    %p259 = scmp.eq.s32.totalorder %s26, 0
    %p260 = por %p258, %p259
    %p261 = scmp.ne.s32.totalorder %s249, %s250
    %p262 = scmp.eq.s32.totalorder %s27, 3
    %p263 = por %p261, %p262
    %p265 = scmp.ne.s32.totalorder %s250, %s264
    %p266 = scmp.eq.s32.totalorder %s27, 0
    %p267 = por %p265, %p266
    %s269 = sadd.s32 %s268, 1
    %p272 = scmp.eq.s32.totalorder %s21, 3
    %p273 = scmp.ne.s32.totalorder %s268, %s270
    %p274 = scmp.eq.s32.totalorder %s21, 0
    %p275 = por %p273, %p274
    %p276 = scmp.ne.s32.totalorder %s268, %s270
    %p277 = scmp.eq.s32.totalorder %s26, 3
    %p278 = por %p276, %p277
    %p279 = scmp.ne.s32.totalorder %s270, %s271
    %p280 = scmp.eq.s32.totalorder %s26, 0
    %p281 = por %p279, %p280
    %p282 = scmp.ne.s32.totalorder %s270, %s271
    %p283 = scmp.eq.s32.totalorder %s27, 3
    %p284 = por %p282, %p283
    %p286 = scmp.ne.s32.totalorder %s271, %s285
    %p287 = scmp.eq.s32.totalorder %s27, 0
    %p288 = por %p286, %p287
    %s290 = sadd.s32 %s289, 1
    %p293 = scmp.eq.s32.totalorder %s21, 3
    %p294 = scmp.ne.s32.totalorder %s289, %s291
    %p295 = scmp.eq.s32.totalorder %s21, 0
    %p296 = por %p294, %p295
    %p297 = scmp.ne.s32.totalorder %s289, %s291
    %p298 = scmp.eq.s32.totalorder %s26, 3
    %p299 = por %p297, %p298
    %p300 = scmp.ne.s32.totalorder %s291, %s292
    %p301 = scmp.eq.s32.totalorder %s26, 0
    %p302 = por %p300, %p301
    %p303 = scmp.ne.s32.totalorder %s291, %s292
    %p304 = scmp.eq.s32.totalorder %s27, 3
    %p305 = por %p303, %p304
    %p307 = scmp.ne.s32.totalorder %s292, %s306
    %p308 = scmp.eq.s32.totalorder %s27, 0
    %p309 = por %p307, %p308
    %s311 = sadd.s32 %s310, 1
    %p314 = scmp.eq.s32.totalorder %s21, 3
    %p315 = scmp.ne.s32.totalorder %s310, %s312
    %p316 = scmp.eq.s32.totalorder %s21, 0
    %p317 = por %p315, %p316
    %p318 = scmp.ne.s32.totalorder %s310, %s312
    %p319 = scmp.eq.s32.totalorder %s26, 3
    %p320 = por %p318, %p319
    %p321 = scmp.ne.s32.totalorder %s312, %s313
    %p322 = scmp.eq.s32.totalorder %s26, 0
    %p323 = por %p321, %p322
    %p324 = scmp.ne.s32.totalorder %s312, %s313
    %p325 = scmp.eq.s32.totalorder %s27, 3
    %p326 = por %p324, %p325
    %p328 = scmp.ne.s32.totalorder %s313, %s327
    %p329 = scmp.eq.s32.totalorder %s27, 0
    %p330 = por %p328, %p329
    %s332 = sadd.s32 %s331, 1
    %p335 = scmp.eq.s32.totalorder %s21, 3
    %p336 = scmp.ne.s32.totalorder %s331, %s333
    %p337 = scmp.eq.s32.totalorder %s21, 0
    %p338 = por %p336, %p337
    %p339 = scmp.ne.s32.totalorder %s331, %s333
    %p340 = scmp.eq.s32.totalorder %s26, 3
    %p341 = por %p339, %p340
    %p342 = scmp.ne.s32.totalorder %s333, %s334
    %p343 = scmp.eq.s32.totalorder %s26, 0
    %p344 = por %p342, %p343
    %p345 = scmp.ne.s32.totalorder %s333, %s334
    %p346 = scmp.eq.s32.totalorder %s27, 3
    %p347 = por %p345, %p346
    %p349 = scmp.ne.s32.totalorder %s334, %s348
    %p350 = scmp.eq.s32.totalorder %s27, 0
    %p351 = por %p349, %p350
    %s353 = sadd.s32 %s352, 1
    %p356 = scmp.eq.s32.totalorder %s21, 3
    %p357 = scmp.ne.s32.totalorder %s352, %s354
    %p358 = scmp.eq.s32.totalorder %s21, 0
    %p359 = por %p357, %p358
    %p360 = scmp.ne.s32.totalorder %s352, %s354
    %p361 = scmp.eq.s32.totalorder %s26, 3
    %p362 = por %p360, %p361
    %p363 = scmp.ne.s32.totalorder %s354, %s355
    %p364 = scmp.eq.s32.totalorder %s26, 0
    %p365 = por %p363, %p364
    %p366 = scmp.ne.s32.totalorder %s354, %s355
    %p367 = scmp.eq.s32.totalorder %s27, 3
    %p368 = por %p366, %p367
    %p370 = scmp.ne.s32.totalorder %s355, %s369
    %p371 = scmp.eq.s32.totalorder %s27, 0
    %p372 = por %p370, %p371
    %s373 = ssub.s32 %s28, %s40
    %s374 = ssub.s32 %s29, %s36
    %s375 = sor.u32 %s373, %s374
    %p376 = scmp.eq.s32.totalorder %s375, 0
    %s378 = sadd.s32 %s377, 1
    %s379 = scalar_select %p376, %s377, %s378
    %p382 = pneg %p376
    %p383 = scmp.eq.s32.totalorder %s21, 3
    %p384 = por %p382, %p383
    %p385 = scmp.ne.s32.totalorder %s377, %s380
    %p386 = scmp.eq.s32.totalorder %s21, 0
    %p387 = por %p385, %p386
    %p388 = scmp.ne.s32.totalorder %s377, %s380
    %p389 = scmp.eq.s32.totalorder %s26, 3
    %p390 = por %p388, %p389
    %p391 = scmp.ne.s32.totalorder %s380, %s381
    %p392 = scmp.eq.s32.totalorder %s26, 0
    %p393 = por %p391, %p392
    %p394 = scmp.ne.s32.totalorder %s380, %s381
    %p395 = scmp.eq.s32.totalorder %s27, 3
    %p396 = por %p394, %p395
    %p398 = scmp.ne.s32.totalorder %s381, %s397
    %p399 = scmp.eq.s32.totalorder %s27, 0
    %p400 = por %p398, %p399
    %p401 = scmp.le.s32.totalorder 1, %s21
    %p402 = scmp.lt.s32.totalorder %s21, 5
    %p403 = pnand %p401, %p402
    %p404 = pneg %p403
    // Predicated region
    $region9: #{transformer_forward.5} parent=5 // pred_check
      _
    $region10: #{transformer_forward.5} parent=5 // pred_check_branch
      %406 = sbr.rel (%p403) target = $region12
    $region11: #{transformer_forward.5} parent=5 // pred_region
      %s407 = ssub.s32 %s21, 1
      // Predicated region
      $region13: #{transformer_forward.5} parent=11 // pred_check
        %p408 = pneg %p134
      $region14: #{transformer_forward.5} parent=11 // pred_check_branch
        %410 = sbr.rel (%p408) target = $region16
      $region15: #{transformer_forward.5} parent=11 // pred_region
        _
      $region16: #{transformer_forward.5} parent=11 // pred_fallthru
        _
      // Predicated region
      $region17: #{transformer_forward.5} parent=11 // pred_check
        %p411 = pneg %p155
      $region18: #{transformer_forward.5} parent=11 // pred_check_branch
        %413 = sbr.rel (%p411) target = $region20
      $region19: #{transformer_forward.5} parent=11 // pred_region
        _
      $region20: #{transformer_forward.5} parent=11 // pred_fallthru
        _
      // Predicated region
      $region21: #{transformer_forward.5} parent=11 // pred_check
        %p414 = pneg %p176
      $region22: #{transformer_forward.5} parent=11 // pred_check_branch
        %416 = sbr.rel (%p414) target = $region24
      $region23: #{transformer_forward.5} parent=11 // pred_region
        _
      $region24: #{transformer_forward.5} parent=11 // pred_fallthru
        _
      // Predicated region
      $region25: #{transformer_forward.5} parent=11 // pred_check
        %p417 = pneg %p197
      $region26: #{transformer_forward.5} parent=11 // pred_check_branch
        %419 = sbr.rel (%p417) target = $region28
      $region27: #{transformer_forward.5} parent=11 // pred_region
        _
      $region28: #{transformer_forward.5} parent=11 // pred_fallthru
        _
      // Predicated region
      $region29: #{transformer_forward.5} parent=11 // pred_check
        %p420 = pneg %p218
      $region30: #{transformer_forward.5} parent=11 // pred_check_branch
        %422 = sbr.rel (%p420) target = $region32
      $region31: #{transformer_forward.5} parent=11 // pred_region
        _
      $region32: #{transformer_forward.5} parent=11 // pred_fallthru
        _
      // Predicated region
      $region33: #{transformer_forward.5} parent=11 // pred_check
        %p423 = pneg %p239
      $region34: #{transformer_forward.5} parent=11 // pred_check_branch
        %425 = sbr.rel (%p423) target = $region36
      $region35: #{transformer_forward.5} parent=11 // pred_region
        _
      $region36: #{transformer_forward.5} parent=11 // pred_fallthru
        _
      // Predicated region
      $region37: #{transformer_forward.5} parent=11 // pred_check
        %p426 = pneg %p260
      $region38: #{transformer_forward.5} parent=11 // pred_check_branch
        %428 = sbr.rel (%p426) target = $region40
      $region39: #{transformer_forward.5} parent=11 // pred_region
        _
      $region40: #{transformer_forward.5} parent=11 // pred_fallthru
        _
      // Predicated region
      $region41: #{transformer_forward.5} parent=11 // pred_check
        %p429 = pneg %p281
      $region42: #{transformer_forward.5} parent=11 // pred_check_branch
        %431 = sbr.rel (%p429) target = $region44
      $region43: #{transformer_forward.5} parent=11 // pred_region
        _
      $region44: #{transformer_forward.5} parent=11 // pred_fallthru
        _
      // Predicated region
      $region45: #{transformer_forward.5} parent=11 // pred_check
        %p432 = pneg %p302
      $region46: #{transformer_forward.5} parent=11 // pred_check_branch
        %434 = sbr.rel (%p432) target = $region48
      $region47: #{transformer_forward.5} parent=11 // pred_region
        _
      $region48: #{transformer_forward.5} parent=11 // pred_fallthru
        _
      // Predicated region
      $region49: #{transformer_forward.5} parent=11 // pred_check
        %p435 = pneg %p323
      $region50: #{transformer_forward.5} parent=11 // pred_check_branch
        %437 = sbr.rel (%p435) target = $region52
      $region51: #{transformer_forward.5} parent=11 // pred_region
        _
      $region52: #{transformer_forward.5} parent=11 // pred_fallthru
        _
      // Predicated region
      $region53: #{transformer_forward.5} parent=11 // pred_check
        %p438 = pneg %p344
      $region54: #{transformer_forward.5} parent=11 // pred_check_branch
        %440 = sbr.rel (%p438) target = $region56
      $region55: #{transformer_forward.5} parent=11 // pred_region
        _
      $region56: #{transformer_forward.5} parent=11 // pred_fallthru
        _
      // Predicated region
      $region57: #{transformer_forward.5} parent=11 // pred_check
        %p441 = pneg %p365
      $region58: #{transformer_forward.5} parent=11 // pred_check_branch
        %443 = sbr.rel (%p441) target = $region60
      $region59: #{transformer_forward.5} parent=11 // pred_region
        _
      $region60: #{transformer_forward.5} parent=11 // pred_fallthru
        _
    $region12: #{transformer_forward.5} parent=5 // pred_fallthru
      _
    %p444 = scmp.lt.s32.totalorder %s21, 4
    // Predicated region
    $region61: #{transformer_forward.5} parent=5 // pred_check
      %p445 = pneg %p444
    $region62: #{transformer_forward.5} parent=5 // pred_check_branch
      %447 = sbr.rel (%p445) target = $region64
    $region63: #{transformer_forward.5} parent=5 // pred_region
      // Predicated region
      $region65: #{transformer_forward.5} parent=63 // pred_check
        %p448 = pneg %p55
      $region66: #{transformer_forward.5} parent=63 // pred_check_branch
        %450 = sbr.rel (%p448) target = $region68
      $region67: #{transformer_forward.5} parent=63 // pred_region
        %p451 = scmp.lt.s32.totalorder %s28, 1
        %s452 = scalar_select %p451, %s28, 1
        %p453 = scmp.lt.s32.totalorder %s29, 1
        %s454 = scalar_select %p453, %s29, 1
        %s455 = smul.addr %s452, 2
        %s456 = sadd.s32 %s454, %s455
        %s457 = smul.addr %s456, 8
        %s458 = scalar_lea.vmem %s0, %s457
      $region68: #{transformer_forward.5} parent=63 // pred_fallthru
        _
      // Predicated region
      $region69: #{transformer_forward.5} parent=63 // pred_check
        %p459 = pneg %p81
      $region70: #{transformer_forward.5} parent=63 // pred_check_branch
        %461 = sbr.rel (%p459) target = $region72
      $region71: #{transformer_forward.5} parent=63 // pred_region
        %p462 = scmp.lt.s32.totalorder %s28, 1
        %s463 = scalar_select %p462, %s28, 1
        %s464 = smul.addr %s463, 8
        %s465 = smul.addr %s464, 4
        %s466 = scalar_lea.vmem %s1, %s465
      $region72: #{transformer_forward.5} parent=63 // pred_fallthru
        _
      // Predicated region
      $region73: #{transformer_forward.5} parent=63 // pred_check
        %p467 = pneg %p107
      $region74: #{transformer_forward.5} parent=63 // pred_check_branch
        %469 = sbr.rel (%p467) target = $region76
      $region75: #{transformer_forward.5} parent=63 // pred_region
        %p470 = scmp.lt.s32.totalorder %s28, 1
        %s471 = scalar_select %p470, %s28, 1
        %s472 = smul.addr %s471, 8
        %s473 = smul.addr %s472, 4
        %s474 = scalar_lea.vmem %s2, %s473
      $region76: #{transformer_forward.5} parent=63 // pred_fallthru
        _
    $region64: #{transformer_forward.5} parent=5 // pred_fallthru
      _
    %p475 = scmp.le.s32.totalorder 1, %s21
    %p476 = scmp.lt.s32.totalorder %s21, 5
    %p477 = pnand %p475, %p476
    %p478 = pneg %p477
    // Predicated region
    $region77: #{transformer_forward.5} parent=5 // pred_check
      _
    $region78: #{transformer_forward.5} parent=5 // pred_check_branch
      %480 = sbr.rel (%p477) target = $region80
    $region79: #{transformer_forward.5} parent=5 // pred_region
      %s481 = ssub.s32 %s21, 1
      %p482 = scmp.lt.s32.totalorder %s30, 1
      %s483 = scalar_select %p482, %s30, 1
      %p484 = scmp.lt.s32.totalorder %s31, 1
      %s485 = scalar_select %p484, %s31, 1
      %s486 = smul.addr %s483, 2
      %s487 = sadd.s32 %s485, %s486
      %s488 = smul.addr %s487, 8
      %s489 = scalar_lea.vmem %s0, %s488
      %p490 = pneg %p61
      %p491 = pneg %p58
      %p492 = scmp.lt.s32.totalorder %s30, 1
      %s493 = scalar_select %p492, %s30, 1
      %s494 = smul.addr %s493, 8
      %s495 = smul.addr %s494, 4
      %s496 = scalar_lea.vmem %s1, %s495
      %p497 = pneg %p87
      %p498 = pneg %p84
      %p499 = scmp.lt.s32.totalorder %s30, 1
      %s500 = scalar_select %p499, %s30, 1
      %s501 = smul.addr %s500, 8
      %s502 = smul.addr %s501, 4
      %s503 = scalar_lea.vmem %s2, %s502
      %p504 = pneg %p113
      %p505 = pneg %p110
      %p506 = pneg %p134
      %p507 = pneg %p131
      %p508 = pneg %p155
      %p509 = pneg %p152
      %p510 = pneg %p176
      %p511 = pneg %p173
      %p512 = pneg %p197
      %p513 = pneg %p194
      %p514 = pneg %p218
      %p515 = pneg %p215
      %p516 = pneg %p239
      %p517 = pneg %p236
      %p518 = pneg %p260
      %p519 = pneg %p257
      %p520 = pneg %p281
      %p521 = pneg %p278
      %p522 = pneg %p302
      %p523 = pneg %p299
      %p524 = pneg %p323
      %p525 = pneg %p320
      %p526 = pneg %p344
      %p527 = pneg %p341
      %p528 = pneg %p365
      %p529 = pneg %p362
      %p530 = pneg %p393
      %p531 = pneg %p390
      %p532 = scmp.lt.s32.totalorder %s30, 1
      %s533 = scalar_select %p532, %s30, 1
      %p534 = scmp.lt.s32.totalorder %s31, 1
      %s535 = scalar_select %p534, %s31, 1
      %s536 = smul.addr %s533, 2
      %s537 = sadd.s32 %s535, %s536
      %s538 = smul.addr %s537, 8
      %s539 = scalar_lea.vmem %s15, %s538
      %p540 = scmp.lt.s32.totalorder %s30, 1
      %s541 = scalar_select %p540, %s30, 1
      %p542 = scmp.lt.s32.totalorder %s31, 1
      %s543 = scalar_select %p542, %s31, 1
      %s544 = smul.addr %s541, 2
      %s545 = sadd.s32 %s543, %s544
      %s546 = smul.addr %s545, 8
      %s547 = scalar_lea.vmem %s0, %s546
      %p548 = scmp.lt.s32.totalorder %s30, 1
      %s549 = scalar_select %p548, %s30, 1
      %s550 = smul.addr %s549, 8
      %s551 = smul.addr %s550, 4
      %s552 = scalar_lea.vmem %s1, %s551
      %p553 = scmp.lt.s32.totalorder %s30, 1
      %s554 = scalar_select %p553, %s30, 1
      %s555 = smul.addr %s554, 8
      %s556 = smul.addr %s555, 4
      %s557 = scalar_lea.vmem %s2, %s556
      %p558 = scmp.lt.s32.totalorder %s30, 1
      %s559 = scalar_select %p558, %s30, 1
      %p560 = scmp.lt.s32.totalorder %s31, 1
      %s561 = scalar_select %p560, %s31, 1
      %s562 = smul.addr %s559, 2
      %s563 = sadd.s32 %s561, %s562
      %s564 = smul.addr %s563, 8
      %s565 = scalar_lea.vmem %s15, %s564
      %v567 = vld [vmem:[%s547] sm:$0xff]
      %v568 = vld [vmem:[%s3] sm:$0x1]
      %v569 = vld [vmem:[%s4] sm:$0x1]
      %vm570 = vcmask 261120
      %v571 = vsel %vm570, %v567, 0.0
      %572 = vadd.xlane.f32.xlu0 %v571
      %v573 = vpop.xlane.xlu0 %572
      %v574 = vrcp.pop 32.0
      %v575 = vmul.f32 %v573, %v574
      %v576 = vsub.f32 %v567, %v575
      %v577 = vmul.f32 %v576, %v576
      %v578 = vsel %vm570, %v577, 0.0
      %579 = vadd.xlane.f32.xlu0 %v578
      %v580 = vpop.xlane.xlu0 %579
      %v581 = vmul.f32 %v580, %v574
      %v582 = vadd.f32 %v581, 1e-05
      %v583 = vrsqrt.pop %v582
      %v584 = vmul.f32 %v576, %v583
      %v586 = vlaneseq
      %v587 = vshrl.u32 %v586, 7
      %v588 = vsub.s32 0, %v587
      %v589 = vrot.slane %v568, %v588
      %v591 = vmul.f32 %v584, %v589
      %v593 = vlaneseq
      %v594 = vshrl.u32 %v593, 7
      %v595 = vsub.s32 0, %v594
      %v596 = vrot.slane %v569, %v595
      %v598 = vadd.f32 %v591, %v596
      %v599 = vpack.c.bf16 %v598, %v598
      %v600 = vld [vmem:[%s5] sm:$0xf]
      %v601 = vld [vmem:[%s5 + $0x4] sm:$0xf]
      %v602 = vld [vmem:[%s5 + $0x8] sm:$0xf]
      %v603 = vld [vmem:[%s5 + $0xc] sm:$0xf]
      %v604 = vld [vmem:[%s6] sm:$0x1]
      %v606 = vlaneseq
      %v607 = vshrl.u32 %v606, 7
      %v608 = vsub.s32 0, %v607
      %v609 = vrot.slane %v604, %v608
      %v615 = vunpack.c.l.b16 %v600
      %v616 = vunpack.c.l.b16 %v601
      %v617 = vunpack.c.l.b16 %v602
      %v618 = vunpack.c.l.b16 %v603
      %v619 = vpack.c.b16 %v616, %v615
      %v620 = vpack.c.b16 %v618, %v617
      %v624 = vsel %vm570, %v599, 0
      %626 = vmatprep.subr.bf16.mxu0 0
      %627 = vmatpush1.bf16.msra.mxu0 %v619
      %628 = vmatprep.subr.bf16.mxu0 0
      %629 = vmatpush1.bf16.msra.mxu0 %v620
      %630 = vmatprep.subr.bf16.mxu0 0
      %631 = vmatpush1.bf16.msra.mxu0 0
      %632 = vmatprep.subr.bf16.mxu0 0
      %633 = vmatpush1.bf16.msra.mxu0 0
      %634 = vmatprep.subr.bf16.mxu0 0
      %635 = vmatpush1.bf16.msra.mxu0 0
      %636 = vmatprep.subr.bf16.mxu0 0
      %637 = vmatpush1.bf16.msra.mxu0 0
      %638 = vmatprep.subr.bf16.mxu0 0
      %639 = vmatpush1.bf16.msra.mxu0 0
      %640 = vmatprep.subr.bf16.mxu0 0
      %641 = vmatpush1.bf16.msra.mxu0 0
      %642 = vmatprep.subr.bf16.mxu0 0
      %643 = vmatpush1.bf16.msra.mxu0 0
      %644 = vmatprep.subr.bf16.mxu0 0
      %645 = vmatpush1.bf16.msra.mxu0 0
      %646 = vmatprep.subr.bf16.mxu0 0
      %647 = vmatpush1.bf16.msra.mxu0 0
      %648 = vmatprep.subr.bf16.mxu0 0
      %649 = vmatpush1.bf16.msra.mxu0 0
      %650 = vmatprep.subr.bf16.mxu0 0
      %651 = vmatpush1.bf16.msra.mxu0 0
      %652 = vmatprep.subr.bf16.mxu0 0
      %653 = vmatpush1.bf16.msra.mxu0 0
      %654 = vmatprep.subr.bf16.mxu0 0
      %655 = vmatpush1.bf16.msra.mxu0 0
      %656 = vmatprep.subr.bf16.mxu0 0
      %657 = vmatpush1.bf16.msra.mxu0 0
      %658 = vmatprep.mubr.bf16.mxu0 0
      %659 = vmatmul.mubr.bf16.gmra.mrb[0].mxu0 %v624
      %v660 = vpop.f32.mrb[0].mxu0
      %v661 = vadd.f32 %v609, %v660
      %v662 = vpop.f32.mrb[0].mxu0
      %v663 = vpop.f32.mrb[0].mxu0
      %v664 = vpop.f32.mrb[0].mxu0
      %665 = vdwg.mxu0
      %667 = vrot.lane.b32.xlu0 %v661, 120
      %v668 = vpop.permute.xlu0 %667
      %670 = vrot.lane.b32.xlu0 %v661, 112
      %v671 = vpop.permute.xlu0 %670
      %673 = vrot.lane.b32.xlu0 %v661, 104
      %v674 = vpop.permute.xlu0 %673
      %v676 = vcombine.low %v661, %v671
      %v677 = vcombine.high %v661, %v671
      %v679 = vunpack.c.l.s4 1983009808
      %v680 = vunpack.c.0.s8 %v679
      %v681 = vlaneseq
      %v682 = vshrl.u32 %v681, 7
      %v683 = vsub.s32 %v680, %v682
      %v684 = vrot.slane %v676, %v683
      %v686 = vunpack.c.l.s4 1983009808
      %v687 = vunpack.c.0.s8 %v686
      %v688 = vlaneseq
      %v689 = vshrl.u32 %v688, 7
      %v690 = vsub.s32 %v687, %v689
      %v691 = vrot.slane %v677, %v690
      %v692 = vcombine.low %v668, %v674
      %v693 = vcombine.high %v668, %v674
      %v695 = vunpack.c.l.s4 1983009808
      %v696 = vunpack.c.0.s8 %v695
      %v697 = vlaneseq
      %v698 = vshrl.u32 %v697, 7
      %v699 = vsub.s32 %v696, %v698
      %v700 = vrot.slane %v692, %v699
      %v702 = vunpack.c.l.s4 1983009808
      %v703 = vunpack.c.0.s8 %v702
      %v704 = vlaneseq
      %v705 = vshrl.u32 %v704, 7
      %v706 = vsub.s32 %v703, %v705
      %v707 = vrot.slane %v693, %v706
      %v708 = vcombine.low %v684, %v700
      %v709 = vcombine.high %v684, %v700
      %v711 = vunpack.c.l.s4 1934713408
      %v712 = vunpack.c.0.s8 %v711
      %v713 = vlaneseq
      %v714 = vshrl.u32 %v713, 7
      %v715 = vsub.s32 %v712, %v714
      %v716 = vrot.slane %v708, %v715
      %v718 = vunpack.c.l.s4 1934713408
      %v719 = vunpack.c.0.s8 %v718
      %v720 = vlaneseq
      %v721 = vshrl.u32 %v720, 7
      %v722 = vsub.s32 %v719, %v721
      %v723 = vrot.slane %v709, %v722
      %v724 = vcombine.low %v691, %v707
      %v725 = vcombine.high %v691, %v707
      %v727 = vunpack.c.l.s4 1934713408
      %v728 = vunpack.c.0.s8 %v727
      %v729 = vlaneseq
      %v730 = vshrl.u32 %v729, 7
      %v731 = vsub.s32 %v728, %v730
      %v732 = vrot.slane %v724, %v731
      %v734 = vunpack.c.l.s4 1934713408
      %v735 = vunpack.c.0.s8 %v734
      %v736 = vlaneseq
      %v737 = vshrl.u32 %v736, 7
      %v738 = vsub.s32 %v735, %v737
      %v739 = vrot.slane %v725, %v738
      %v740 = vcombine.high %v716, 0.0
      %v741 = vcombine.high %v723, 0.0
      %v742 = vcombine.high %v732, 0.0
      %v743 = vcombine.high %v739, 0.0
      %v744 = vcombine.low %v716, %v723
      %v746 = vunpack.c.l.s4 1983009808
      %v747 = vunpack.c.0.s8 %v746
      %v748 = vlaneseq
      %v749 = vshrl.u32 %v748, 7
      %v750 = vsub.s32 %v747, %v749
      %v751 = vrot.slane %v744, %v750
      %v752 = vcombine.low %v740, %v741
      %v754 = vunpack.c.l.s4 1983009808
      %v755 = vunpack.c.0.s8 %v754
      %v756 = vlaneseq
      %v757 = vshrl.u32 %v756, 7
      %v758 = vsub.s32 %v755, %v757
      %v759 = vrot.slane %v752, %v758
      %v760 = vcombine.low %v732, %v739
      %v762 = vunpack.c.l.s4 1983009808
      %v763 = vunpack.c.0.s8 %v762
      %v764 = vlaneseq
      %v765 = vshrl.u32 %v764, 7
      %v766 = vsub.s32 %v763, %v765
      %v767 = vrot.slane %v760, %v766
      %v768 = vcombine.low %v742, %v743
      %v770 = vunpack.c.l.s4 1983009808
      %v771 = vunpack.c.0.s8 %v770
      %v772 = vlaneseq
      %v773 = vshrl.u32 %v772, 7
      %v774 = vsub.s32 %v771, %v773
      %v775 = vrot.slane %v768, %v774
      %v776 = vcombine.low %v751, %v759
      %v777 = vcombine.high %v751, %v759
      %v779 = vunpack.c.l.s4 1934713408
      %v780 = vunpack.c.0.s8 %v779
      %v781 = vlaneseq
      %v782 = vshrl.u32 %v781, 7
      %v783 = vsub.s32 %v780, %v782
      %v784 = vrot.slane %v776, %v783
      %v786 = vunpack.c.l.s4 1934713408
      %v787 = vunpack.c.0.s8 %v786
      %v788 = vlaneseq
      %v789 = vshrl.u32 %v788, 7
      %v790 = vsub.s32 %v787, %v789
      %v791 = vrot.slane %v777, %v790
      %v792 = vcombine.low %v767, %v775
      %v793 = vcombine.high %v767, %v775
      %v795 = vunpack.c.l.s4 1934713408
      %v796 = vunpack.c.0.s8 %v795
      %v797 = vlaneseq
      %v798 = vshrl.u32 %v797, 7
      %v799 = vsub.s32 %v796, %v798
      %v800 = vrot.slane %v792, %v799
      %v802 = vunpack.c.l.s4 1934713408
      %v803 = vunpack.c.0.s8 %v802
      %v804 = vlaneseq
      %v805 = vshrl.u32 %v804, 7
      %v806 = vsub.s32 %v803, %v805
      %v807 = vrot.slane %v793, %v806
      %v808 = vcombine.low %v784, %v800
      %v809 = vcombine.high %v784, %v800
      %v810 = vcombine.low %v791, %v807
      %v811 = vcombine.high %v791, %v807
      %v812 = vpack.c.bf16 %v808, %v808
      %v813 = vpack.c.bf16 %v809, %v809
      %v814 = vpack.c.bf16 %v810, %v810
      %v815 = vpack.c.bf16 %v811, %v811
      %v816 = vld [vmem:[%s552] sm:$0xf]
      %v817 = vld [vmem:[%s552 + $0x4] sm:$0xf]
      %v818 = vld [vmem:[%s552 + $0x8] sm:$0xf]
      %v819 = vld [vmem:[%s552 + $0xc] sm:$0xf]
      %v820 = vld [vmem:[%s552 + $0x10] sm:$0xf]
      %v821 = vld [vmem:[%s552 + $0x14] sm:$0xf]
      %v822 = vld [vmem:[%s552 + $0x18] sm:$0xf]
      %v823 = vld [vmem:[%s552 + $0x1c] sm:$0xf]
      %v824 = vld [vmem:[%s557] sm:$0xf]
      %v825 = vld [vmem:[%s557 + $0x4] sm:$0xf]
      %v826 = vld [vmem:[%s557 + $0x8] sm:$0xf]
      %v827 = vld [vmem:[%s557 + $0xc] sm:$0xf]
      %v828 = vld [vmem:[%s557 + $0x10] sm:$0xf]
      %v829 = vld [vmem:[%s557 + $0x14] sm:$0xf]
      %v830 = vld [vmem:[%s557 + $0x18] sm:$0xf]
      %v831 = vld [vmem:[%s557 + $0x1c] sm:$0xf]
      %v834 = vunpack.c.l.b16 %v816
      %v835 = vunpack.c.l.b16 %v817
      %v836 = vpack.c.b16 %v835, %v834
      %vm837 = vcmask 64512
      %v839 = vsel %vm837, %v812, 0
      %v842 = vsel %vm837, %v836, 0
      %844 = vmatprep.subr.bf16.mxu0 0
      %845 = vmatpush1.bf16.xpose.msra.mxu0 %v842
      %846 = vmatprep.subr.bf16.mxu0 0
      %847 = vmatpush1.bf16.xpose.msra.mxu0 0
      %848 = vmatprep.subr.bf16.mxu0 0
      %849 = vmatpush1.bf16.xpose.msra.mxu0 0
      %850 = vmatprep.subr.bf16.mxu0 0
      %851 = vmatpush1.bf16.xpose.msra.mxu0 0
      %852 = vmatprep.subr.bf16.mxu0 0
      %853 = vmatpush1.bf16.xpose.msra.mxu0 0
      %854 = vmatprep.subr.bf16.mxu0 0
      %855 = vmatpush1.bf16.xpose.msra.mxu0 0
      %856 = vmatprep.subr.bf16.mxu0 0
      %857 = vmatpush1.bf16.xpose.msra.mxu0 0
      %858 = vmatprep.subr.bf16.mxu0 0
      %859 = vmatpush1.bf16.xpose.msra.mxu0 0
      %860 = vmatprep.subr.bf16.mxu0 0
      %861 = vmatpush1.bf16.xpose.msra.mxu0 0
      %862 = vmatprep.subr.bf16.mxu0 0
      %863 = vmatpush1.bf16.xpose.msra.mxu0 0
      %864 = vmatprep.subr.bf16.mxu0 0
      %865 = vmatpush1.bf16.xpose.msra.mxu0 0
      %866 = vmatprep.subr.bf16.mxu0 0
      %867 = vmatpush1.bf16.xpose.msra.mxu0 0
      %868 = vmatprep.subr.bf16.mxu0 0
      %869 = vmatpush1.bf16.xpose.msra.mxu0 0
      %870 = vmatprep.subr.bf16.mxu0 0
      %871 = vmatpush1.bf16.xpose.msra.mxu0 0
      %872 = vmatprep.subr.bf16.mxu0 0
      %873 = vmatpush1.bf16.xpose.msra.mxu0 0
      %874 = vmatprep.subr.bf16.mxu0 0
      %875 = vmatpush1.bf16.xpose.msra.mxu0 0
      %876 = vmatprep.mubr.bf16.mxu0 0
      %877 = vmatmul.mubr.bf16.gmra.mrb[0].mxu0 %v839
      %v878 = vpop.f32.mrb[0].mxu0
      %v879 = vadd.f32 0.0, %v878
      %v880 = vpop.f32.mrb[0].mxu0
      %v881 = vpop.f32.mrb[0].mxu0
      %v882 = vpop.f32.mrb[0].mxu0
      %883 = vdwg.mxu0
      %v886 = vunpack.c.l.b16 %v818
      %v887 = vunpack.c.l.b16 %v819
      %v888 = vpack.c.b16 %v887, %v886
      %v890 = vsel %vm837, %v813, 0
      %v893 = vsel %vm837, %v888, 0
      %895 = vmatprep.subr.bf16.mxu0 0
      %896 = vmatpush1.bf16.xpose.msra.mxu0 %v893
      %897 = vmatprep.subr.bf16.mxu0 0
      %898 = vmatpush1.bf16.xpose.msra.mxu0 0
      %899 = vmatprep.subr.bf16.mxu0 0
      %900 = vmatpush1.bf16.xpose.msra.mxu0 0
      %901 = vmatprep.subr.bf16.mxu0 0
      %902 = vmatpush1.bf16.xpose.msra.mxu0 0
      %903 = vmatprep.subr.bf16.mxu0 0
      %904 = vmatpush1.bf16.xpose.msra.mxu0 0
      %905 = vmatprep.subr.bf16.mxu0 0
      %906 = vmatpush1.bf16.xpose.msra.mxu0 0
      %907 = vmatprep.subr.bf16.mxu0 0
      %908 = vmatpush1.bf16.xpose.msra.mxu0 0
      %909 = vmatprep.subr.bf16.mxu0 0
      %910 = vmatpush1.bf16.xpose.msra.mxu0 0
      %911 = vmatprep.subr.bf16.mxu0 0
      %912 = vmatpush1.bf16.xpose.msra.mxu0 0
      %913 = vmatprep.subr.bf16.mxu0 0
      %914 = vmatpush1.bf16.xpose.msra.mxu0 0
      %915 = vmatprep.subr.bf16.mxu0 0
      %916 = vmatpush1.bf16.xpose.msra.mxu0 0
      %917 = vmatprep.subr.bf16.mxu0 0
      %918 = vmatpush1.bf16.xpose.msra.mxu0 0
      %919 = vmatprep.subr.bf16.mxu0 0
      %920 = vmatpush1.bf16.xpose.msra.mxu0 0
      %921 = vmatprep.subr.bf16.mxu0 0
      %922 = vmatpush1.bf16.xpose.msra.mxu0 0
      %923 = vmatprep.subr.bf16.mxu0 0
      %924 = vmatpush1.bf16.xpose.msra.mxu0 0
      %925 = vmatprep.subr.bf16.mxu0 0
      %926 = vmatpush1.bf16.xpose.msra.mxu0 0
      %927 = vmatprep.mubr.bf16.mxu0 0
      %928 = vmatmul.mubr.bf16.gmra.mrb[0].mxu0 %v890
      %v929 = vpop.f32.mrb[0].mxu0
      %v930 = vadd.f32 0.0, %v929
      %v931 = vpop.f32.mrb[0].mxu0
      %v932 = vpop.f32.mrb[0].mxu0
      %v933 = vpop.f32.mrb[0].mxu0
      %934 = vdwg.mxu0
      %v937 = vunpack.c.l.b16 %v820
      %v938 = vunpack.c.l.b16 %v821
      %v939 = vpack.c.b16 %v938, %v937
      %v941 = vsel %vm837, %v814, 0
      %v944 = vsel %vm837, %v939, 0
      %946 = vmatprep.subr.bf16.mxu0 0
      %947 = vmatpush1.bf16.xpose.msra.mxu0 %v944
      %948 = vmatprep.subr.bf16.mxu0 0
      %949 = vmatpush1.bf16.xpose.msra.mxu0 0
      %950 = vmatprep.subr.bf16.mxu0 0
      %951 = vmatpush1.bf16.xpose.msra.mxu0 0
      %952 = vmatprep.subr.bf16.mxu0 0
      %953 = vmatpush1.bf16.xpose.msra.mxu0 0
      %954 = vmatprep.subr.bf16.mxu0 0
      %955 = vmatpush1.bf16.xpose.msra.mxu0 0
      %956 = vmatprep.subr.bf16.mxu0 0
      %957 = vmatpush1.bf16.xpose.msra.mxu0 0
      %958 = vmatprep.subr.bf16.mxu0 0
      %959 = vmatpush1.bf16.xpose.msra.mxu0 0
      %960 = vmatprep.subr.bf16.mxu0 0
      %961 = vmatpush1.bf16.xpose.msra.mxu0 0
      %962 = vmatprep.subr.bf16.mxu0 0
      %963 = vmatpush1.bf16.xpose.msra.mxu0 0
      %964 = vmatprep.subr.bf16.mxu0 0
      %965 = vmatpush1.bf16.xpose.msra.mxu0 0
      %966 = vmatprep.subr.bf16.mxu0 0
      %967 = vmatpush1.bf16.xpose.msra.mxu0 0
      %968 = vmatprep.subr.bf16.mxu0 0
      %969 = vmatpush1.bf16.xpose.msra.mxu0 0
      %970 = vmatprep.subr.bf16.mxu0 0
      %971 = vmatpush1.bf16.xpose.msra.mxu0 0
      %972 = vmatprep.subr.bf16.mxu0 0
      %973 = vmatpush1.bf16.xpose.msra.mxu0 0
      %974 = vmatprep.subr.bf16.mxu0 0
      %975 = vmatpush1.bf16.xpose.msra.mxu0 0
      %976 = vmatprep.subr.bf16.mxu0 0
      %977 = vmatpush1.bf16.xpose.msra.mxu0 0
      %978 = vmatprep.mubr.bf16.mxu0 0
      %979 = vmatmul.mubr.bf16.gmra.mrb[0].mxu0 %v941
      %v980 = vpop.f32.mrb[0].mxu0
      %v981 = vadd.f32 0.0, %v980
      %v982 = vpop.f32.mrb[0].mxu0
      %v983 = vpop.f32.mrb[0].mxu0
      %v984 = vpop.f32.mrb[0].mxu0
      %985 = vdwg.mxu0
      %v988 = vunpack.c.l.b16 %v822
      %v989 = vunpack.c.l.b16 %v823
      %v990 = vpack.c.b16 %v989, %v988
      %v992 = vsel %vm837, %v815, 0
      %v995 = vsel %vm837, %v990, 0
      %997 = vmatprep.subr.bf16.mxu0 0
      %998 = vmatpush1.bf16.xpose.msra.mxu0 %v995
      %999 = vmatprep.subr.bf16.mxu0 0
      %1000 = vmatpush1.bf16.xpose.msra.mxu0 0
      %1001 = vmatprep.subr.bf16.mxu0 0
      %1002 = vmatpush1.bf16.xpose.msra.mxu0 0
      %1003 = vmatprep.subr.bf16.mxu0 0
      %1004 = vmatpush1.bf16.xpose.msra.mxu0 0
      %1005 = vmatprep.subr.bf16.mxu0 0
      %1006 = vmatpush1.bf16.xpose.msra.mxu0 0
      %1007 = vmatprep.subr.bf16.mxu0 0
      %1008 = vmatpush1.bf16.xpose.msra.mxu0 0
      %1009 = vmatprep.subr.bf16.mxu0 0
      %1010 = vmatpush1.bf16.xpose.msra.mxu0 0
      %1011 = vmatprep.subr.bf16.mxu0 0
      %1012 = vmatpush1.bf16.xpose.msra.mxu0 0
      %1013 = vmatprep.subr.bf16.mxu0 0
      %1014 = vmatpush1.bf16.xpose.msra.mxu0 0
      %1015 = vmatprep.subr.bf16.mxu0 0
      %1016 = vmatpush1.bf16.xpose.msra.mxu0 0
      %1017 = vmatprep.subr.bf16.mxu0 0
      %1018 = vmatpush1.bf16.xpose.msra.mxu0 0
      %1019 = vmatprep.subr.bf16.mxu0 0
      %1020 = vmatpush1.bf16.xpose.msra.mxu0 0
      %1021 = vmatprep.subr.bf16.mxu0 0
      %1022 = vmatpush1.bf16.xpose.msra.mxu0 0
      %1023 = vmatprep.subr.bf16.mxu0 0
      %1024 = vmatpush1.bf16.xpose.msra.mxu0 0
      %1025 = vmatprep.subr.bf16.mxu0 0
      %1026 = vmatpush1.bf16.xpose.msra.mxu0 0
      %1027 = vmatprep.subr.bf16.mxu0 0
      %1028 = vmatpush1.bf16.xpose.msra.mxu0 0
      %1029 = vmatprep.mubr.bf16.mxu0 0
      %1030 = vmatmul.mubr.bf16.gmra.mrb[0].mxu0 %v992
      %v1031 = vpop.f32.mrb[0].mxu0
      %v1032 = vadd.f32 0.0, %v1031
      %v1033 = vpop.f32.mrb[0].mxu0
      %v1034 = vpop.f32.mrb[0].mxu0
      %v1035 = vpop.f32.mrb[0].mxu0
      %1036 = vdwg.mxu0
      %vm1037 = vcmask 130048
      %v1038 = vsel %vm1037, %v879, -inf
      %1039 = vmax.xlane.f32.xlu0 %v1038
      %v1040 = vpop.xlane.xlu0 %1039
      %v1041 = vsel %vm1037, %v930, -inf
      %1042 = vmax.xlane.f32.xlu0 %v1041
      %v1043 = vpop.xlane.xlu0 %1042
      %v1044 = vsel %vm1037, %v981, -inf
      %1045 = vmax.xlane.f32.xlu0 %v1044
      %v1046 = vpop.xlane.xlu0 %1045
      %v1047 = vsel %vm1037, %v1032, -inf
      %1048 = vmax.xlane.f32.xlu0 %v1047
      %v1049 = vpop.xlane.xlu0 %1048
      %v1050 = vsub.f32 %v879, %v1040
      %v1051 = vsub.f32 %v930, %v1043
      %v1052 = vsub.f32 %v981, %v1046
      %v1053 = vsub.f32 %v1032, %v1049
      %v1054 = vmul.f32 %v1050, 1.442695
      %v1055 = vpow.pop %v1054
      %v1056 = vmul.f32 %v1051, 1.442695
      %v1057 = vpow.pop %v1056
      %v1058 = vmul.f32 %v1052, 1.442695
      %v1059 = vpow.pop %v1058
      %v1060 = vmul.f32 %v1053, 1.442695
      %v1061 = vpow.pop %v1060
      %v1062 = vsel %vm1037, %v1055, 0.0
      %1063 = vadd.xlane.f32.xlu0 %v1062
      %v1064 = vpop.xlane.xlu0 %1063
      %v1065 = vsel %vm1037, %v1057, 0.0
      %1066 = vadd.xlane.f32.xlu0 %v1065
      %v1067 = vpop.xlane.xlu0 %1066
      %v1068 = vsel %vm1037, %v1059, 0.0
      %1069 = vadd.xlane.f32.xlu0 %v1068
      %v1070 = vpop.xlane.xlu0 %1069
      %v1071 = vsel %vm1037, %v1061, 0.0
      %1072 = vadd.xlane.f32.xlu0 %v1071
      %v1073 = vpop.xlane.xlu0 %1072
      %v1074 = vrcp.pop %v1064
      %v1075 = vrcp.pop %v1067
      %v1076 = vrcp.pop %v1070
      %v1077 = vrcp.pop %v1073
      %v1078 = vmul.f32 %v1055, %v1074
      %v1079 = vmul.f32 %v1057, %v1075
      %v1080 = vmul.f32 %v1059, %v1076
      %v1081 = vmul.f32 %v1061, %v1077
      %v1082 = vpack.c.bf16 %v1078, %v1078
      %v1083 = vpack.c.bf16 %v1079, %v1079
      %v1084 = vpack.c.bf16 %v1080, %v1080
      %v1085 = vpack.c.bf16 %v1081, %v1081
      %v1088 = vunpack.c.l.b16 %v824
      %v1089 = vunpack.c.l.b16 %v825
      %v1090 = vpack.c.b16 %v1089, %v1088
      %v1093 = vsel %vm1037, %v1082, 0
      %1095 = vmatprep.subr.bf16.mxu0 0
      %1096 = vmatpush1.bf16.msra.mxu0 %v1090
      %1097 = vmatprep.subr.bf16.mxu0 0
      %1098 = vmatpush1.bf16.msra.mxu0 0
      %1099 = vmatprep.subr.bf16.mxu0 0
      %1100 = vmatpush1.bf16.msra.mxu0 0
      %1101 = vmatprep.subr.bf16.mxu0 0
      %1102 = vmatpush1.bf16.msra.mxu0 0
      %1103 = vmatprep.subr.bf16.mxu0 0
      %1104 = vmatpush1.bf16.msra.mxu0 0
      %1105 = vmatprep.subr.bf16.mxu0 0
      %1106 = vmatpush1.bf16.msra.mxu0 0
      %1107 = vmatprep.subr.bf16.mxu0 0
      %1108 = vmatpush1.bf16.msra.mxu0 0
      %1109 = vmatprep.subr.bf16.mxu0 0
      %1110 = vmatpush1.bf16.msra.mxu0 0
      %1111 = vmatprep.subr.bf16.mxu0 0
      %1112 = vmatpush1.bf16.msra.mxu0 0
      %1113 = vmatprep.subr.bf16.mxu0 0
      %1114 = vmatpush1.bf16.msra.mxu0 0
      %1115 = vmatprep.subr.bf16.mxu0 0
      %1116 = vmatpush1.bf16.msra.mxu0 0
      %1117 = vmatprep.subr.bf16.mxu0 0
      %1118 = vmatpush1.bf16.msra.mxu0 0
      %1119 = vmatprep.subr.bf16.mxu0 0
      %1120 = vmatpush1.bf16.msra.mxu0 0
      %1121 = vmatprep.subr.bf16.mxu0 0
      %1122 = vmatpush1.bf16.msra.mxu0 0
      %1123 = vmatprep.subr.bf16.mxu0 0
      %1124 = vmatpush1.bf16.msra.mxu0 0
      %1125 = vmatprep.subr.bf16.mxu0 0
      %1126 = vmatpush1.bf16.msra.mxu0 0
      %1127 = vmatprep.mubr.bf16.mxu0 0
      %1128 = vmatmul.mubr.bf16.gmra.mrb[0].mxu0 %v1093
      %v1129 = vpop.f32.mrb[0].mxu0
      %v1130 = vadd.f32 0.0, %v1129
      %v1131 = vpop.f32.mrb[0].mxu0
      %v1132 = vpop.f32.mrb[0].mxu0
      %v1133 = vpop.f32.mrb[0].mxu0
      %1134 = vdwg.mxu0
      %v1137 = vunpack.c.l.b16 %v826
      %v1138 = vunpack.c.l.b16 %v827
      %v1139 = vpack.c.b16 %v1138, %v1137
      %v1142 = vsel %vm1037, %v1083, 0
      %1144 = vmatprep.subr.bf16.mxu0 0
      %1145 = vmatpush1.bf16.msra.mxu0 %v1139
      %1146 = vmatprep.subr.bf16.mxu0 0
      %1147 = vmatpush1.bf16.msra.mxu0 0
      %1148 = vmatprep.subr.bf16.mxu0 0
      %1149 = vmatpush1.bf16.msra.mxu0 0
      %1150 = vmatprep.subr.bf16.mxu0 0
      %1151 = vmatpush1.bf16.msra.mxu0 0
      %1152 = vmatprep.subr.bf16.mxu0 0
      %1153 = vmatpush1.bf16.msra.mxu0 0
      %1154 = vmatprep.subr.bf16.mxu0 0
      %1155 = vmatpush1.bf16.msra.mxu0 0
      %1156 = vmatprep.subr.bf16.mxu0 0
      %1157 = vmatpush1.bf16.msra.mxu0 0
      %1158 = vmatprep.subr.bf16.mxu0 0
      %1159 = vmatpush1.bf16.msra.mxu0 0
      %1160 = vmatprep.subr.bf16.mxu0 0
      %1161 = vmatpush1.bf16.msra.mxu0 0
      %1162 = vmatprep.subr.bf16.mxu0 0
      %1163 = vmatpush1.bf16.msra.mxu0 0
      %1164 = vmatprep.subr.bf16.mxu0 0
      %1165 = vmatpush1.bf16.msra.mxu0 0
      %1166 = vmatprep.subr.bf16.mxu0 0
      %1167 = vmatpush1.bf16.msra.mxu0 0
      %1168 = vmatprep.subr.bf16.mxu0 0
      %1169 = vmatpush1.bf16.msra.mxu0 0
      %1170 = vmatprep.subr.bf16.mxu0 0
      %1171 = vmatpush1.bf16.msra.mxu0 0
      %1172 = vmatprep.subr.bf16.mxu0 0
      %1173 = vmatpush1.bf16.msra.mxu0 0
      %1174 = vmatprep.subr.bf16.mxu0 0
      %1175 = vmatpush1.bf16.msra.mxu0 0
      %1176 = vmatprep.mubr.bf16.mxu0 0
      %1177 = vmatmul.mubr.bf16.gmra.mrb[0].mxu0 %v1142
      %v1178 = vpop.f32.mrb[0].mxu0
      %v1179 = vadd.f32 0.0, %v1178
      %v1180 = vpop.f32.mrb[0].mxu0
      %v1181 = vpop.f32.mrb[0].mxu0
      %v1182 = vpop.f32.mrb[0].mxu0
      %1183 = vdwg.mxu0
      %v1186 = vunpack.c.l.b16 %v828
      %v1187 = vunpack.c.l.b16 %v829
      %v1188 = vpack.c.b16 %v1187, %v1186
      %v1191 = vsel %vm1037, %v1084, 0
      %1193 = vmatprep.subr.bf16.mxu0 0
      %1194 = vmatpush1.bf16.msra.mxu0 %v1188
      %1195 = vmatprep.subr.bf16.mxu0 0
      %1196 = vmatpush1.bf16.msra.mxu0 0
      %1197 = vmatprep.subr.bf16.mxu0 0
      %1198 = vmatpush1.bf16.msra.mxu0 0
      %1199 = vmatprep.subr.bf16.mxu0 0
      %1200 = vmatpush1.bf16.msra.mxu0 0
      %1201 = vmatprep.subr.bf16.mxu0 0
      %1202 = vmatpush1.bf16.msra.mxu0 0
      %1203 = vmatprep.subr.bf16.mxu0 0
      %1204 = vmatpush1.bf16.msra.mxu0 0
      %1205 = vmatprep.subr.bf16.mxu0 0
      %1206 = vmatpush1.bf16.msra.mxu0 0
      %1207 = vmatprep.subr.bf16.mxu0 0
      %1208 = vmatpush1.bf16.msra.mxu0 0
      %1209 = vmatprep.subr.bf16.mxu0 0
      %1210 = vmatpush1.bf16.msra.mxu0 0
      %1211 = vmatprep.subr.bf16.mxu0 0
      %1212 = vmatpush1.bf16.msra.mxu0 0
      %1213 = vmatprep.subr.bf16.mxu0 0
      %1214 = vmatpush1.bf16.msra.mxu0 0
      %1215 = vmatprep.subr.bf16.mxu0 0
      %1216 = vmatpush1.bf16.msra.mxu0 0
      %1217 = vmatprep.subr.bf16.mxu0 0
      %1218 = vmatpush1.bf16.msra.mxu0 0
      %1219 = vmatprep.subr.bf16.mxu0 0
      %1220 = vmatpush1.bf16.msra.mxu0 0
      %1221 = vmatprep.subr.bf16.mxu0 0
      %1222 = vmatpush1.bf16.msra.mxu0 0
      %1223 = vmatprep.subr.bf16.mxu0 0
      %1224 = vmatpush1.bf16.msra.mxu0 0
      %1225 = vmatprep.mubr.bf16.mxu0 0
      %1226 = vmatmul.mubr.bf16.gmra.mrb[0].mxu0 %v1191
      %v1227 = vpop.f32.mrb[0].mxu0
      %v1228 = vadd.f32 0.0, %v1227
      %v1229 = vpop.f32.mrb[0].mxu0
      %v1230 = vpop.f32.mrb[0].mxu0
      %v1231 = vpop.f32.mrb[0].mxu0
      %1232 = vdwg.mxu0
      %v1235 = vunpack.c.l.b16 %v830
      %v1236 = vunpack.c.l.b16 %v831
      %v1237 = vpack.c.b16 %v1236, %v1235
      %v1240 = vsel %vm1037, %v1085, 0
      %1242 = vmatprep.subr.bf16.mxu0 0
      %1243 = vmatpush1.bf16.msra.mxu0 %v1237
      %1244 = vmatprep.subr.bf16.mxu0 0
      %1245 = vmatpush1.bf16.msra.mxu0 0
      %1246 = vmatprep.subr.bf16.mxu0 0
      %1247 = vmatpush1.bf16.msra.mxu0 0
      %1248 = vmatprep.subr.bf16.mxu0 0
      %1249 = vmatpush1.bf16.msra.mxu0 0
      %1250 = vmatprep.subr.bf16.mxu0 0
      %1251 = vmatpush1.bf16.msra.mxu0 0
      %1252 = vmatprep.subr.bf16.mxu0 0
      %1253 = vmatpush1.bf16.msra.mxu0 0
      %1254 = vmatprep.subr.bf16.mxu0 0
      %1255 = vmatpush1.bf16.msra.mxu0 0
      %1256 = vmatprep.subr.bf16.mxu0 0
      %1257 = vmatpush1.bf16.msra.mxu0 0
      %1258 = vmatprep.subr.bf16.mxu0 0
      %1259 = vmatpush1.bf16.msra.mxu0 0
      %1260 = vmatprep.subr.bf16.mxu0 0
      %1261 = vmatpush1.bf16.msra.mxu0 0
      %1262 = vmatprep.subr.bf16.mxu0 0
      %1263 = vmatpush1.bf16.msra.mxu0 0
      %1264 = vmatprep.subr.bf16.mxu0 0
      %1265 = vmatpush1.bf16.msra.mxu0 0
      %1266 = vmatprep.subr.bf16.mxu0 0
      %1267 = vmatpush1.bf16.msra.mxu0 0
      %1268 = vmatprep.subr.bf16.mxu0 0
      %1269 = vmatpush1.bf16.msra.mxu0 0
      %1270 = vmatprep.subr.bf16.mxu0 0
      %1271 = vmatpush1.bf16.msra.mxu0 0
      %1272 = vmatprep.subr.bf16.mxu0 0
      %1273 = vmatpush1.bf16.msra.mxu0 0
      %1274 = vmatprep.mubr.bf16.mxu0 0
      %1275 = vmatmul.mubr.bf16.gmra.mrb[0].mxu0 %v1240
      %v1276 = vpop.f32.mrb[0].mxu0
      %v1277 = vadd.f32 0.0, %v1276
      %v1278 = vpop.f32.mrb[0].mxu0
      %v1279 = vpop.f32.mrb[0].mxu0
      %v1280 = vpop.f32.mrb[0].mxu0
      %1281 = vdwg.mxu0
      %v1282 = vcombine.low %v1130, %v1228
      %v1283 = vcombine.high %v1130, %v1228
      %v1285 = vunpack.c.l.s4 1983009808
      %v1286 = vunpack.c.0.s8 %v1285
      %v1287 = vlaneseq
      %v1288 = vshrl.u32 %v1287, 7
      %v1289 = vsub.s32 %v1286, %v1288
      %v1290 = vrot.slane %v1282, %v1289
      %v1292 = vunpack.c.l.s4 1983009808
      %v1293 = vunpack.c.0.s8 %v1292
      %v1294 = vlaneseq
      %v1295 = vshrl.u32 %v1294, 7
      %v1296 = vsub.s32 %v1293, %v1295
      %v1297 = vrot.slane %v1283, %v1296
      %v1298 = vcombine.low %v1179, %v1277
      %v1299 = vcombine.high %v1179, %v1277
      %v1301 = vunpack.c.l.s4 1983009808
      %v1302 = vunpack.c.0.s8 %v1301
      %v1303 = vlaneseq
      %v1304 = vshrl.u32 %v1303, 7
      %v1305 = vsub.s32 %v1302, %v1304
      %v1306 = vrot.slane %v1298, %v1305
      %v1308 = vunpack.c.l.s4 1983009808
      %v1309 = vunpack.c.0.s8 %v1308
      %v1310 = vlaneseq
      %v1311 = vshrl.u32 %v1310, 7
      %v1312 = vsub.s32 %v1309, %v1311
      %v1313 = vrot.slane %v1299, %v1312
      %v1314 = vcombine.low %v1290, %v1306
      %v1315 = vcombine.high %v1290, %v1306
      %v1317 = vunpack.c.l.s4 1934713408
      %v1318 = vunpack.c.0.s8 %v1317
      %v1319 = vlaneseq
      %v1320 = vshrl.u32 %v1319, 7
      %v1321 = vsub.s32 %v1318, %v1320
      %v1322 = vrot.slane %v1314, %v1321
      %v1324 = vunpack.c.l.s4 1934713408
      %v1325 = vunpack.c.0.s8 %v1324
      %v1326 = vlaneseq
      %v1327 = vshrl.u32 %v1326, 7
      %v1328 = vsub.s32 %v1325, %v1327
      %v1329 = vrot.slane %v1315, %v1328
      %v1330 = vcombine.low %v1297, %v1313
      %v1331 = vcombine.high %v1297, %v1313
      %v1333 = vunpack.c.l.s4 1934713408
      %v1334 = vunpack.c.0.s8 %v1333
      %v1335 = vlaneseq
      %v1336 = vshrl.u32 %v1335, 7
      %v1337 = vsub.s32 %v1334, %v1336
      %v1338 = vrot.slane %v1330, %v1337
      %v1340 = vunpack.c.l.s4 1934713408
      %v1341 = vunpack.c.0.s8 %v1340
      %v1342 = vlaneseq
      %v1343 = vshrl.u32 %v1342, 7
      %v1344 = vsub.s32 %v1341, %v1343
      %v1345 = vrot.slane %v1331, %v1344
      %v1346 = vcombine.high %v1322, 0.0
      %v1347 = vcombine.high %v1329, 0.0
      %v1348 = vcombine.high %v1338, 0.0
      %v1349 = vcombine.high %v1345, 0.0
      %v1350 = vcombine.low %v1322, %v1329
      %v1352 = vunpack.c.l.s4 1983009808
      %v1353 = vunpack.c.0.s8 %v1352
      %v1354 = vlaneseq
      %v1355 = vshrl.u32 %v1354, 7
      %v1356 = vsub.s32 %v1353, %v1355
      %v1357 = vrot.slane %v1350, %v1356
      %v1358 = vcombine.low %v1346, %v1347
      %v1360 = vunpack.c.l.s4 1983009808
      %v1361 = vunpack.c.0.s8 %v1360
      %v1362 = vlaneseq
      %v1363 = vshrl.u32 %v1362, 7
      %v1364 = vsub.s32 %v1361, %v1363
      %v1365 = vrot.slane %v1358, %v1364
      %v1366 = vcombine.low %v1338, %v1345
      %v1368 = vunpack.c.l.s4 1983009808
      %v1369 = vunpack.c.0.s8 %v1368
      %v1370 = vlaneseq
      %v1371 = vshrl.u32 %v1370, 7
      %v1372 = vsub.s32 %v1369, %v1371
      %v1373 = vrot.slane %v1366, %v1372
      %v1374 = vcombine.low %v1348, %v1349
      %v1376 = vunpack.c.l.s4 1983009808
      %v1377 = vunpack.c.0.s8 %v1376
      %v1378 = vlaneseq
      %v1379 = vshrl.u32 %v1378, 7
      %v1380 = vsub.s32 %v1377, %v1379
      %v1381 = vrot.slane %v1374, %v1380
      %v1382 = vcombine.low %v1357, %v1365
      %v1383 = vcombine.high %v1357, %v1365
      %v1385 = vunpack.c.l.s4 1934713408
      %v1386 = vunpack.c.0.s8 %v1385
      %v1387 = vlaneseq
      %v1388 = vshrl.u32 %v1387, 7
      %v1389 = vsub.s32 %v1386, %v1388
      %v1390 = vrot.slane %v1382, %v1389
      %v1392 = vunpack.c.l.s4 1934713408
      %v1393 = vunpack.c.0.s8 %v1392
      %v1394 = vlaneseq
      %v1395 = vshrl.u32 %v1394, 7
      %v1396 = vsub.s32 %v1393, %v1395
      %v1397 = vrot.slane %v1383, %v1396
      %v1398 = vcombine.low %v1373, %v1381
      %v1399 = vcombine.high %v1373, %v1381
      %v1401 = vunpack.c.l.s4 1934713408
      %v1402 = vunpack.c.0.s8 %v1401
      %v1403 = vlaneseq
      %v1404 = vshrl.u32 %v1403, 7
      %v1405 = vsub.s32 %v1402, %v1404
      %v1406 = vrot.slane %v1398, %v1405
      %v1408 = vunpack.c.l.s4 1934713408
      %v1409 = vunpack.c.0.s8 %v1408
      %v1410 = vlaneseq
      %v1411 = vshrl.u32 %v1410, 7
      %v1412 = vsub.s32 %v1409, %v1411
      %v1413 = vrot.slane %v1399, %v1412
      %v1414 = vcombine.low %v1390, %v1406
      %v1415 = vcombine.high %v1390, %v1406
      %v1416 = vcombine.low %v1397, %v1413
      %v1417 = vcombine.high %v1397, %v1413
      %1419 = vrot.lane.b32.xlu0 %v1415, 8
      %v1420 = vpop.permute.xlu0 %1419
      %1423 = vrot.lane.b32.xlu0 %v1416, 16
      %v1424 = vpop.permute.xlu0 %1423
      %1427 = vrot.lane.b32.xlu0 %v1417, 24
      %v1428 = vpop.permute.xlu0 %1427
      %v1430 = vsel %vm837, %v1414, %v1420
      %v1431 = vsel %vm1037, %v1430, %v1424
      %vm1432 = vcmask 195584
      %v1433 = vsel %vm1432, %v1431, %v1428
      %v1434 = vpack.c.bf16 %v1433, %v1433
      %v1435 = vld [vmem:[%s7] sm:$0xf]
      %v1436 = vld [vmem:[%s7 + $0x4] sm:$0xf]
      %v1437 = vld [vmem:[%s7 + $0x8] sm:$0xf]
      %v1438 = vld [vmem:[%s7 + $0xc] sm:$0xf]
      %v1439 = vld [vmem:[%s8] sm:$0x1]
      %v1441 = vlaneseq
      %v1442 = vshrl.u32 %v1441, 7
      %v1443 = vsub.s32 0, %v1442
      %v1444 = vrot.slane %v1439, %v1443
      %v1450 = vunpack.c.l.b16 %v1435
      %v1451 = vunpack.c.l.b16 %v1436
      %v1452 = vunpack.c.l.b16 %v1437
      %v1453 = vunpack.c.l.b16 %v1438
      %v1454 = vpack.c.b16 %v1451, %v1450
      %v1455 = vpack.c.b16 %v1453, %v1452
      %v1459 = vsel %vm570, %v1434, 0
      %1461 = vmatprep.subr.bf16.mxu0 0
      %1462 = vmatpush1.bf16.msra.mxu0 %v1454
      %1463 = vmatprep.subr.bf16.mxu0 0
      %1464 = vmatpush1.bf16.msra.mxu0 %v1455
      %1465 = vmatprep.subr.bf16.mxu0 0
      %1466 = vmatpush1.bf16.msra.mxu0 0
      %1467 = vmatprep.subr.bf16.mxu0 0
      %1468 = vmatpush1.bf16.msra.mxu0 0
      %1469 = vmatprep.subr.bf16.mxu0 0
      %1470 = vmatpush1.bf16.msra.mxu0 0
      %1471 = vmatprep.subr.bf16.mxu0 0
      %1472 = vmatpush1.bf16.msra.mxu0 0
      %1473 = vmatprep.subr.bf16.mxu0 0
      %1474 = vmatpush1.bf16.msra.mxu0 0
      %1475 = vmatprep.subr.bf16.mxu0 0
      %1476 = vmatpush1.bf16.msra.mxu0 0
      %1477 = vmatprep.subr.bf16.mxu0 0
      %1478 = vmatpush1.bf16.msra.mxu0 0
      %1479 = vmatprep.subr.bf16.mxu0 0
      %1480 = vmatpush1.bf16.msra.mxu0 0
      %1481 = vmatprep.subr.bf16.mxu0 0
      %1482 = vmatpush1.bf16.msra.mxu0 0
      %1483 = vmatprep.subr.bf16.mxu0 0
      %1484 = vmatpush1.bf16.msra.mxu0 0
      %1485 = vmatprep.subr.bf16.mxu0 0
      %1486 = vmatpush1.bf16.msra.mxu0 0
      %1487 = vmatprep.subr.bf16.mxu0 0
      %1488 = vmatpush1.bf16.msra.mxu0 0
      %1489 = vmatprep.subr.bf16.mxu0 0
      %1490 = vmatpush1.bf16.msra.mxu0 0
      %1491 = vmatprep.subr.bf16.mxu0 0
      %1492 = vmatpush1.bf16.msra.mxu0 0
      %1493 = vmatprep.mubr.bf16.mxu0 0
      %1494 = vmatmul.mubr.bf16.gmra.mrb[0].mxu0 %v1459
      %v1495 = vpop.f32.mrb[0].mxu0
      %v1496 = vadd.f32 %v1444, %v1495
      %v1497 = vpop.f32.mrb[0].mxu0
      %v1498 = vpop.f32.mrb[0].mxu0
      %v1499 = vpop.f32.mrb[0].mxu0
      %1500 = vdwg.mxu0
      %v1501 = vadd.f32 %v567, %v1496
      %v1502 = vld [vmem:[%s9] sm:$0x1]
      %v1503 = vld [vmem:[%s10] sm:$0x1]
      %v1504 = vsel %vm570, %v1501, 0.0
      %1505 = vadd.xlane.f32.xlu0 %v1504
      %v1506 = vpop.xlane.xlu0 %1505
      %v1507 = vmul.f32 %v1506, %v574
      %v1508 = vsub.f32 %v1501, %v1507
      %v1509 = vmul.f32 %v1508, %v1508
      %v1510 = vsel %vm570, %v1509, 0.0
      %1511 = vadd.xlane.f32.xlu0 %v1510
      %v1512 = vpop.xlane.xlu0 %1511
      %v1513 = vmul.f32 %v1512, %v574
      %v1514 = vadd.f32 %v1513, 1e-05
      %v1515 = vrsqrt.pop %v1514
      %v1516 = vmul.f32 %v1508, %v1515
      %v1518 = vlaneseq
      %v1519 = vshrl.u32 %v1518, 7
      %v1520 = vsub.s32 0, %v1519
      %v1521 = vrot.slane %v1502, %v1520
      %v1523 = vmul.f32 %v1516, %v1521
      %v1525 = vlaneseq
      %v1526 = vshrl.u32 %v1525, 7
      %v1527 = vsub.s32 0, %v1526
      %v1528 = vrot.slane %v1503, %v1527
      %v1530 = vadd.f32 %v1523, %v1528
      %v1531 = vpack.c.bf16 %v1530, %v1530
      %v1532 = vld [vmem:[%s11] sm:$0xf]
      %v1533 = vld [vmem:[%s11 + $0x4] sm:$0xf]
      %v1534 = vld [vmem:[%s11 + $0x8] sm:$0xf]
      %v1535 = vld [vmem:[%s11 + $0xc] sm:$0xf]
      %v1536 = vld [vmem:[%s12] sm:$0x1]
      %v1538 = vlaneseq
      %v1539 = vshrl.u32 %v1538, 7
      %v1540 = vsub.s32 0, %v1539
      %v1541 = vrot.slane %v1536, %v1540
      %v1547 = vunpack.c.l.b16 %v1532
      %v1548 = vunpack.c.l.b16 %v1533
      %v1549 = vunpack.c.l.b16 %v1534
      %v1550 = vunpack.c.l.b16 %v1535
      %v1551 = vpack.c.b16 %v1548, %v1547
      %v1552 = vpack.c.b16 %v1550, %v1549
      %v1556 = vsel %vm570, %v1531, 0
      %1558 = vmatprep.subr.bf16.mxu0 0
      %1559 = vmatpush1.bf16.msra.mxu0 %v1551
      %1560 = vmatprep.subr.bf16.mxu0 0
      %1561 = vmatpush1.bf16.msra.mxu0 %v1552
      %1562 = vmatprep.subr.bf16.mxu0 0
      %1563 = vmatpush1.bf16.msra.mxu0 0
      %1564 = vmatprep.subr.bf16.mxu0 0
      %1565 = vmatpush1.bf16.msra.mxu0 0
      %1566 = vmatprep.subr.bf16.mxu0 0
      %1567 = vmatpush1.bf16.msra.mxu0 0
      %1568 = vmatprep.subr.bf16.mxu0 0
      %1569 = vmatpush1.bf16.msra.mxu0 0
      %1570 = vmatprep.subr.bf16.mxu0 0
      %1571 = vmatpush1.bf16.msra.mxu0 0
      %1572 = vmatprep.subr.bf16.mxu0 0
      %1573 = vmatpush1.bf16.msra.mxu0 0
      %1574 = vmatprep.subr.bf16.mxu0 0
      %1575 = vmatpush1.bf16.msra.mxu0 0
      %1576 = vmatprep.subr.bf16.mxu0 0
      %1577 = vmatpush1.bf16.msra.mxu0 0
      %1578 = vmatprep.subr.bf16.mxu0 0
      %1579 = vmatpush1.bf16.msra.mxu0 0
      %1580 = vmatprep.subr.bf16.mxu0 0
      %1581 = vmatpush1.bf16.msra.mxu0 0
      %1582 = vmatprep.subr.bf16.mxu0 0
      %1583 = vmatpush1.bf16.msra.mxu0 0
      %1584 = vmatprep.subr.bf16.mxu0 0
      %1585 = vmatpush1.bf16.msra.mxu0 0
      %1586 = vmatprep.subr.bf16.mxu0 0
      %1587 = vmatpush1.bf16.msra.mxu0 0
      %1588 = vmatprep.subr.bf16.mxu0 0
      %1589 = vmatpush1.bf16.msra.mxu0 0
      %1590 = vmatprep.mubr.bf16.mxu0 0
      %1591 = vmatmul.mubr.bf16.gmra.mrb[0].mxu0 %v1556
      %v1592 = vpop.f32.mrb[0].mxu0
      %v1593 = vadd.f32 %v1541, %v1592
      %v1594 = vpop.f32.mrb[0].mxu0
      %v1595 = vpop.f32.mrb[0].mxu0
      %v1596 = vpop.f32.mrb[0].mxu0
      %1597 = vdwg.mxu0
      %v1598 = vmul.f32 %v1593, 1.702
      %v1599 = vsub.f32 0.0, %v1598
      %v1600 = vmul.f32 %v1599, 1.442695
      %v1601 = vpow.pop %v1600
      %v1602 = vadd.f32 %v1601, 1.0
      %v1603 = vrcp.pop %v1602
      %v1604 = vmul.f32 %v1593, %v1603
      %v1605 = vpack.c.bf16 %v1604, %v1604
      %v1606 = vld [vmem:[%s13] sm:$0xf]
      %v1607 = vld [vmem:[%s13 + $0x4] sm:$0xf]
      %v1608 = vld [vmem:[%s13 + $0x8] sm:$0xf]
      %v1609 = vld [vmem:[%s13 + $0xc] sm:$0xf]
      %v1610 = vld [vmem:[%s13 + $0x10] sm:$0xf]
      %v1611 = vld [vmem:[%s13 + $0x14] sm:$0xf]
      %v1612 = vld [vmem:[%s13 + $0x18] sm:$0xf]
      %v1613 = vld [vmem:[%s13 + $0x1c] sm:$0xf]
      %v1614 = vld [vmem:[%s13 + $0x20] sm:$0xf]
      %v1615 = vld [vmem:[%s13 + $0x24] sm:$0xf]
      %v1616 = vld [vmem:[%s13 + $0x28] sm:$0xf]
      %v1617 = vld [vmem:[%s13 + $0x2c] sm:$0xf]
      %v1618 = vld [vmem:[%s13 + $0x30] sm:$0xf]
      %v1619 = vld [vmem:[%s13 + $0x34] sm:$0xf]
      %v1620 = vld [vmem:[%s13 + $0x38] sm:$0xf]
      %v1621 = vld [vmem:[%s13 + $0x3c] sm:$0xf]
      %v1622 = vld [vmem:[%s14] sm:$0x1]
      %v1624 = vlaneseq
      %v1625 = vshrl.u32 %v1624, 7
      %v1626 = vsub.s32 0, %v1625
      %v1627 = vrot.slane %v1622, %v1626
      %v1645 = vunpack.c.l.b16 %v1606
      %v1646 = vunpack.c.l.b16 %v1607
      %v1647 = vunpack.c.l.b16 %v1608
      %v1648 = vunpack.c.l.b16 %v1609
      %v1649 = vunpack.c.l.b16 %v1610
      %v1650 = vunpack.c.l.b16 %v1611
      %v1651 = vunpack.c.l.b16 %v1612
      %v1652 = vunpack.c.l.b16 %v1613
      %v1653 = vunpack.c.l.b16 %v1614
      %v1654 = vunpack.c.l.b16 %v1615
      %v1655 = vunpack.c.l.b16 %v1616
      %v1656 = vunpack.c.l.b16 %v1617
      %v1657 = vunpack.c.l.b16 %v1618
      %v1658 = vunpack.c.l.b16 %v1619
      %v1659 = vunpack.c.l.b16 %v1620
      %v1660 = vunpack.c.l.b16 %v1621
      %v1661 = vpack.c.b16 %v1646, %v1645
      %v1662 = vpack.c.b16 %v1648, %v1647
      %v1663 = vpack.c.b16 %v1650, %v1649
      %v1664 = vpack.c.b16 %v1652, %v1651
      %v1665 = vpack.c.b16 %v1654, %v1653
      %v1666 = vpack.c.b16 %v1656, %v1655
      %v1667 = vpack.c.b16 %v1658, %v1657
      %v1668 = vpack.c.b16 %v1660, %v1659
      %1677 = vmatprep.subr.bf16.mxu0 0
      %1678 = vmatpush1.bf16.msra.mxu0 %v1661
      %1679 = vmatprep.subr.bf16.mxu0 0
      %1680 = vmatpush1.bf16.msra.mxu0 %v1662
      %1681 = vmatprep.subr.bf16.mxu0 0
      %1682 = vmatpush1.bf16.msra.mxu0 %v1663
      %1683 = vmatprep.subr.bf16.mxu0 0
      %1684 = vmatpush1.bf16.msra.mxu0 %v1664
      %1685 = vmatprep.subr.bf16.mxu0 0
      %1686 = vmatpush1.bf16.msra.mxu0 %v1665
      %1687 = vmatprep.subr.bf16.mxu0 0
      %1688 = vmatpush1.bf16.msra.mxu0 %v1666
      %1689 = vmatprep.subr.bf16.mxu0 0
      %1690 = vmatpush1.bf16.msra.mxu0 %v1667
      %1691 = vmatprep.subr.bf16.mxu0 0
      %1692 = vmatpush1.bf16.msra.mxu0 %v1668
      %1693 = vmatprep.subr.bf16.mxu0 0
      %1694 = vmatpush1.bf16.msra.mxu0 0
      %1695 = vmatprep.subr.bf16.mxu0 0
      %1696 = vmatpush1.bf16.msra.mxu0 0
      %1697 = vmatprep.subr.bf16.mxu0 0
      %1698 = vmatpush1.bf16.msra.mxu0 0
      %1699 = vmatprep.subr.bf16.mxu0 0
      %1700 = vmatpush1.bf16.msra.mxu0 0
      %1701 = vmatprep.subr.bf16.mxu0 0
      %1702 = vmatpush1.bf16.msra.mxu0 0
      %1703 = vmatprep.subr.bf16.mxu0 0
      %1704 = vmatpush1.bf16.msra.mxu0 0
      %1705 = vmatprep.subr.bf16.mxu0 0
      %1706 = vmatpush1.bf16.msra.mxu0 0
      %1707 = vmatprep.subr.bf16.mxu0 0
      %1708 = vmatpush1.bf16.msra.mxu0 0
      %1709 = vmatprep.mubr.bf16.mxu0 0
      %1710 = vmatmul.mubr.bf16.gmra.mrb[0].mxu0 %v1605
      %v1711 = vpop.f32.mrb[0].mxu0
      %v1712 = vadd.f32 %v1627, %v1711
      %v1713 = vpop.f32.mrb[0].mxu0
      %v1714 = vpop.f32.mrb[0].mxu0
      %v1715 = vpop.f32.mrb[0].mxu0
      %1716 = vdwg.mxu0
      %v1717 = vadd.f32 %v1501, %v1712
      %1718 = vst.msk [vmem:[%s565] sm:$0xff] %vm570, %v1717
      %p1719 = scmp.lt.s32.totalorder %s30, 1
      %s1720 = scalar_select %p1719, %s30, 1
      %p1721 = scmp.lt.s32.totalorder %s31, 1
      %s1722 = scalar_select %p1721, %s31, 1
      %s1723 = smul.addr %s1720, 2
      %s1724 = sadd.s32 %s1722, %s1723
      %s1725 = smul.addr %s1724, 8
      %s1726 = scalar_lea.vmem %s15, %s1725
      // Predicated region
      $region81: #{transformer_forward.5} parent=79 // pred_check
        %p1727 = pneg %p390
      $region82: #{transformer_forward.5} parent=79 // pred_check_branch
        %1729 = sbr.rel (%p1727) target = $region84
      $region83: #{transformer_forward.5} parent=79 // pred_region
        _
      $region84: #{transformer_forward.5} parent=79 // pred_fallthru
        _
    $region80: #{transformer_forward.5} parent=5 // pred_fallthru
      _
    %p1730 = scmp.le.s32.totalorder 2, %s21
    // Predicated region
    $region85: #{transformer_forward.5} parent=5 // pred_check
      %p1731 = pneg %p1730
    $region86: #{transformer_forward.5} parent=5 // pred_check_branch
      %1733 = sbr.rel (%p1731) target = $region88
    $region87: #{transformer_forward.5} parent=5 // pred_region
      %s1734 = ssub.s32 %s21, 2
      // Predicated region
      $region89: #{transformer_forward.5} parent=87 // pred_check
        %p1735 = pneg %p396
      $region90: #{transformer_forward.5} parent=87 // pred_check_branch
        %1737 = sbr.rel (%p1735) target = $region92
      $region91: #{transformer_forward.5} parent=87 // pred_region
        %p1738 = scmp.lt.s32.totalorder %s32, 1
        %s1739 = scalar_select %p1738, %s32, 1
        %p1740 = scmp.lt.s32.totalorder %s33, 1
        %s1741 = scalar_select %p1740, %s33, 1
        %s1742 = smul.addr %s1739, 2
        %s1743 = sadd.s32 %s1741, %s1742
        %s1744 = smul.addr %s1743, 8
        %s1745 = scalar_lea.vmem %s15, %s1744
      $region92: #{transformer_forward.5} parent=87 // pred_fallthru
        _
    $region88: #{transformer_forward.5} parent=5 // pred_fallthru
      _
  $region6: #{transformer_forward.5} parent=0 // loop_footer
    %s25 = sadd.s32 1, %s21
  $region7: #{transformer_forward.5} parent=0 // loop_footer_branch
    %20 = sbr.rel target = $region3
  $region8: #{transformer_forward.5} parent=0 // loop_exit
    _

</llo_original>
